<compile_context>
chip_gen: v7x
topology: tpu7x:2x2x1
jax: 0.10.0
libtpu: 0.0.40
codegen_flags: <defaults>
</compile_context>

<pallas_src>
import functools
import numpy as np
import jax
import jax.numpy as jnp
from jax.experimental import pallas as pl
from jax.experimental.pallas import tpu as pltpu


# ----------------------------------------------------------------------------
# Pallas kernel: one fused bidirectional LSTM layer (optionally + FC epilogue)
# ----------------------------------------------------------------------------
def _make_bidir_kernel(T, B_TILE, D, H, DOUT=None):
    """Fused fwd+bwd LSTM layer over one batch tile.

    If DOUT is None:     outputs the full (T, B_TILE, 2H) sequence in bf16.
    If DOUT is not None: outputs fc(concat(h_fwd_final, h_bwd_final)) -> (B_TILE, DOUT).
    """
    is_final = DOUT is not None

    def kernel(*refs):
        if is_final:
            (tmax_smem, len_ref, x_ref, wih_f_ref, wih_b_ref, whh_ref,
             b_f_ref, b_b_ref, fcw_ref, fcb_ref,
             logits_ref,
             gx_f, gx_b, h_f, c_f, h_b, c_b) = refs
        else:
            (tmax_smem, len_ref, x_ref, wih_f_ref, wih_b_ref, whh_ref,
             b_f_ref, b_b_ref,
             out_ref,
             gx_f, gx_b, h_f, c_f, h_b, c_b) = refs

        # ---- init state; output rows t >= tile max_len must stay zero --------
        h_f[...] = jnp.zeros_like(h_f)
        c_f[...] = jnp.zeros_like(c_f)
        h_b[...] = jnp.zeros_like(h_b)
        c_b[...] = jnp.zeros_like(c_b)
        if not is_final:
            out_ref[...] = jnp.zeros_like(out_ref)

        # ---- hoisted input projection: one big MXU matmul per direction ------
        x2d = x_ref[...].reshape(T * B_TILE, D)                  # bf16 (T*B, D)
        gx_f[...] = (jnp.dot(x2d, wih_f_ref[...],
                             preferred_element_type=jnp.float32)
                     + b_f_ref[...]).reshape(T, B_TILE, 4 * H)
        gx_b[...] = (jnp.dot(x2d, wih_b_ref[...],
                             preferred_element_type=jnp.float32)
                     + b_b_ref[...]).reshape(T, B_TILE, 4 * H)

        # ---- invariants hoisted out of the serial recurrence ------------------
        lengths = len_ref[...]                                   # (B_TILE, 1) int32
        whh = whh_ref[...]                                       # (H, 8H) bf16 = [W_hh_f | W_hh_b]
        # Per-tile trip count (max length of THIS batch tile), prefetched to SMEM.
        max_len = tmax_smem[pl.program_id(0)]

        def cell(gates, c_prev):
            i_g = jax.nn.sigmoid(gates[:, 0 * H:1 * H])
            f_g = jax.nn.sigmoid(gates[:, 1 * H:2 * H])
            g_g = jnp.tanh(gates[:, 2 * H:3 * H])
            o_g = jax.nn.sigmoid(gates[:, 3 * H:4 * H])
            c_new = f_g * c_prev + i_g * g_g
            h_new = o_g * jnp.tanh(c_new)
            return h_new, c_new

        def step(i, carry):
            t_f = i                      # forward direction time index
            t_b = max_len - 1 - i        # backward direction time index

            # One fused recurrent matmul for both directions:
            # [h_f; h_b] (2B, H) @ [W_hh_f | W_hh_b] (H, 8H) -> pick two quadrants.
            hs = jnp.concatenate([h_f[...], h_b[...]], axis=0).astype(jnp.bfloat16)
            prod = jnp.dot(hs, whh, preferred_element_type=jnp.float32)   # (2B, 8H)

            # forward direction
            hp, cp = h_f[...], c_f[...]
            hn, cn = cell(gx_f[t_f] + prod[0:B_TILE, 0:4 * H], cp)
            valid = lengths > t_f                                 # (B_TILE, 1)
            h_f[...] = jnp.where(valid, hn, hp)
            c_f[...] = jnp.where(valid, cn, cp)
            if not is_final:
                out_ref[t_f, :, 0:H] = jnp.where(valid, hn, 0.0).astype(out_ref.dtype)

            # backward direction
            hp, cp = h_b[...], c_b[...]
            hn, cn = cell(gx_b[t_b] + prod[B_TILE:2 * B_TILE, 4 * H:8 * H], cp)
            valid = lengths > t_b
            h_b[...] = jnp.where(valid, hn, hp)
            c_b[...] = jnp.where(valid, cn, cp)
            if not is_final:
                out_ref[t_b, :, H:2 * H] = jnp.where(valid, hn, 0.0).astype(out_ref.dtype)
            return carry

        jax.lax.fori_loop(0, max_len, step, 0)

        if is_final:
            # fused FC epilogue on the final hidden states (dropout == identity)
            hid = jnp.concatenate([h_f[...], h_b[...]], axis=-1)  # (B_TILE, 2H) f32
            logits_ref[...] = (jnp.dot(hid, fcw_ref[...],
                                       preferred_element_type=jnp.float32)
                               + fcb_ref[...])

    return kernel


def _vmem_limit_bytes(T, bt, D, H, DOUT):
    """Per-program VMEM footprint (double-buffered pipeline blocks + scratch)."""
    bf2, f4 = 2, 4
    x_bufs = 2 * T * bt * D * bf2                              # x block x2 buffers
    w_bufs = 2 * (2 * D * 4 * H + H * 8 * H) * bf2             # W_ih x2 dirs + W_hh_cat
    bias = 2 * 2 * 4 * H * f4
    gx = 2 * T * bt * 4 * H * f4                               # hoisted projections
    state = 4 * bt * H * f4                                    # h/c x2 dirs
    if DOUT is not None:
        out_bufs = 2 * bt * DOUT * f4
        fc = 2 * (2 * H * DOUT + DOUT) * f4
    else:
        out_bufs = 2 * T * bt * 2 * H * bf2
        fc = 0
    total = x_bufs + w_bufs + bias + gx + state + out_bufs + fc
    return int(min(max(total + (2 << 20), 16 << 20), 64 << 20))


def bidir_lstm_layer(x, lengths, w_ih_f, w_ih_b, whh_cat, b_f, b_b,
                     hidden_dim, fc_w=None, fc_b=None, b_tile=None):
    """x: (T, B, D) bf16, lengths: (B,) int32.
    Returns (T, B, 2H) bf16 sequence, or (B, DOUT) f32 logits if fc_w is given."""
    T, B, D = x.shape
    H = hidden_dim
    if b_tile is None:
        b_tile = B        # single-TC chips (v5e/v6e): keep the whole batch on one program
    assert B % b_tile == 0, "B must be divisible by b_tile"
    assert b_tile % 8 == 0, "b_tile must be a multiple of 8 (sublane tiling)"
    nb = B // b_tile
    is_final = fc_w is not None
    DOUT = fc_w.shape[1] if is_final else None

    x = x.astype(jnp.bfloat16)                    # no-op: layers receive bf16 already
    lengths = lengths.astype(jnp.int32)
    # Per-tile recurrence bound (robust even if lengths are not sorted).
    tile_max = jnp.max(lengths.reshape(nb, b_tile), axis=1)      # (nb,) int32 -> SMEM
    len_2d = lengths.reshape(B, 1)                               # per-element mask tile

    # TODO(synk): mark the constant-index weight specs with pipeline_mode=pl.Buffered(1)
    # to avoid double-buffering invariant blocks (VMEM win for large H, esp. v7x).
    in_specs = [
        pl.BlockSpec((b_tile, 1), lambda b, tmax: (b, 0)),        # lengths (VMEM tile)
        pl.BlockSpec((T, b_tile, D), lambda b, tmax: (0, b, 0)),  # x (bf16)
        pl.BlockSpec((D, 4 * H), lambda b, tmax: (0, 0)),         # W_ih fwd (bf16)
        pl.BlockSpec((D, 4 * H), lambda b, tmax: (0, 0)),         # W_ih bwd (bf16)
        pl.BlockSpec((H, 8 * H), lambda b, tmax: (0, 0)),         # [W_hh_f | W_hh_b] (bf16)
        pl.BlockSpec((1, 4 * H), lambda b, tmax: (0, 0)),         # bias fwd (f32)
        pl.BlockSpec((1, 4 * H), lambda b, tmax: (0, 0)),         # bias bwd (f32)
    ]
    args = [tile_max, len_2d, x, w_ih_f, w_ih_b, whh_cat, b_f, b_b]

    if is_final:
        in_specs += [pl.BlockSpec((2 * H, DOUT), lambda b, tmax: (0, 0)),
                     pl.BlockSpec((1, DOUT), lambda b, tmax: (0, 0))]
        args += [fc_w, fc_b]
        out_specs = pl.BlockSpec((b_tile, DOUT), lambda b, tmax: (b, 0))
        out_shape = jax.ShapeDtypeStruct((B, DOUT), jnp.float32)
    else:
        out_specs = pl.BlockSpec((T, b_tile, 2 * H), lambda b, tmax: (0, b, 0))
        # bf16 inter-layer handoff: halves the HBM write + next layer's read
        out_shape = jax.ShapeDtypeStruct((T, B, 2 * H), jnp.bfloat16)

    scratch_shapes = [
        pltpu.VMEM((T, b_tile, 4 * H), jnp.float32),   # hoisted x@W_ih + b, fwd
        pltpu.VMEM((T, b_tile, 4 * H), jnp.float32),   # hoisted x@W_ih + b, bwd
        pltpu.VMEM((b_tile, H), jnp.float32),          # h fwd
        pltpu.VMEM((b_tile, H), jnp.float32),          # c fwd
        pltpu.VMEM((b_tile, H), jnp.float32),          # h bwd
        pltpu.VMEM((b_tile, H), jnp.float32),          # c bwd
    ]

    # TODO(synk): for very long T on v7x (64 MiB VMEM/TC), store gx in bf16 or chunk
    # the recurrence over T (h/c carried in scratch) instead of holding (T,*,4H) f32.
    kernel = _make_bidir_kernel(T, b_tile, D, H, DOUT)
    return pl.pallas_call(
        kernel,
        out_shape=out_shape,
        grid_spec=pltpu.PrefetchScalarGridSpec(
            num_scalar_prefetch=1,
            grid=(nb,),
            in_specs=in_specs,
            out_specs=out_specs,
            scratch_shapes=scratch_shapes),
        compiler_params=pltpu.CompilerParams(
            dimension_semantics=("parallel",),          # batch tiles independent (v7x 2-TC)
            vmem_limit_bytes=_vmem_limit_bytes(T, b_tile, D, H, DOUT)),
    )(*args)


# ----------------------------------------------------------------------------
# One-time parameter preparation (bf16 casts / layout) — done OUTSIDE the jit
# so weights are not re-cast on every forward call.
# ----------------------------------------------------------------------------
def prepare_params(params, n_layers, hidden_dim):
    H = hidden_dim
    prep = {
        "embedding": params["embedding"].astype(jnp.bfloat16),   # pad row stays zero
        "fc_w": params["fc_w"],
        "fc_b": params["fc_b"].reshape(1, -1),
    }
    for l in range(n_layers):
        prep[f"w_ih_l{l}_f"] = params[f"w_ih_l{l}_f"].astype(jnp.bfloat16)
        prep[f"w_ih_l{l}_b"] = params[f"w_ih_l{l}_b"].astype(jnp.bfloat16)
        prep[f"whh_cat_l{l}"] = jnp.concatenate(
            [params[f"w_hh_l{l}_f"], params[f"w_hh_l{l}_b"]],
            axis=1).astype(jnp.bfloat16)                          # (H, 8H)
        prep[f"b_l{l}_f"] = params[f"b_l{l}_f"].reshape(1, 4 * H)
        prep[f"b_l{l}_b"] = params[f"b_l{l}_b"].reshape(1, 4 * H)
    return prep


# ----------------------------------------------------------------------------
# Model wrapper (glue in plain JAX: embedding gather + per-tile max length only)
# ----------------------------------------------------------------------------
def lstm_model_forward(prep, text, text_lengths, *, n_layers, hidden_dim, b_tile=None):
    # embedding (+ dropout == identity in eval mode); table is pre-cast to bf16
    x = jnp.take(prep["embedding"], text, axis=0)                 # (T, B, E) bf16

    for l in range(n_layers - 1):
        x = bidir_lstm_layer(
            x, text_lengths,
            prep[f"w_ih_l{l}_f"], prep[f"w_ih_l{l}_b"], prep[f"whh_cat_l{l}"],
            prep[f"b_l{l}_f"], prep[f"b_l{l}_b"],
            hidden_dim, b_tile=b_tile)
        # inter-layer dropout == identity (eval mode)

    l = n_layers - 1
    # last layer: FC head fused into the kernel epilogue (final dropout == identity)
    return bidir_lstm_layer(
        x, text_lengths,
        prep[f"w_ih_l{l}_f"], prep[f"w_ih_l{l}_b"], prep[f"whh_cat_l{l}"],
        prep[f"b_l{l}_f"], prep[f"b_l{l}_b"],
        hidden_dim, fc_w=prep["fc_w"], fc_b=prep["fc_b"], b_tile=b_tile)


# ----------------------------------------------------------------------------
# Pure-JAX reference (same math, same bf16 MXU operand casts) for correctness
# ----------------------------------------------------------------------------
def _ref_lstm_dir(x, lengths, w_ih, w_hh, b, H, reverse):
    T, B, D = x.shape
    x_bf = x.astype(jnp.bfloat16)
    wih_bf = w_ih.astype(jnp.bfloat16)
    whh_bf = w_hh.astype(jnp.bfloat16)
    gx = (jnp.dot(x_bf.reshape(T * B, D), wih_bf,
                  preferred_element_type=jnp.float32) + b).reshape(T, B, 4 * H)

    h0 = jnp.zeros((B, H), jnp.float32)
    c0 = jnp.zeros((B, H), jnp.float32)

    def step(carry, t):
        h, c = carry
        gates = gx[t] + jnp.dot(h.astype(jnp.bfloat16), whh_bf,
                                preferred_element_type=jnp.float32)
        i = jax.nn.sigmoid(gates[:, :H])
        f = jax.nn.sigmoid(gates[:, H:2 * H])
        g = jnp.tanh(gates[:, 2 * H:3 * H])
        o = jax.nn.sigmoid(gates[:, 3 * H:])
        c_new = f * c + i * g
        h_new = o * jnp.tanh(c_new)
        valid = lengths[:, None] > t
        h2 = jnp.where(valid, h_new, h)
        c2 = jnp.where(valid, c_new, c)
        out_t = jnp.where(valid, h_new, 0.0)
        return (h2, c2), (t, out_t)

    ts = jnp.arange(T)[::-1] if reverse else jnp.arange(T)
    (h, _), (idx, outs) = jax.lax.scan(step, (h0, c0), ts)
    out_seq = jnp.zeros((T, B, H), jnp.float32).at[idx].set(outs)
    return out_seq, h


def ref_forward(params, text, text_lengths, *, n_layers, hidden_dim):
    x = jnp.take(params["embedding"], text, axis=0).astype(jnp.float32)
    h_f = h_b = None
    for l in range(n_layers):
        out_f, h_f = _ref_lstm_dir(x, text_lengths, params[f"w_ih_l{l}_f"],
                                   params[f"w_hh_l{l}_f"], params[f"b_l{l}_f"],
                                   hidden_dim, reverse=False)
        out_b, h_b = _ref_lstm_dir(x, text_lengths, params[f"w_ih_l{l}_b"],
                                   params[f"w_hh_l{l}_b"], params[f"b_l{l}_b"],
                                   hidden_dim, reverse=True)
        x = jnp.concatenate([out_f, out_b], axis=-1)
    hidden_cat = jnp.concatenate([h_f, h_b], axis=-1)
    return hidden_cat @ params["fc_w"] + params["fc_b"]


# ----------------------------------------------------------------------------
# Deterministic parameter init (shapes from the PyTorch module __init__)
# ----------------------------------------------------------------------------
def init_params(key, vocab_size, embedding_dim, hidden_dim, output_dim,
                n_layers, pad_idx):
    params = {}
    k_iter = iter(jax.random.split(key, 4 + 6 * n_layers * 2))

    def uni(shape, scale):
        return jax.random.uniform(next(k_iter), shape, jnp.float32, -scale, scale)

    emb = uni((vocab_size, embedding_dim), 1.0)
    params["embedding"] = emb.at[pad_idx].set(0.0)   # padding_idx row zeroed

    H = hidden_dim
    s = 1.0 / np.sqrt(H)
    for l in range(n_layers):
        d_in = embedding_dim if l == 0 else 2 * H
        for tag in ("f", "b"):
            # PyTorch stores (4H, d_in)/(4H, H); we store transposed for x @ W.
            params[f"w_ih_l{l}_{tag}"] = uni((d_in, 4 * H), s)
            params[f"w_hh_l{l}_{tag}"] = uni((H, 4 * H), s)
            b_ih = uni((4 * H,), s)
            b_hh = uni((4 * H,), s)
            params[f"b_l{l}_{tag}"] = b_ih + b_hh

    params["fc_w"] = uni((2 * H, output_dim), 1.0 / np.sqrt(2 * H))
    params["fc_b"] = uni((output_dim,), 1.0 / np.sqrt(2 * H))
    return params


# ----------------------------------------------------------------------------
if __name__ == "__main__":
    vocab_size, embedding_dim, hidden_dim, output_dim = 50, 32, 32, 3
    n_layers, pad_idx = 2, 0
    T, B = 8, 32
    # nb = 2 batch tiles: exercises the per-tile trip count + "parallel" batch grid
    # (v7x 2-TC).  On single-TC v5e/v6e set B_TILE = B (nb = 1) in production.
    B_TILE = 16

    key = jax.random.PRNGKey(0)
    k_param, k_text = jax.random.split(key)
    params = init_params(k_param, vocab_size, embedding_dim, hidden_dim,
                         output_dim, n_layers, pad_idx)
    prepped = prepare_params(params, n_layers, hidden_dim)   # one-time bf16 casts

    # sorted-descending lengths (pack_padded_sequence contract), pad with pad_idx
    text_lengths = jnp.array([8, 8, 8, 8, 7, 7, 7, 7, 6, 6, 6, 6, 5, 5, 5, 5,
                              4, 4, 4, 4, 3, 3, 3, 3, 2, 2, 2, 2, 1, 1, 1, 1],
                             dtype=jnp.int32)
    text = jax.random.randint(k_text, (T, B), 1, vocab_size, dtype=jnp.int32)
    t_idx = jnp.arange(T)[:, None]
    text = jnp.where(t_idx < text_lengths[None, :], text, pad_idx)

    fwd = jax.jit(functools.partial(lstm_model_forward,
                                    n_layers=n_layers, hidden_dim=hidden_dim,
                                    b_tile=B_TILE))
    out = jax.block_until_ready(fwd(prepped, text, text_lengths))

    ref = jax.block_until_ready(
        ref_forward(params, text, text_lengths,
                    n_layers=n_layers, hidden_dim=hidden_dim))

    np.testing.assert_allclose(np.asarray(out), np.asarray(ref), rtol=1e-3, atol=1e-3)
    assert out.shape == (B, output_dim)
    print("KERNEL_OK")
</pallas_src>

<mosaic_0001>
module attributes {stable_mosaic.version = 11 : i64} {
  func.func @kernel(%arg0: i32, %arg1: memref<2xi32, #tpu.memory_space<smem>>, %arg2: memref<16x1xi32, #tpu.memory_space<vmem>>, %arg3: memref<8x16x64xbf16, #tpu.memory_space<vmem>>, %arg4: memref<64x128xbf16, #tpu.memory_space<vmem>>, %arg5: memref<64x128xbf16, #tpu.memory_space<vmem>>, %arg6: memref<32x256xbf16, #tpu.memory_space<vmem>>, %arg7: memref<1x128xf32, #tpu.memory_space<vmem>>, %arg8: memref<1x128xf32, #tpu.memory_space<vmem>>, %arg9: memref<64x3xf32, #tpu.memory_space<vmem>>, %arg10: memref<1x3xf32, #tpu.memory_space<vmem>>, %arg11: memref<16x3xf32, #tpu.memory_space<vmem>>, %arg12: memref<8x16x128xf32, #tpu.memory_space<vmem>>, %arg13: memref<8x16x128xf32, #tpu.memory_space<vmem>>, %arg14: memref<16x32xf32, #tpu.memory_space<vmem>>, %arg15: memref<16x32xf32, #tpu.memory_space<vmem>>, %arg16: memref<16x32xf32, #tpu.memory_space<vmem>>, %arg17: memref<16x32xf32, #tpu.memory_space<vmem>>) attributes {dimension_semantics = [#tpu.dimension_semantics<parallel>], iteration_bounds = array<i64: 2>, scalar_prefetch = 1 : i64, scratch_operands = 6 : i64, tpu.core_type = #tpu.core_type<tc>, window_params = [{transform_indices = @transform_0, window_bounds = array<i64: 16, 1>}, {transform_indices = @transform_1, window_bounds = array<i64: 8, 16, 64>}, {pipeline_mode = #tpu.pipeline_mode<synchronous>, transform_indices = @transform_2, window_bounds = array<i64: 64, 128>}, {pipeline_mode = #tpu.pipeline_mode<synchronous>, transform_indices = @transform_3, window_bounds = array<i64: 64, 128>}, {pipeline_mode = #tpu.pipeline_mode<synchronous>, transform_indices = @transform_4, window_bounds = array<i64: 32, 256>}, {pipeline_mode = #tpu.pipeline_mode<synchronous>, transform_indices = @transform_5, window_bounds = array<i64: 1, 128>}, {pipeline_mode = #tpu.pipeline_mode<synchronous>, transform_indices = @transform_6, window_bounds = array<i64: 1, 128>}, {pipeline_mode = #tpu.pipeline_mode<synchronous>, transform_indices = @transform_7, window_bounds = array<i64: 64, 3>}, {pipeline_mode = #tpu.pipeline_mode<synchronous>, transform_indices = @transform_8, window_bounds = array<i64: 1, 3>}, {transform_indices = @transform_9, window_bounds = array<i64: 16, 3>}]} {
    %cst = arith.constant 0.000000e+00 : f32
    %0 = vector.broadcast %cst : f32 to vector<16x32xf32>
    %c0 = arith.constant 0 : index
    %c0_0 = arith.constant 0 : index
    %1 = vector.load %arg14[%c0, %c0_0] : memref<16x32xf32, #tpu.memory_space<vmem>>, vector<16x32xf32>
    tpu.vector_store %arg14[%c0, %c0_0], %0 {strides = array<i32>} : memref<16x32xf32, #tpu.memory_space<vmem>>, vector<16x32xf32>,
    %cst_1 = arith.constant 0.000000e+00 : f32
    %2 = vector.broadcast %cst_1 : f32 to vector<16x32xf32>
    %c0_2 = arith.constant 0 : index
    %c0_3 = arith.constant 0 : index
    %3 = vector.load %arg15[%c0_2, %c0_3] : memref<16x32xf32, #tpu.memory_space<vmem>>, vector<16x32xf32>
    tpu.vector_store %arg15[%c0_2, %c0_3], %2 {strides = array<i32>} : memref<16x32xf32, #tpu.memory_space<vmem>>, vector<16x32xf32>,
    %cst_4 = arith.constant 0.000000e+00 : f32
    %4 = vector.broadcast %cst_4 : f32 to vector<16x32xf32>
    %c0_5 = arith.constant 0 : index
    %c0_6 = arith.constant 0 : index
    %5 = vector.load %arg16[%c0_5, %c0_6] : memref<16x32xf32, #tpu.memory_space<vmem>>, vector<16x32xf32>
    tpu.vector_store %arg16[%c0_5, %c0_6], %4 {strides = array<i32>} : memref<16x32xf32, #tpu.memory_space<vmem>>, vector<16x32xf32>,
    %cst_7 = arith.constant 0.000000e+00 : f32
    %6 = vector.broadcast %cst_7 : f32 to vector<16x32xf32>
    %c0_8 = arith.constant 0 : index
    %c0_9 = arith.constant 0 : index
    %7 = vector.load %arg17[%c0_8, %c0_9] : memref<16x32xf32, #tpu.memory_space<vmem>>, vector<16x32xf32>
    tpu.vector_store %arg17[%c0_8, %c0_9], %6 {strides = array<i32>} : memref<16x32xf32, #tpu.memory_space<vmem>>, vector<16x32xf32>,
    %c0_10 = arith.constant 0 : index
    %c0_11 = arith.constant 0 : index
    %c0_12 = arith.constant 0 : index
    %8 = vector.load %arg3[%c0_10, %c0_11, %c0_12] : memref<8x16x64xbf16, #tpu.memory_space<vmem>>, vector<8x16x64xbf16>
    %9 = vector.shape_cast %8 : vector<8x16x64xbf16> to vector<128x64xbf16>
    %c0_13 = arith.constant 0 : index
    %c0_14 = arith.constant 0 : index
    %10 = vector.load %arg4[%c0_13, %c0_14] : memref<64x128xbf16, #tpu.memory_space<vmem>>, vector<64x128xbf16>
    %cst_15 = arith.constant dense<0.000000e+00> : vector<128x128xf32>
    %11 = tpu.matmul %9, %10, %cst_15 {dimension_numbers = #tpu.dot_dimension_numbers<[1], [0], [0], [1], [0, 0, 1, 1], [], []>} : vector<128x64xbf16>, vector<64x128xbf16>, vector<128x128xf32> -> vector<128x128xf32>
    %c0_16 = arith.constant 0 : index
    %c0_17 = arith.constant 0 : index
    %12 = vector.load %arg7[%c0_16, %c0_17] : memref<1x128xf32, #tpu.memory_space<vmem>>, vector<1x128xf32>
    %13 = vector.broadcast %12 : vector<1x128xf32> to vector<128x128xf32>
    %14 = arith.addf %11, %13 : vector<128x128xf32>
    %15 = vector.shape_cast %14 : vector<128x128xf32> to vector<8x16x128xf32>
    %c0_18 = arith.constant 0 : index
    %c0_19 = arith.constant 0 : index
    %c0_20 = arith.constant 0 : index
    %16 = vector.load %arg12[%c0_18, %c0_19, %c0_20] : memref<8x16x128xf32, #tpu.memory_space<vmem>>, vector<8x16x128xf32>
    tpu.vector_store %arg12[%c0_18, %c0_19, %c0_20], %15 {strides = array<i32>} : memref<8x16x128xf32, #tpu.memory_space<vmem>>, vector<8x16x128xf32>,
    %c0_21 = arith.constant 0 : index
    %c0_22 = arith.constant 0 : index
    %17 = vector.load %arg5[%c0_21, %c0_22] : memref<64x128xbf16, #tpu.memory_space<vmem>>, vector<64x128xbf16>
    %cst_23 = arith.constant dense<0.000000e+00> : vector<128x128xf32>
    %18 = tpu.matmul %9, %17, %cst_23 {dimension_numbers = #tpu.dot_dimension_numbers<[1], [0], [0], [1], [0, 0, 1, 1], [], []>} : vector<128x64xbf16>, vector<64x128xbf16>, vector<128x128xf32> -> vector<128x128xf32>
    %c0_24 = arith.constant 0 : index
    %c0_25 = arith.constant 0 : index
    %19 = vector.load %arg8[%c0_24, %c0_25] : memref<1x128xf32, #tpu.memory_space<vmem>>, vector<1x128xf32>
    %20 = vector.broadcast %19 : vector<1x128xf32> to vector<128x128xf32>
    %21 = arith.addf %18, %20 : vector<128x128xf32>
    %22 = vector.shape_cast %21 : vector<128x128xf32> to vector<8x16x128xf32>
    %c0_26 = arith.constant 0 : index
    %c0_27 = arith.constant 0 : index
    %c0_28 = arith.constant 0 : index
    %23 = vector.load %arg13[%c0_26, %c0_27, %c0_28] : memref<8x16x128xf32, #tpu.memory_space<vmem>>, vector<8x16x128xf32>
    tpu.vector_store %arg13[%c0_26, %c0_27, %c0_28], %22 {strides = array<i32>} : memref<8x16x128xf32, #tpu.memory_space<vmem>>, vector<8x16x128xf32>,
    %c0_29 = arith.constant 0 : index
    %c0_30 = arith.constant 0 : index
    %24 = vector.load %arg2[%c0_29, %c0_30] : memref<16x1xi32, #tpu.memory_space<vmem>>, vector<16x1xi32>
    %c0_31 = arith.constant 0 : index
    %c0_32 = arith.constant 0 : index
    %25 = vector.load %arg6[%c0_31, %c0_32] : memref<32x256xbf16, #tpu.memory_space<vmem>>, vector<32x256xbf16>
    %26 = arith.index_cast %arg0 : i32 to index
    %27 = memref.load %arg1[%26] : memref<2xi32, #tpu.memory_space<smem>>
    %c0_i32 = arith.constant 0 : i32
    %c0_i32_33 = arith.constant 0 : i32
    %28 = arith.subi %27, %c0_i32_33 : i32
    %29 = arith.addi %c0_i32_33, %28 : i32
    %c1_i32 = arith.constant 1 : i32
    scf.for %arg18 = %c0_i32_33 to %29 step %c1_i32  : i32 {
      %c1_i32_45 = arith.constant 1 : i32
      %39 = arith.subi %27, %c1_i32_45 : i32
      %40 = arith.subi %39, %arg18 : i32
      %c0_46 = arith.constant 0 : index
      %c0_47 = arith.constant 0 : index
      %41 = vector.load %arg14[%c0_46, %c0_47] : memref<16x32xf32, #tpu.memory_space<vmem>>, vector<16x32xf32>
      %c0_48 = arith.constant 0 : index
      %c0_49 = arith.constant 0 : index
      %42 = vector.load %arg16[%c0_48, %c0_49] : memref<16x32xf32, #tpu.memory_space<vmem>>, vector<16x32xf32>
      %43 = tpu.concatenate %41, %42 in 0 : vector<16x32xf32>, vector<16x32xf32> -> vector<32x32xf32>
      %44 = arith.truncf %43 : vector<32x32xf32> to vector<32x32xbf16>
      %cst_50 = arith.constant dense<0.000000e+00> : vector<32x256xf32>
      %45 = tpu.matmul %44, %25, %cst_50 {dimension_numbers = #tpu.dot_dimension_numbers<[1], [0], [0], [1], [0, 0, 1, 1], [], []>} : vector<32x32xbf16>, vector<32x256xbf16>, vector<32x256xf32> -> vector<32x256xf32>
      %c0_51 = arith.constant 0 : index
      %c0_52 = arith.constant 0 : index
      %46 = vector.load %arg14[%c0_51, %c0_52] : memref<16x32xf32, #tpu.memory_space<vmem>>, vector<16x32xf32>
      %c0_53 = arith.constant 0 : index
      %c0_54 = arith.constant 0 : index
      %47 = vector.load %arg15[%c0_53, %c0_54] : memref<16x32xf32, #tpu.memory_space<vmem>>, vector<16x32xf32>
      %48 = arith.index_cast %arg18 : i32 to index
      %c0_55 = arith.constant 0 : index
      %c0_56 = arith.constant 0 : index
      %49 = vector.load %arg12[%48, %c0_55, %c0_56] : memref<8x16x128xf32, #tpu.memory_space<vmem>>, vector<1x16x128xf32>
      %50 = vector.shape_cast %49 : vector<1x16x128xf32> to vector<16x128xf32>
      %51 = vector.extract_strided_slice %45 {offsets = [0, 0], sizes = [16, 128], strides = [1, 1]} : vector<32x256xf32> to vector<16x128xf32>
      %52 = arith.addf %50, %51 : vector<16x128xf32>
      %53 = vector.extract_strided_slice %52 {offsets = [0, 0], sizes = [16, 32], strides = [1, 1]} : vector<16x128xf32> to vector<16x32xf32>
      %54 = arith.negf %53 : vector<16x32xf32>
      %55 = math.exp %54 : vector<16x32xf32>
      %cst_57 = arith.constant 1.000000e+00 : f32
      %56 = vector.broadcast %cst_57 : f32 to vector<16x32xf32>
      %57 = arith.addf %56, %55 : vector<16x32xf32>
      %58 = arith.divf %56, %57 : vector<16x32xf32>
      %59 = vector.extract_strided_slice %52 {offsets = [0, 32], sizes = [16, 32], strides = [1, 1]} : vector<16x128xf32> to vector<16x32xf32>
      %60 = arith.negf %59 : vector<16x32xf32>
      %61 = math.exp %60 : vector<16x32xf32>
      %cst_58 = arith.constant 1.000000e+00 : f32
      %62 = vector.broadcast %cst_58 : f32 to vector<16x32xf32>
      %63 = arith.addf %62, %61 : vector<16x32xf32>
      %64 = arith.divf %62, %63 : vector<16x32xf32>
      %65 = vector.extract_strided_slice %52 {offsets = [0, 64], sizes = [16, 32], strides = [1, 1]} : vector<16x128xf32> to vector<16x32xf32>
      %66 = math.tanh %65 : vector<16x32xf32>
      %67 = vector.extract_strided_slice %52 {offsets = [0, 96], sizes = [16, 32], strides = [1, 1]} : vector<16x128xf32> to vector<16x32xf32>
      %68 = arith.negf %67 : vector<16x32xf32>
      %69 = math.exp %68 : vector<16x32xf32>
      %cst_59 = arith.constant 1.000000e+00 : f32
      %70 = vector.broadcast %cst_59 : f32 to vector<16x32xf32>
      %71 = arith.addf %70, %69 : vector<16x32xf32>
      %72 = arith.divf %70, %71 : vector<16x32xf32>
      %73 = arith.mulf %64, %47 : vector<16x32xf32>
      %74 = arith.mulf %58, %66 : vector<16x32xf32>
      %75 = arith.addf %73, %74 : vector<16x32xf32>
      %76 = math.tanh %75 : vector<16x32xf32>
      %77 = arith.mulf %72, %76 : vector<16x32xf32>
      %78 = vector.broadcast %arg18 : i32 to vector<16x1xi32>
      %79 = arith.cmpi sgt, %24, %78 : vector<16x1xi32>
      %80 = vector.shape_cast %79 : vector<16x1xi1> to vector<16x1xi1>
      %81 = vector.broadcast %80 : vector<16x1xi1> to vector<16x32xi1>
      %82 = arith.select %81, %77, %46 : vector<16x32xi1>, vector<16x32xf32>
      %c0_60 = arith.constant 0 : index
      %c0_61 = arith.constant 0 : index
      %83 = vector.load %arg14[%c0_60, %c0_61] : memref<16x32xf32, #tpu.memory_space<vmem>>, vector<16x32xf32>
      tpu.vector_store %arg14[%c0_60, %c0_61], %82 {strides = array<i32>} : memref<16x32xf32, #tpu.memory_space<vmem>>, vector<16x32xf32>,
      %84 = vector.shape_cast %79 : vector<16x1xi1> to vector<16x1xi1>
      %85 = vector.broadcast %84 : vector<16x1xi1> to vector<16x32xi1>
      %86 = arith.select %85, %75, %47 : vector<16x32xi1>, vector<16x32xf32>
      %c0_62 = arith.constant 0 : index
      %c0_63 = arith.constant 0 : index
      %87 = vector.load %arg15[%c0_62, %c0_63] : memref<16x32xf32, #tpu.memory_space<vmem>>, vector<16x32xf32>
      tpu.vector_store %arg15[%c0_62, %c0_63], %86 {strides = array<i32>} : memref<16x32xf32, #tpu.memory_space<vmem>>, vector<16x32xf32>,
      %c0_64 = arith.constant 0 : index
      %c0_65 = arith.constant 0 : index
      %88 = vector.load %arg16[%c0_64, %c0_65] : memref<16x32xf32, #tpu.memory_space<vmem>>, vector<16x32xf32>
      %c0_66 = arith.constant 0 : index
      %c0_67 = arith.constant 0 : index
      %89 = vector.load %arg17[%c0_66, %c0_67] : memref<16x32xf32, #tpu.memory_space<vmem>>, vector<16x32xf32>
      %90 = arith.index_cast %40 : i32 to index
      %c0_68 = arith.constant 0 : index
      %c0_69 = arith.constant 0 : index
      %91 = vector.load %arg13[%90, %c0_68, %c0_69] : memref<8x16x128xf32, #tpu.memory_space<vmem>>, vector<1x16x128xf32>
      %92 = vector.shape_cast %91 : vector<1x16x128xf32> to vector<16x128xf32>
      %93 = vector.extract_strided_slice %45 {offsets = [16, 128], sizes = [16, 128], strides = [1, 1]} : vector<32x256xf32> to vector<16x128xf32>
      %94 = arith.addf %92, %93 : vector<16x128xf32>
      %95 = vector.extract_strided_slice %94 {offsets = [0, 0], sizes = [16, 32], strides = [1, 1]} : vector<16x128xf32> to vector<16x32xf32>
      %96 = arith.negf %95 : vector<16x32xf32>
      %97 = math.exp %96 : vector<16x32xf32>
      %cst_70 = arith.constant 1.000000e+00 : f32
      %98 = vector.broadcast %cst_70 : f32 to vector<16x32xf32>
      %99 = arith.addf %98, %97 : vector<16x32xf32>
      %100 = arith.divf %98, %99 : vector<16x32xf32>
      %101 = vector.extract_strided_slice %94 {offsets = [0, 32], sizes = [16, 32], strides = [1, 1]} : vector<16x128xf32> to vector<16x32xf32>
      %102 = arith.negf %101 : vector<16x32xf32>
      %103 = math.exp %102 : vector<16x32xf32>
      %cst_71 = arith.constant 1.000000e+00 : f32
      %104 = vector.broadcast %cst_71 : f32 to vector<16x32xf32>
      %105 = arith.addf %104, %103 : vector<16x32xf32>
      %106 = arith.divf %104, %105 : vector<16x32xf32>
      %107 = vector.extract_strided_slice %94 {offsets = [0, 64], sizes = [16, 32], strides = [1, 1]} : vector<16x128xf32> to vector<16x32xf32>
      %108 = math.tanh %107 : vector<16x32xf32>
      %109 = vector.extract_strided_slice %94 {offsets = [0, 96], sizes = [16, 32], strides = [1, 1]} : vector<16x128xf32> to vector<16x32xf32>
      %110 = arith.negf %109 : vector<16x32xf32>
      %111 = math.exp %110 : vector<16x32xf32>
      %cst_72 = arith.constant 1.000000e+00 : f32
      %112 = vector.broadcast %cst_72 : f32 to vector<16x32xf32>
      %113 = arith.addf %112, %111 : vector<16x32xf32>
      %114 = arith.divf %112, %113 : vector<16x32xf32>
      %115 = arith.mulf %106, %89 : vector<16x32xf32>
      %116 = arith.mulf %100, %108 : vector<16x32xf32>
      %117 = arith.addf %115, %116 : vector<16x32xf32>
      %118 = math.tanh %117 : vector<16x32xf32>
      %119 = arith.mulf %114, %118 : vector<16x32xf32>
      %120 = vector.broadcast %40 : i32 to vector<16x1xi32>
      %121 = arith.cmpi sgt, %24, %120 : vector<16x1xi32>
      %122 = vector.shape_cast %121 : vector<16x1xi1> to vector<16x1xi1>
      %123 = vector.broadcast %122 : vector<16x1xi1> to vector<16x32xi1>
      %124 = arith.select %123, %119, %88 : vector<16x32xi1>, vector<16x32xf32>
      %c0_73 = arith.constant 0 : index
      %c0_74 = arith.constant 0 : index
      %125 = vector.load %arg16[%c0_73, %c0_74] : memref<16x32xf32, #tpu.memory_space<vmem>>, vector<16x32xf32>
      tpu.vector_store %arg16[%c0_73, %c0_74], %124 {strides = array<i32>} : memref<16x32xf32, #tpu.memory_space<vmem>>, vector<16x32xf32>,
      %126 = vector.shape_cast %121 : vector<16x1xi1> to vector<16x1xi1>
      %127 = vector.broadcast %126 : vector<16x1xi1> to vector<16x32xi1>
      %128 = arith.select %127, %117, %89 : vector<16x32xi1>, vector<16x32xf32>
      %c0_75 = arith.constant 0 : index
      %c0_76 = arith.constant 0 : index
      %129 = vector.load %arg17[%c0_75, %c0_76] : memref<16x32xf32, #tpu.memory_space<vmem>>, vector<16x32xf32>
      tpu.vector_store %arg17[%c0_75, %c0_76], %128 {strides = array<i32>} : memref<16x32xf32, #tpu.memory_space<vmem>>, vector<16x32xf32>,
    }
    %c0_34 = arith.constant 0 : index
    %c0_35 = arith.constant 0 : index
    %30 = vector.load %arg14[%c0_34, %c0_35] : memref<16x32xf32, #tpu.memory_space<vmem>>, vector<16x32xf32>
    %c0_36 = arith.constant 0 : index
    %c0_37 = arith.constant 0 : index
    %31 = vector.load %arg16[%c0_36, %c0_37] : memref<16x32xf32, #tpu.memory_space<vmem>>, vector<16x32xf32>
    %32 = tpu.concatenate %30, %31 in 1 : vector<16x32xf32>, vector<16x32xf32> -> vector<16x64xf32>
    %c0_38 = arith.constant 0 : index
    %c0_39 = arith.constant 0 : index
    %33 = vector.load %arg9[%c0_38, %c0_39] : memref<64x3xf32, #tpu.memory_space<vmem>>, vector<64x3xf32>
    %cst_40 = arith.constant dense<0.000000e+00> : vector<16x3xf32>
    %34 = tpu.matmul %32, %33, %cst_40 {dimension_numbers = #tpu.dot_dimension_numbers<[1], [0], [0], [1], [0, 0, 1, 1], [], []>} : vector<16x64xf32>, vector<64x3xf32>, vector<16x3xf32> -> vector<16x3xf32>
    %c0_41 = arith.constant 0 : index
    %c0_42 = arith.constant 0 : index
    %35 = vector.load %arg10[%c0_41, %c0_42] : memref<1x3xf32, #tpu.memory_space<vmem>>, vector<1x3xf32>
    %36 = vector.broadcast %35 : vector<1x3xf32> to vector<16x3xf32>
    %37 = arith.addf %34, %36 : vector<16x3xf32>
    %c0_43 = arith.constant 0 : index
    %c0_44 = arith.constant 0 : index
    %38 = vector.load %arg11[%c0_43, %c0_44] : memref<16x3xf32, #tpu.memory_space<vmem>>, vector<16x3xf32>
    tpu.vector_store %arg11[%c0_43, %c0_44], %37 {strides = array<i32>} : memref<16x3xf32, #tpu.memory_space<vmem>>, vector<16x3xf32>,
    return
  }
  func.func @transform_0(%arg0: i32, %arg1: memref<2xi32, #tpu.memory_space<smem>>) -> (i32, i32) {
    %c0_i32 = arith.constant 0 : i32
    %c0_i32_0 = arith.constant 0 : i32
    return %arg0, %c0_i32 : i32, i32
  }
  func.func @transform_1(%arg0: i32, %arg1: memref<2xi32, #tpu.memory_space<smem>>) -> (i32, i32, i32) {
    %c0_i32 = arith.constant 0 : i32
    %c0_i32_0 = arith.constant 0 : i32
    %c0_i32_1 = arith.constant 0 : i32
    return %c0_i32, %arg0, %c0_i32_0 : i32, i32, i32
  }
  func.func @transform_2(%arg0: i32, %arg1: memref<2xi32, #tpu.memory_space<smem>>) -> (i32, i32) {
    %c0_i32 = arith.constant 0 : i32
    %c0_i32_0 = arith.constant 0 : i32
    %c0_i32_1 = arith.constant 0 : i32
    return %c0_i32, %c0_i32_0 : i32, i32
  }
  func.func @transform_3(%arg0: i32, %arg1: memref<2xi32, #tpu.memory_space<smem>>) -> (i32, i32) {
    %c0_i32 = arith.constant 0 : i32
    %c0_i32_0 = arith.constant 0 : i32
    %c0_i32_1 = arith.constant 0 : i32
    return %c0_i32, %c0_i32_0 : i32, i32
  }
  func.func @transform_4(%arg0: i32, %arg1: memref<2xi32, #tpu.memory_space<smem>>) -> (i32, i32) {
    %c0_i32 = arith.constant 0 : i32
    %c0_i32_0 = arith.constant 0 : i32
    %c0_i32_1 = arith.constant 0 : i32
    return %c0_i32, %c0_i32_0 : i32, i32
  }
  func.func @transform_5(%arg0: i32, %arg1: memref<2xi32, #tpu.memory_space<smem>>) -> (i32, i32) {
    %c0_i32 = arith.constant 0 : i32
    %c0_i32_0 = arith.constant 0 : i32
    %c0_i32_1 = arith.constant 0 : i32
    return %c0_i32, %c0_i32_0 : i32, i32
  }
  func.func @transform_6(%arg0: i32, %arg1: memref<2xi32, #tpu.memory_space<smem>>) -> (i32, i32) {
    %c0_i32 = arith.constant 0 : i32
    %c0_i32_0 = arith.constant 0 : i32
    %c0_i32_1 = arith.constant 0 : i32
    return %c0_i32, %c0_i32_0 : i32, i32
  }
  func.func @transform_7(%arg0: i32, %arg1: memref<2xi32, #tpu.memory_space<smem>>) -> (i32, i32) {
    %c0_i32 = arith.constant 0 : i32
    %c0_i32_0 = arith.constant 0 : i32
    %c0_i32_1 = arith.constant 0 : i32
    return %c0_i32, %c0_i32_0 : i32, i32
  }
  func.func @transform_8(%arg0: i32, %arg1: memref<2xi32, #tpu.memory_space<smem>>) -> (i32, i32) {
    %c0_i32 = arith.constant 0 : i32
    %c0_i32_0 = arith.constant 0 : i32
    %c0_i32_1 = arith.constant 0 : i32
    return %c0_i32, %c0_i32_0 : i32, i32
  }
  func.func @transform_9(%arg0: i32, %arg1: memref<2xi32, #tpu.memory_space<smem>>) -> (i32, i32) {
    %c0_i32 = arith.constant 0 : i32
    %c0_i32_0 = arith.constant 0 : i32
    return %arg0, %c0_i32 : i32, i32
  }
}

module attributes {stable_mosaic.version = 11 : i64} {
  func.func @kernel(%arg0: i32, %arg1: memref<2xi32, #tpu.memory_space<smem>>, %arg2: memref<16x1xi32, #tpu.memory_space<vmem>>, %arg3: memref<8x16x32xbf16, #tpu.memory_space<vmem>>, %arg4: memref<32x128xbf16, #tpu.memory_space<vmem>>, %arg5: memref<32x128xbf16, #tpu.memory_space<vmem>>, %arg6: memref<32x256xbf16, #tpu.memory_space<vmem>>, %arg7: memref<1x128xf32, #tpu.memory_space<vmem>>, %arg8: memref<1x128xf32, #tpu.memory_space<vmem>>, %arg9: memref<8x16x64xbf16, #tpu.memory_space<vmem>>, %arg10: memref<8x16x128xf32, #tpu.memory_space<vmem>>, %arg11: memref<8x16x128xf32, #tpu.memory_space<vmem>>, %arg12: memref<16x32xf32, #tpu.memory_space<vmem>>, %arg13: memref<16x32xf32, #tpu.memory_space<vmem>>, %arg14: memref<16x32xf32, #tpu.memory_space<vmem>>, %arg15: memref<16x32xf32, #tpu.memory_space<vmem>>) attributes {dimension_semantics = [#tpu.dimension_semantics<parallel>], iteration_bounds = array<i64: 2>, scalar_prefetch = 1 : i64, scratch_operands = 6 : i64, tpu.core_type = #tpu.core_type<tc>, window_params = [{transform_indices = @transform_0, window_bounds = array<i64: 16, 1>}, {transform_indices = @transform_1, window_bounds = array<i64: 8, 16, 32>}, {pipeline_mode = #tpu.pipeline_mode<synchronous>, transform_indices = @transform_2, window_bounds = array<i64: 32, 128>}, {pipeline_mode = #tpu.pipeline_mode<synchronous>, transform_indices = @transform_3, window_bounds = array<i64: 32, 128>}, {pipeline_mode = #tpu.pipeline_mode<synchronous>, transform_indices = @transform_4, window_bounds = array<i64: 32, 256>}, {pipeline_mode = #tpu.pipeline_mode<synchronous>, transform_indices = @transform_5, window_bounds = array<i64: 1, 128>}, {pipeline_mode = #tpu.pipeline_mode<synchronous>, transform_indices = @transform_6, window_bounds = array<i64: 1, 128>}, {transform_indices = @transform_7, window_bounds = array<i64: 8, 16, 64>}]} {
    %cst = arith.constant 0.000000e+00 : f32
    %0 = vector.broadcast %cst : f32 to vector<16x32xf32>
    %c0 = arith.constant 0 : index
    %c0_0 = arith.constant 0 : index
    %1 = vector.load %arg12[%c0, %c0_0] : memref<16x32xf32, #tpu.memory_space<vmem>>, vector<16x32xf32>
    tpu.vector_store %arg12[%c0, %c0_0], %0 {strides = array<i32>} : memref<16x32xf32, #tpu.memory_space<vmem>>, vector<16x32xf32>,
    %cst_1 = arith.constant 0.000000e+00 : f32
    %2 = vector.broadcast %cst_1 : f32 to vector<16x32xf32>
    %c0_2 = arith.constant 0 : index
    %c0_3 = arith.constant 0 : index
    %3 = vector.load %arg13[%c0_2, %c0_3] : memref<16x32xf32, #tpu.memory_space<vmem>>, vector<16x32xf32>
    tpu.vector_store %arg13[%c0_2, %c0_3], %2 {strides = array<i32>} : memref<16x32xf32, #tpu.memory_space<vmem>>, vector<16x32xf32>,
    %cst_4 = arith.constant 0.000000e+00 : f32
    %4 = vector.broadcast %cst_4 : f32 to vector<16x32xf32>
    %c0_5 = arith.constant 0 : index
    %c0_6 = arith.constant 0 : index
    %5 = vector.load %arg14[%c0_5, %c0_6] : memref<16x32xf32, #tpu.memory_space<vmem>>, vector<16x32xf32>
    tpu.vector_store %arg14[%c0_5, %c0_6], %4 {strides = array<i32>} : memref<16x32xf32, #tpu.memory_space<vmem>>, vector<16x32xf32>,
    %cst_7 = arith.constant 0.000000e+00 : f32
    %6 = vector.broadcast %cst_7 : f32 to vector<16x32xf32>
    %c0_8 = arith.constant 0 : index
    %c0_9 = arith.constant 0 : index
    %7 = vector.load %arg15[%c0_8, %c0_9] : memref<16x32xf32, #tpu.memory_space<vmem>>, vector<16x32xf32>
    tpu.vector_store %arg15[%c0_8, %c0_9], %6 {strides = array<i32>} : memref<16x32xf32, #tpu.memory_space<vmem>>, vector<16x32xf32>,
    %cst_10 = arith.constant 0.000000e+00 : bf16
    %8 = vector.broadcast %cst_10 : bf16 to vector<8x16x64xbf16>
    %c0_11 = arith.constant 0 : index
    %c0_12 = arith.constant 0 : index
    %c0_13 = arith.constant 0 : index
    %9 = vector.load %arg9[%c0_11, %c0_12, %c0_13] : memref<8x16x64xbf16, #tpu.memory_space<vmem>>, vector<8x16x64xbf16>
    tpu.vector_store %arg9[%c0_11, %c0_12, %c0_13], %8 {strides = array<i32>} : memref<8x16x64xbf16, #tpu.memory_space<vmem>>, vector<8x16x64xbf16>,
    %c0_14 = arith.constant 0 : index
    %c0_15 = arith.constant 0 : index
    %c0_16 = arith.constant 0 : index
    %10 = vector.load %arg3[%c0_14, %c0_15, %c0_16] : memref<8x16x32xbf16, #tpu.memory_space<vmem>>, vector<8x16x32xbf16>
    %11 = vector.shape_cast %10 : vector<8x16x32xbf16> to vector<128x32xbf16>
    %c0_17 = arith.constant 0 : index
    %c0_18 = arith.constant 0 : index
    %12 = vector.load %arg4[%c0_17, %c0_18] : memref<32x128xbf16, #tpu.memory_space<vmem>>, vector<32x128xbf16>
    %cst_19 = arith.constant dense<0.000000e+00> : vector<128x128xf32>
    %13 = tpu.matmul %11, %12, %cst_19 {dimension_numbers = #tpu.dot_dimension_numbers<[1], [0], [0], [1], [0, 0, 1, 1], [], []>} : vector<128x32xbf16>, vector<32x128xbf16>, vector<128x128xf32> -> vector<128x128xf32>
    %c0_20 = arith.constant 0 : index
    %c0_21 = arith.constant 0 : index
    %14 = vector.load %arg7[%c0_20, %c0_21] : memref<1x128xf32, #tpu.memory_space<vmem>>, vector<1x128xf32>
    %15 = vector.broadcast %14 : vector<1x128xf32> to vector<128x128xf32>
    %16 = arith.addf %13, %15 : vector<128x128xf32>
    %17 = vector.shape_cast %16 : vector<128x128xf32> to vector<8x16x128xf32>
    %c0_22 = arith.constant 0 : index
    %c0_23 = arith.constant 0 : index
    %c0_24 = arith.constant 0 : index
    %18 = vector.load %arg10[%c0_22, %c0_23, %c0_24] : memref<8x16x128xf32, #tpu.memory_space<vmem>>, vector<8x16x128xf32>
    tpu.vector_store %arg10[%c0_22, %c0_23, %c0_24], %17 {strides = array<i32>} : memref<8x16x128xf32, #tpu.memory_space<vmem>>, vector<8x16x128xf32>,
    %c0_25 = arith.constant 0 : index
    %c0_26 = arith.constant 0 : index
    %19 = vector.load %arg5[%c0_25, %c0_26] : memref<32x128xbf16, #tpu.memory_space<vmem>>, vector<32x128xbf16>
    %cst_27 = arith.constant dense<0.000000e+00> : vector<128x128xf32>
    %20 = tpu.matmul %11, %19, %cst_27 {dimension_numbers = #tpu.dot_dimension_numbers<[1], [0], [0], [1], [0, 0, 1, 1], [], []>} : vector<128x32xbf16>, vector<32x128xbf16>, vector<128x128xf32> -> vector<128x128xf32>
    %c0_28 = arith.constant 0 : index
    %c0_29 = arith.constant 0 : index
    %21 = vector.load %arg8[%c0_28, %c0_29] : memref<1x128xf32, #tpu.memory_space<vmem>>, vector<1x128xf32>
    %22 = vector.broadcast %21 : vector<1x128xf32> to vector<128x128xf32>
    %23 = arith.addf %20, %22 : vector<128x128xf32>
    %24 = vector.shape_cast %23 : vector<128x128xf32> to vector<8x16x128xf32>
    %c0_30 = arith.constant 0 : index
    %c0_31 = arith.constant 0 : index
    %c0_32 = arith.constant 0 : index
    %25 = vector.load %arg11[%c0_30, %c0_31, %c0_32] : memref<8x16x128xf32, #tpu.memory_space<vmem>>, vector<8x16x128xf32>
    tpu.vector_store %arg11[%c0_30, %c0_31, %c0_32], %24 {strides = array<i32>} : memref<8x16x128xf32, #tpu.memory_space<vmem>>, vector<8x16x128xf32>,
    %c0_33 = arith.constant 0 : index
    %c0_34 = arith.constant 0 : index
    %26 = vector.load %arg2[%c0_33, %c0_34] : memref<16x1xi32, #tpu.memory_space<vmem>>, vector<16x1xi32>
    %c0_35 = arith.constant 0 : index
    %c0_36 = arith.constant 0 : index
    %27 = vector.load %arg6[%c0_35, %c0_36] : memref<32x256xbf16, #tpu.memory_space<vmem>>, vector<32x256xbf16>
    %28 = arith.index_cast %arg0 : i32 to index
    %29 = memref.load %arg1[%28] : memref<2xi32, #tpu.memory_space<smem>>
    %c0_i32 = arith.constant 0 : i32
    %c0_i32_37 = arith.constant 0 : i32
    %30 = arith.subi %29, %c0_i32_37 : i32
    %31 = arith.addi %c0_i32_37, %30 : i32
    %c1_i32 = arith.constant 1 : i32
    scf.for %arg16 = %c0_i32_37 to %31 step %c1_i32  : i32 {
      %c1_i32_38 = arith.constant 1 : i32
      %32 = arith.subi %29, %c1_i32_38 : i32
      %33 = arith.subi %32, %arg16 : i32
      %c0_39 = arith.constant 0 : index
      %c0_40 = arith.constant 0 : index
      %34 = vector.load %arg12[%c0_39, %c0_40] : memref<16x32xf32, #tpu.memory_space<vmem>>, vector<16x32xf32>
      %c0_41 = arith.constant 0 : index
      %c0_42 = arith.constant 0 : index
      %35 = vector.load %arg14[%c0_41, %c0_42] : memref<16x32xf32, #tpu.memory_space<vmem>>, vector<16x32xf32>
      %36 = tpu.concatenate %34, %35 in 0 : vector<16x32xf32>, vector<16x32xf32> -> vector<32x32xf32>
      %37 = arith.truncf %36 : vector<32x32xf32> to vector<32x32xbf16>
      %cst_43 = arith.constant dense<0.000000e+00> : vector<32x256xf32>
      %38 = tpu.matmul %37, %27, %cst_43 {dimension_numbers = #tpu.dot_dimension_numbers<[1], [0], [0], [1], [0, 0, 1, 1], [], []>} : vector<32x32xbf16>, vector<32x256xbf16>, vector<32x256xf32> -> vector<32x256xf32>
      %c0_44 = arith.constant 0 : index
      %c0_45 = arith.constant 0 : index
      %39 = vector.load %arg12[%c0_44, %c0_45] : memref<16x32xf32, #tpu.memory_space<vmem>>, vector<16x32xf32>
      %c0_46 = arith.constant 0 : index
      %c0_47 = arith.constant 0 : index
      %40 = vector.load %arg13[%c0_46, %c0_47] : memref<16x32xf32, #tpu.memory_space<vmem>>, vector<16x32xf32>
      %41 = arith.index_cast %arg16 : i32 to index
      %c0_48 = arith.constant 0 : index
      %c0_49 = arith.constant 0 : index
      %42 = vector.load %arg10[%41, %c0_48, %c0_49] : memref<8x16x128xf32, #tpu.memory_space<vmem>>, vector<1x16x128xf32>
      %43 = vector.shape_cast %42 : vector<1x16x128xf32> to vector<16x128xf32>
      %44 = vector.extract_strided_slice %38 {offsets = [0, 0], sizes = [16, 128], strides = [1, 1]} : vector<32x256xf32> to vector<16x128xf32>
      %45 = arith.addf %43, %44 : vector<16x128xf32>
      %46 = vector.extract_strided_slice %45 {offsets = [0, 0], sizes = [16, 32], strides = [1, 1]} : vector<16x128xf32> to vector<16x32xf32>
      %47 = arith.negf %46 : vector<16x32xf32>
      %48 = math.exp %47 : vector<16x32xf32>
      %cst_50 = arith.constant 1.000000e+00 : f32
      %49 = vector.broadcast %cst_50 : f32 to vector<16x32xf32>
      %50 = arith.addf %49, %48 : vector<16x32xf32>
      %51 = arith.divf %49, %50 : vector<16x32xf32>
      %52 = vector.extract_strided_slice %45 {offsets = [0, 32], sizes = [16, 32], strides = [1, 1]} : vector<16x128xf32> to vector<16x32xf32>
      %53 = arith.negf %52 : vector<16x32xf32>
      %54 = math.exp %53 : vector<16x32xf32>
      %cst_51 = arith.constant 1.000000e+00 : f32
      %55 = vector.broadcast %cst_51 : f32 to vector<16x32xf32>
      %56 = arith.addf %55, %54 : vector<16x32xf32>
      %57 = arith.divf %55, %56 : vector<16x32xf32>
      %58 = vector.extract_strided_slice %45 {offsets = [0, 64], sizes = [16, 32], strides = [1, 1]} : vector<16x128xf32> to vector<16x32xf32>
      %59 = math.tanh %58 : vector<16x32xf32>
      %60 = vector.extract_strided_slice %45 {offsets = [0, 96], sizes = [16, 32], strides = [1, 1]} : vector<16x128xf32> to vector<16x32xf32>
      %61 = arith.negf %60 : vector<16x32xf32>
      %62 = math.exp %61 : vector<16x32xf32>
      %cst_52 = arith.constant 1.000000e+00 : f32
      %63 = vector.broadcast %cst_52 : f32 to vector<16x32xf32>
      %64 = arith.addf %63, %62 : vector<16x32xf32>
      %65 = arith.divf %63, %64 : vector<16x32xf32>
      %66 = arith.mulf %57, %40 : vector<16x32xf32>
      %67 = arith.mulf %51, %59 : vector<16x32xf32>
      %68 = arith.addf %66, %67 : vector<16x32xf32>
      %69 = math.tanh %68 : vector<16x32xf32>
      %70 = arith.mulf %65, %69 : vector<16x32xf32>
      %71 = vector.broadcast %arg16 : i32 to vector<16x1xi32>
      %72 = arith.cmpi sgt, %26, %71 : vector<16x1xi32>
      %73 = vector.shape_cast %72 : vector<16x1xi1> to vector<16x1xi1>
      %74 = vector.broadcast %73 : vector<16x1xi1> to vector<16x32xi1>
      %75 = arith.select %74, %70, %39 : vector<16x32xi1>, vector<16x32xf32>
      %c0_53 = arith.constant 0 : index
      %c0_54 = arith.constant 0 : index
      %76 = vector.load %arg12[%c0_53, %c0_54] : memref<16x32xf32, #tpu.memory_space<vmem>>, vector<16x32xf32>
      tpu.vector_store %arg12[%c0_53, %c0_54], %75 {strides = array<i32>} : memref<16x32xf32, #tpu.memory_space<vmem>>, vector<16x32xf32>,
      %77 = vector.shape_cast %72 : vector<16x1xi1> to vector<16x1xi1>
      %78 = vector.broadcast %77 : vector<16x1xi1> to vector<16x32xi1>
      %79 = arith.select %78, %68, %40 : vector<16x32xi1>, vector<16x32xf32>
      %c0_55 = arith.constant 0 : index
      %c0_56 = arith.constant 0 : index
      %80 = vector.load %arg13[%c0_55, %c0_56] : memref<16x32xf32, #tpu.memory_space<vmem>>, vector<16x32xf32>
      tpu.vector_store %arg13[%c0_55, %c0_56], %79 {strides = array<i32>} : memref<16x32xf32, #tpu.memory_space<vmem>>, vector<16x32xf32>,
      %cst_57 = arith.constant 0.000000e+00 : f32
      %81 = vector.shape_cast %72 : vector<16x1xi1> to vector<16x1xi1>
      %82 = vector.broadcast %81 : vector<16x1xi1> to vector<16x32xi1>
      %83 = vector.broadcast %cst_57 : f32 to vector<16x32xf32>
      %84 = arith.select %82, %70, %83 : vector<16x32xi1>, vector<16x32xf32>
      %85 = arith.truncf %84 : vector<16x32xf32> to vector<16x32xbf16>
      %86 = arith.index_cast %arg16 : i32 to index
      %c0_58 = arith.constant 0 : index
      %c0_59 = arith.constant 0 : index
      %87 = vector.load %arg9[%86, %c0_58, %c0_59] : memref<8x16x64xbf16, #tpu.memory_space<vmem>>, vector<1x16x32xbf16>
      %88 = vector.shape_cast %87 : vector<1x16x32xbf16> to vector<16x32xbf16>
      %89 = vector.shape_cast %85 : vector<16x32xbf16> to vector<1x16x32xbf16>
      tpu.vector_store %arg9[%86, %c0_58, %c0_59], %89 {strides = array<i32>} : memref<8x16x64xbf16, #tpu.memory_space<vmem>>, vector<1x16x32xbf16>,
      %c0_60 = arith.constant 0 : index
      %c0_61 = arith.constant 0 : index
      %90 = vector.load %arg14[%c0_60, %c0_61] : memref<16x32xf32, #tpu.memory_space<vmem>>, vector<16x32xf32>
      %c0_62 = arith.constant 0 : index
      %c0_63 = arith.constant 0 : index
      %91 = vector.load %arg15[%c0_62, %c0_63] : memref<16x32xf32, #tpu.memory_space<vmem>>, vector<16x32xf32>
      %92 = arith.index_cast %33 : i32 to index
      %c0_64 = arith.constant 0 : index
      %c0_65 = arith.constant 0 : index
      %93 = vector.load %arg11[%92, %c0_64, %c0_65] : memref<8x16x128xf32, #tpu.memory_space<vmem>>, vector<1x16x128xf32>
      %94 = vector.shape_cast %93 : vector<1x16x128xf32> to vector<16x128xf32>
      %95 = vector.extract_strided_slice %38 {offsets = [16, 128], sizes = [16, 128], strides = [1, 1]} : vector<32x256xf32> to vector<16x128xf32>
      %96 = arith.addf %94, %95 : vector<16x128xf32>
      %97 = vector.extract_strided_slice %96 {offsets = [0, 0], sizes = [16, 32], strides = [1, 1]} : vector<16x128xf32> to vector<16x32xf32>
      %98 = arith.negf %97 : vector<16x32xf32>
      %99 = math.exp %98 : vector<16x32xf32>
      %cst_66 = arith.constant 1.000000e+00 : f32
      %100 = vector.broadcast %cst_66 : f32 to vector<16x32xf32>
      %101 = arith.addf %100, %99 : vector<16x32xf32>
      %102 = arith.divf %100, %101 : vector<16x32xf32>
      %103 = vector.extract_strided_slice %96 {offsets = [0, 32], sizes = [16, 32], strides = [1, 1]} : vector<16x128xf32> to vector<16x32xf32>
      %104 = arith.negf %103 : vector<16x32xf32>
      %105 = math.exp %104 : vector<16x32xf32>
      %cst_67 = arith.constant 1.000000e+00 : f32
      %106 = vector.broadcast %cst_67 : f32 to vector<16x32xf32>
      %107 = arith.addf %106, %105 : vector<16x32xf32>
      %108 = arith.divf %106, %107 : vector<16x32xf32>
      %109 = vector.extract_strided_slice %96 {offsets = [0, 64], sizes = [16, 32], strides = [1, 1]} : vector<16x128xf32> to vector<16x32xf32>
      %110 = math.tanh %109 : vector<16x32xf32>
      %111 = vector.extract_strided_slice %96 {offsets = [0, 96], sizes = [16, 32], strides = [1, 1]} : vector<16x128xf32> to vector<16x32xf32>
      %112 = arith.negf %111 : vector<16x32xf32>
      %113 = math.exp %112 : vector<16x32xf32>
      %cst_68 = arith.constant 1.000000e+00 : f32
      %114 = vector.broadcast %cst_68 : f32 to vector<16x32xf32>
      %115 = arith.addf %114, %113 : vector<16x32xf32>
      %116 = arith.divf %114, %115 : vector<16x32xf32>
      %117 = arith.mulf %108, %91 : vector<16x32xf32>
      %118 = arith.mulf %102, %110 : vector<16x32xf32>
      %119 = arith.addf %117, %118 : vector<16x32xf32>
      %120 = math.tanh %119 : vector<16x32xf32>
      %121 = arith.mulf %116, %120 : vector<16x32xf32>
      %122 = vector.broadcast %33 : i32 to vector<16x1xi32>
      %123 = arith.cmpi sgt, %26, %122 : vector<16x1xi32>
      %124 = vector.shape_cast %123 : vector<16x1xi1> to vector<16x1xi1>
      %125 = vector.broadcast %124 : vector<16x1xi1> to vector<16x32xi1>
      %126 = arith.select %125, %121, %90 : vector<16x32xi1>, vector<16x32xf32>
      %c0_69 = arith.constant 0 : index
      %c0_70 = arith.constant 0 : index
      %127 = vector.load %arg14[%c0_69, %c0_70] : memref<16x32xf32, #tpu.memory_space<vmem>>, vector<16x32xf32>
      tpu.vector_store %arg14[%c0_69, %c0_70], %126 {strides = array<i32>} : memref<16x32xf32, #tpu.memory_space<vmem>>, vector<16x32xf32>,
      %128 = vector.shape_cast %123 : vector<16x1xi1> to vector<16x1xi1>
      %129 = vector.broadcast %128 : vector<16x1xi1> to vector<16x32xi1>
      %130 = arith.select %129, %119, %91 : vector<16x32xi1>, vector<16x32xf32>
      %c0_71 = arith.constant 0 : index
      %c0_72 = arith.constant 0 : index
      %131 = vector.load %arg15[%c0_71, %c0_72] : memref<16x32xf32, #tpu.memory_space<vmem>>, vector<16x32xf32>
      tpu.vector_store %arg15[%c0_71, %c0_72], %130 {strides = array<i32>} : memref<16x32xf32, #tpu.memory_space<vmem>>, vector<16x32xf32>,
      %cst_73 = arith.constant 0.000000e+00 : f32
      %132 = vector.shape_cast %123 : vector<16x1xi1> to vector<16x1xi1>
      %133 = vector.broadcast %132 : vector<16x1xi1> to vector<16x32xi1>
      %134 = vector.broadcast %cst_73 : f32 to vector<16x32xf32>
      %135 = arith.select %133, %121, %134 : vector<16x32xi1>, vector<16x32xf32>
      %136 = arith.truncf %135 : vector<16x32xf32> to vector<16x32xbf16>
      %137 = arith.index_cast %33 : i32 to index
      %c0_74 = arith.constant 0 : index
      %c32 = arith.constant 32 : index
      %138 = vector.load %arg9[%137, %c0_74, %c32] : memref<8x16x64xbf16, #tpu.memory_space<vmem>>, vector<1x16x32xbf16>
      %139 = vector.shape_cast %138 : vector<1x16x32xbf16> to vector<16x32xbf16>
      %140 = vector.shape_cast %136 : vector<16x32xbf16> to vector<1x16x32xbf16>
      tpu.vector_store %arg9[%137, %c0_74, %c32], %140 {strides = array<i32>} : memref<8x16x64xbf16, #tpu.memory_space<vmem>>, vector<1x16x32xbf16>,
    }
    return
  }
  func.func @transform_0(%arg0: i32, %arg1: memref<2xi32, #tpu.memory_space<smem>>) -> (i32, i32) {
    %c0_i32 = arith.constant 0 : i32
    %c0_i32_0 = arith.constant 0 : i32
    return %arg0, %c0_i32 : i32, i32
  }
  func.func @transform_1(%arg0: i32, %arg1: memref<2xi32, #tpu.memory_space<smem>>) -> (i32, i32, i32) {
    %c0_i32 = arith.constant 0 : i32
    %c0_i32_0 = arith.constant 0 : i32
    %c0_i32_1 = arith.constant 0 : i32
    return %c0_i32, %arg0, %c0_i32_0 : i32, i32, i32
  }
  func.func @transform_2(%arg0: i32, %arg1: memref<2xi32, #tpu.memory_space<smem>>) -> (i32, i32) {
    %c0_i32 = arith.constant 0 : i32
    %c0_i32_0 = arith.constant 0 : i32
    %c0_i32_1 = arith.constant 0 : i32
    return %c0_i32, %c0_i32_0 : i32, i32
  }
  func.func @transform_3(%arg0: i32, %arg1: memref<2xi32, #tpu.memory_space<smem>>) -> (i32, i32) {
    %c0_i32 = arith.constant 0 : i32
    %c0_i32_0 = arith.constant 0 : i32
    %c0_i32_1 = arith.constant 0 : i32
    return %c0_i32, %c0_i32_0 : i32, i32
  }
  func.func @transform_4(%arg0: i32, %arg1: memref<2xi32, #tpu.memory_space<smem>>) -> (i32, i32) {
    %c0_i32 = arith.constant 0 : i32
    %c0_i32_0 = arith.constant 0 : i32
    %c0_i32_1 = arith.constant 0 : i32
    return %c0_i32, %c0_i32_0 : i32, i32
  }
  func.func @transform_5(%arg0: i32, %arg1: memref<2xi32, #tpu.memory_space<smem>>) -> (i32, i32) {
    %c0_i32 = arith.constant 0 : i32
    %c0_i32_0 = arith.constant 0 : i32
    %c0_i32_1 = arith.constant 0 : i32
    return %c0_i32, %c0_i32_0 : i32, i32
  }
  func.func @transform_6(%arg0: i32, %arg1: memref<2xi32, #tpu.memory_space<smem>>) -> (i32, i32) {
    %c0_i32 = arith.constant 0 : i32
    %c0_i32_0 = arith.constant 0 : i32
    %c0_i32_1 = arith.constant 0 : i32
    return %c0_i32, %c0_i32_0 : i32, i32
  }
  func.func @transform_7(%arg0: i32, %arg1: memref<2xi32, #tpu.memory_space<smem>>) -> (i32, i32, i32) {
    %c0_i32 = arith.constant 0 : i32
    %c0_i32_0 = arith.constant 0 : i32
    %c0_i32_1 = arith.constant 0 : i32
    return %c0_i32, %arg0, %c0_i32_0 : i32, i32, i32
  }
}

</mosaic_0001>

<llo_original>
// kernel: lstm_model_forward.2
$region0: #{lstm_model_forward.2}
  #allocation0 [shape = 'u32[]', space=smem, size = 0x4, offset = 0x4, fixed_abs, tag = 'smem constant byte address 0x4 - core index']
  #allocation1 [shape = 'u32[144,128]{1,0:T(1,128)}', space=vmem, size = 0x12000, scoped, tag = 'internal scratch']
  #allocation2 [shape = 'f32[8,16,128]{2,1,0:T(8,128)}', space=vmem, size = 0x10000, scoped, tag = 'scratch operand']
  #allocation3 [shape = 'f32[8,16,128]{2,1,0:T(8,128)}', space=vmem, size = 0x10000, scoped, tag = 'scratch operand']
  #allocation4 [shape = 'f32[16,32]{1,0:T(8,128)}', space=vmem, size = 0x2000, scoped, tag = 'scratch operand']
  #allocation5 [shape = 'f32[16,32]{1,0:T(8,128)}', space=vmem, size = 0x2000, scoped, tag = 'scratch operand']
  #allocation6 [shape = 'f32[16,32]{1,0:T(8,128)}', space=vmem, size = 0x2000, scoped, tag = 'scratch operand']
  #allocation7 [shape = 'f32[16,32]{1,0:T(8,128)}', space=vmem, size = 0x2000, scoped, tag = 'scratch operand']
  #allocation8 [shape = 's32[1]{0}', space=sflag, size = 0x4, scoped, tag = 'scoped memory for lstm_model_forward.2']
  #allocation9 [shape = 'u8[512]{0}', space=smem, size = 0x200, scoped, tag = 'prefetched SMEM operand 0']
  %s0 = inlined_call_operand.vmem [shape: s32[2], index: 0, kind: input, shape index: {}]
  %s1 = inlined_call_operand.vmem [shape: s32[32,1], index: 1, kind: input, shape index: {}]
  %s2 = inlined_call_operand.vmem [shape: bf16[8,32,32], index: 2, kind: input, shape index: {}]
  %s3 = inlined_call_operand.vmem [shape: bf16[32,128], index: 3, kind: input, shape index: {}]
  %s4 = inlined_call_operand.vmem [shape: bf16[32,128], index: 4, kind: input, shape index: {}]
  %s5 = inlined_call_operand.vmem [shape: bf16[32,256], index: 5, kind: input, shape index: {}]
  %s6 = inlined_call_operand.vmem [shape: f32[1,128], index: 6, kind: input, shape index: {}]
  %s7 = inlined_call_operand.vmem [shape: f32[1,128], index: 7, kind: input, shape index: {}]
  %s8 = inlined_call_operand.vmem [shape: bf16[8,32,64], index: 8, kind: output, shape index: {}]
  %s9 = sld [smem:[#allocation0]]
  $region146: #{lstm_model_forward.2} parent=0
    _
  %s11 = ssub.s32 1, %s9
  %s12 = scalar_select 0, %s11, %s9
  %s13 = sshll.u32 %s0, 4
  %s14 = int_to_ptr.vmem [resolvable:$true] %s13
  %16 = dma.vmem_to_smem %s14, 16, [#allocation9], [#allocation8]
  %17 = dma.done [#allocation8], 16
  %18 = sfence
  $region1: #{lstm_model_forward.2} parent=0
    #allocation10 [shape = 'u8[65536]{0}', space=vmem, size = 0x10000, scoped, tag = 'input window, operand 2']
    #allocation11 [shape = 'u8[65536]{0}', space=vmem, size = 0x10000, scoped, tag = 'output window, operand 0']
    loop: start=0, step=1, limit=4
    $region2: #{lstm_model_forward.2} parent=1 // loop_pre_header
      _
    $region3: #{lstm_model_forward.2} parent=1 // loop_header
      %s20 = sphi 0, %s24
      %p21 = scmp.ge.s32.totalorder %s20, 4
      %s30 = sphi 0, %s32
      %s33 = sphi 0, %s30
      %s34 = sphi 0, %s33
      %s50 = sphi 0, %s34
      %s56 = sphi 0, %s58
      %s59 = sphi 0, %s56
      %s60 = sphi 0, %s59
      %s76 = sphi 0, %s60
      %s80 = sphi 0, %s80
      %s82 = sphi 0, %s80
      %s83 = sphi 0, %s82
      %s97 = sphi 0, %s83
      %s101 = sphi 0, %s101
      %s103 = sphi 0, %s101
      %s104 = sphi 0, %s103
      %s118 = sphi 0, %s104
      %s122 = sphi 0, %s122
      %s124 = sphi 0, %s122
      %s125 = sphi 0, %s124
      %s139 = sphi 0, %s125
      %s143 = sphi 0, %s143
      %s145 = sphi 0, %s143
      %s146 = sphi 0, %s145
      %s160 = sphi 0, %s146
      %s164 = sphi 0, %s164
      %s166 = sphi 0, %s164
      %s167 = sphi 0, %s166
      %s181 = sphi 0, %s167
      %s187 = sphi 0, %s189
      %s190 = sphi 0, %s187
      %s191 = sphi 0, %s190
      %s207 = sphi 0, %s191
    $region4: #{lstm_model_forward.2} parent=1 // loop_header_branch
      %23 = sbr.rel (%p21) target = $region8
    $region5: #{lstm_model_forward.2} parent=1 // loop_body
      %s25 = ssub.s32 %s20, 1
      %s26 = ssub.s32 %s20, 2
      %s27 = sadd.s32 %s20, 1
      %s28 = ssub.s32 %s20, %s27
      %p29 = scmp.eq.s32.totalorder %s28, 0
      %s31 = sadd.s32 %s30, 1
      %s32 = scalar_select %p29, %s30, %s31
      %p35 = pneg %p29
      %p36 = scmp.eq.s32.totalorder %s20, 1
      %p37 = por %p35, %p36
      %p38 = scmp.ne.s32.totalorder %s30, %s33
      %p39 = scmp.eq.s32.totalorder %s20, 0
      %p40 = por %p38, %p39
      %p41 = scmp.ne.s32.totalorder %s30, %s33
      %p42 = scmp.eq.s32.totalorder %s25, 1
      %p43 = por %p41, %p42
      %p44 = scmp.ne.s32.totalorder %s33, %s34
      %p45 = scmp.eq.s32.totalorder %s25, 0
      %p46 = por %p44, %p45
      %p47 = scmp.ne.s32.totalorder %s33, %s34
      %p48 = scmp.eq.s32.totalorder %s26, 1
      %p49 = por %p47, %p48
      %p51 = scmp.ne.s32.totalorder %s34, %s50
      %p52 = scmp.eq.s32.totalorder %s26, 0
      %p53 = por %p51, %p52
      %s54 = ssub.s32 %s20, %s27
      %p55 = scmp.eq.s32.totalorder %s54, 0
      %s57 = sadd.s32 %s56, 1
      %s58 = scalar_select %p55, %s56, %s57
      %p61 = pneg %p55
      %p62 = scmp.eq.s32.totalorder %s20, 1
      %p63 = por %p61, %p62
      %p64 = scmp.ne.s32.totalorder %s56, %s59
      %p65 = scmp.eq.s32.totalorder %s20, 0
      %p66 = por %p64, %p65
      %p67 = scmp.ne.s32.totalorder %s56, %s59
      %p68 = scmp.eq.s32.totalorder %s25, 1
      %p69 = por %p67, %p68
      %p70 = scmp.ne.s32.totalorder %s59, %s60
      %p71 = scmp.eq.s32.totalorder %s25, 0
      %p72 = por %p70, %p71
      %p73 = scmp.ne.s32.totalorder %s59, %s60
      %p74 = scmp.eq.s32.totalorder %s26, 1
      %p75 = por %p73, %p74
      %p77 = scmp.ne.s32.totalorder %s60, %s76
      %p78 = scmp.eq.s32.totalorder %s26, 0
      %p79 = por %p77, %p78
      %s81 = sadd.s32 %s80, 1
      %p84 = scmp.eq.s32.totalorder %s20, 1
      %p85 = scmp.ne.s32.totalorder %s80, %s82
      %p86 = scmp.eq.s32.totalorder %s20, 0
      %p87 = por %p85, %p86
      %p88 = scmp.ne.s32.totalorder %s80, %s82
      %p89 = scmp.eq.s32.totalorder %s25, 1
      %p90 = por %p88, %p89
      %p91 = scmp.ne.s32.totalorder %s82, %s83
      %p92 = scmp.eq.s32.totalorder %s25, 0
      %p93 = por %p91, %p92
      %p94 = scmp.ne.s32.totalorder %s82, %s83
      %p95 = scmp.eq.s32.totalorder %s26, 1
      %p96 = por %p94, %p95
      %p98 = scmp.ne.s32.totalorder %s83, %s97
      %p99 = scmp.eq.s32.totalorder %s26, 0
      %p100 = por %p98, %p99
      %s102 = sadd.s32 %s101, 1
      %p105 = scmp.eq.s32.totalorder %s20, 1
      %p106 = scmp.ne.s32.totalorder %s101, %s103
      %p107 = scmp.eq.s32.totalorder %s20, 0
      %p108 = por %p106, %p107
      %p109 = scmp.ne.s32.totalorder %s101, %s103
      %p110 = scmp.eq.s32.totalorder %s25, 1
      %p111 = por %p109, %p110
      %p112 = scmp.ne.s32.totalorder %s103, %s104
      %p113 = scmp.eq.s32.totalorder %s25, 0
      %p114 = por %p112, %p113
      %p115 = scmp.ne.s32.totalorder %s103, %s104
      %p116 = scmp.eq.s32.totalorder %s26, 1
      %p117 = por %p115, %p116
      %p119 = scmp.ne.s32.totalorder %s104, %s118
      %p120 = scmp.eq.s32.totalorder %s26, 0
      %p121 = por %p119, %p120
      %s123 = sadd.s32 %s122, 1
      %p126 = scmp.eq.s32.totalorder %s20, 1
      %p127 = scmp.ne.s32.totalorder %s122, %s124
      %p128 = scmp.eq.s32.totalorder %s20, 0
      %p129 = por %p127, %p128
      %p130 = scmp.ne.s32.totalorder %s122, %s124
      %p131 = scmp.eq.s32.totalorder %s25, 1
      %p132 = por %p130, %p131
      %p133 = scmp.ne.s32.totalorder %s124, %s125
      %p134 = scmp.eq.s32.totalorder %s25, 0
      %p135 = por %p133, %p134
      %p136 = scmp.ne.s32.totalorder %s124, %s125
      %p137 = scmp.eq.s32.totalorder %s26, 1
      %p138 = por %p136, %p137
      %p140 = scmp.ne.s32.totalorder %s125, %s139
      %p141 = scmp.eq.s32.totalorder %s26, 0
      %p142 = por %p140, %p141
      %s144 = sadd.s32 %s143, 1
      %p147 = scmp.eq.s32.totalorder %s20, 1
      %p148 = scmp.ne.s32.totalorder %s143, %s145
      %p149 = scmp.eq.s32.totalorder %s20, 0
      %p150 = por %p148, %p149
      %p151 = scmp.ne.s32.totalorder %s143, %s145
      %p152 = scmp.eq.s32.totalorder %s25, 1
      %p153 = por %p151, %p152
      %p154 = scmp.ne.s32.totalorder %s145, %s146
      %p155 = scmp.eq.s32.totalorder %s25, 0
      %p156 = por %p154, %p155
      %p157 = scmp.ne.s32.totalorder %s145, %s146
      %p158 = scmp.eq.s32.totalorder %s26, 1
      %p159 = por %p157, %p158
      %p161 = scmp.ne.s32.totalorder %s146, %s160
      %p162 = scmp.eq.s32.totalorder %s26, 0
      %p163 = por %p161, %p162
      %s165 = sadd.s32 %s164, 1
      %p168 = scmp.eq.s32.totalorder %s20, 1
      %p169 = scmp.ne.s32.totalorder %s164, %s166
      %p170 = scmp.eq.s32.totalorder %s20, 0
      %p171 = por %p169, %p170
      %p172 = scmp.ne.s32.totalorder %s164, %s166
      %p173 = scmp.eq.s32.totalorder %s25, 1
      %p174 = por %p172, %p173
      %p175 = scmp.ne.s32.totalorder %s166, %s167
      %p176 = scmp.eq.s32.totalorder %s25, 0
      %p177 = por %p175, %p176
      %p178 = scmp.ne.s32.totalorder %s166, %s167
      %p179 = scmp.eq.s32.totalorder %s26, 1
      %p180 = por %p178, %p179
      %p182 = scmp.ne.s32.totalorder %s167, %s181
      %p183 = scmp.eq.s32.totalorder %s26, 0
      %p184 = por %p182, %p183
      %s185 = ssub.s32 %s20, %s27
      %p186 = scmp.eq.s32.totalorder %s185, 0
      %s188 = sadd.s32 %s187, 1
      %s189 = scalar_select %p186, %s187, %s188
      %p192 = pneg %p186
      %p193 = scmp.eq.s32.totalorder %s20, 1
      %p194 = por %p192, %p193
      %p195 = scmp.ne.s32.totalorder %s187, %s190
      %p196 = scmp.eq.s32.totalorder %s20, 0
      %p197 = por %p195, %p196
      %p198 = scmp.ne.s32.totalorder %s187, %s190
      %p199 = scmp.eq.s32.totalorder %s25, 1
      %p200 = por %p198, %p199
      %p201 = scmp.ne.s32.totalorder %s190, %s191
      %p202 = scmp.eq.s32.totalorder %s25, 0
      %p203 = por %p201, %p202
      %p204 = scmp.ne.s32.totalorder %s190, %s191
      %p205 = scmp.eq.s32.totalorder %s26, 1
      %p206 = por %p204, %p205
      %p208 = scmp.ne.s32.totalorder %s191, %s207
      %p209 = scmp.eq.s32.totalorder %s26, 0
      %p210 = por %p208, %p209
      %p211 = scmp.le.s32.totalorder 1, %s20
      %p212 = scmp.lt.s32.totalorder %s20, 3
      %p213 = pnand %p211, %p212
      %p214 = pneg %p213
      // Predicated region
      $region9: #{lstm_model_forward.2} parent=5 // pred_check
        _
      $region10: #{lstm_model_forward.2} parent=5 // pred_check_branch
        %216 = sbr.rel (%p213) target = $region12
      $region11: #{lstm_model_forward.2} parent=5 // pred_region
        %s217 = ssub.s32 %s20, 1
        // Predicated region
        $region13: #{lstm_model_forward.2} parent=11 // pred_check
          %p218 = pneg %p93
        $region14: #{lstm_model_forward.2} parent=11 // pred_check_branch
          %220 = sbr.rel (%p218) target = $region16
        $region15: #{lstm_model_forward.2} parent=11 // pred_region
          _
        $region16: #{lstm_model_forward.2} parent=11 // pred_fallthru
          _
        // Predicated region
        $region17: #{lstm_model_forward.2} parent=11 // pred_check
          %p221 = pneg %p114
        $region18: #{lstm_model_forward.2} parent=11 // pred_check_branch
          %223 = sbr.rel (%p221) target = $region20
        $region19: #{lstm_model_forward.2} parent=11 // pred_region
          _
        $region20: #{lstm_model_forward.2} parent=11 // pred_fallthru
          _
        // Predicated region
        $region21: #{lstm_model_forward.2} parent=11 // pred_check
          %p224 = pneg %p135
        $region22: #{lstm_model_forward.2} parent=11 // pred_check_branch
          %226 = sbr.rel (%p224) target = $region24
        $region23: #{lstm_model_forward.2} parent=11 // pred_region
          _
        $region24: #{lstm_model_forward.2} parent=11 // pred_fallthru
          _
        // Predicated region
        $region25: #{lstm_model_forward.2} parent=11 // pred_check
          %p227 = pneg %p156
        $region26: #{lstm_model_forward.2} parent=11 // pred_check_branch
          %229 = sbr.rel (%p227) target = $region28
        $region27: #{lstm_model_forward.2} parent=11 // pred_region
          _
        $region28: #{lstm_model_forward.2} parent=11 // pred_fallthru
          _
        // Predicated region
        $region29: #{lstm_model_forward.2} parent=11 // pred_check
          %p230 = pneg %p177
        $region30: #{lstm_model_forward.2} parent=11 // pred_check_branch
          %232 = sbr.rel (%p230) target = $region32
        $region31: #{lstm_model_forward.2} parent=11 // pred_region
          _
        $region32: #{lstm_model_forward.2} parent=11 // pred_fallthru
          _
      $region12: #{lstm_model_forward.2} parent=5 // pred_fallthru
        _
      %p233 = scmp.lt.s32.totalorder %s20, 2
      // Predicated region
      $region33: #{lstm_model_forward.2} parent=5 // pred_check
        %p234 = pneg %p233
      $region34: #{lstm_model_forward.2} parent=5 // pred_check_branch
        %236 = sbr.rel (%p234) target = $region36
      $region35: #{lstm_model_forward.2} parent=5 // pred_region
        // Predicated region
        $region37: #{lstm_model_forward.2} parent=35 // pred_check
          %p237 = pneg %p40
        $region38: #{lstm_model_forward.2} parent=35 // pred_check_branch
          %239 = sbr.rel (%p237) target = $region40
        $region39: #{lstm_model_forward.2} parent=35 // pred_region
          %s240 = smul.u32 2, %s20
          %p241 = scmp.lt.s32.totalorder %s240, 3
          %s242 = scalar_select %p241, %s240, 3
          %s243 = smul.addr %s242, 8
          %s244 = scalar_lea.vmem %s1, %s243
          %s245 = smul.u32 2, %s20
        $region40: #{lstm_model_forward.2} parent=35 // pred_fallthru
          _
        // Predicated region
        $region41: #{lstm_model_forward.2} parent=35 // pred_check
          %p246 = pneg %p66
        $region42: #{lstm_model_forward.2} parent=35 // pred_check_branch
          %248 = sbr.rel (%p246) target = $region44
        $region43: #{lstm_model_forward.2} parent=35 // pred_region
          %s249 = sand.u32 %s56, 1
          %s250 = sand.u32 %s56, 1
          %s251 = smul.addr %s250, 64
          %s252 = scalar_lea.vmem [#allocation10], %s251
          %s253 = smul.u32 2, %s20
          %s254 = smul.addr %s253, 4
          %s255 = scalar_lea.vmem %s2, %s254
          // Predicated region
          $region45: #{lstm_model_forward.2} parent=43 // pred_check
            _
          $region46: #{lstm_model_forward.2} parent=43 // pred_check_branch
            %257 = sbr.rel (0) target = $region48
          $region47: #{lstm_model_forward.2} parent=43 // pred_region
            // Predicated region
            $region49: #{lstm_model_forward.2} parent=47 // pred_check
              _
            $region50: #{lstm_model_forward.2} parent=47 // pred_check_branch
              %259 = sbr.rel target = $region52
            $region51: #{lstm_model_forward.2} parent=47 // pred_region
              // Predicated region
              $region64: #{lstm_model_forward.2} parent=51 // pred_check
                _
              $region65: #{lstm_model_forward.2} parent=51 // pred_check_branch
                %304 = sbr.rel (0) target = $region67
              $region66: #{lstm_model_forward.2} parent=51 // pred_region
                loop: start=0, step=1, limit=1
                $region68: #{lstm_model_forward.2} parent=66 // loop_pre_header
                  _
                $region69: #{lstm_model_forward.2} parent=66 // loop_header
                  %s306 = sphi 0, %s310
                  %p307 = scmp.ge.s32.totalorder %s306, 1
                  %s311 = sphi %s255, %s255
                  %s312 = sphi %s252, %s252
                $region70: #{lstm_model_forward.2} parent=66 // loop_header_branch
                  %309 = sbr.rel (%p307) target = $region74
                $region71: #{lstm_model_forward.2} parent=66 // loop_body
                  _
                $region72: #{lstm_model_forward.2} parent=66 // loop_footer
                  %s310 = sadd.s32 1, %s306
                $region73: #{lstm_model_forward.2} parent=66 // loop_footer_branch
                  %305 = sbr.rel target = $region69
                $region74: #{lstm_model_forward.2} parent=66 // loop_exit
                  _
                loop: start=0, step=1, limit=1
                $region75: #{lstm_model_forward.2} parent=66 // loop_pre_header
                  _
                $region76: #{lstm_model_forward.2} parent=66 // loop_header
                  %s315 = sphi 0, %s319
                  %p316 = scmp.ge.s32.totalorder %s315, 1
                  %s320 = sphi %s255, %s255
                  %s321 = sphi %s252, %s252
                $region77: #{lstm_model_forward.2} parent=66 // loop_header_branch
                  %318 = sbr.rel (%p316) target = $region81
                $region78: #{lstm_model_forward.2} parent=66 // loop_body
                  %v322 = vld [vmem:[%s320] sm:$0xf]
                  %323 = vst [vmem:[%s321] sm:$0xf] %v322
                  %v324 = vld [vmem:[%s320 + $0x4] sm:$0xf]
                  %325 = vst [vmem:[%s321 + $0x4] sm:$0xf] %v324
                  %v326 = vld [vmem:[%s320 + $0x10] sm:$0xf]
                  %327 = vst [vmem:[%s321 + $0x8] sm:$0xf] %v326
                  %v328 = vld [vmem:[%s320 + $0x14] sm:$0xf]
                  %329 = vst [vmem:[%s321 + $0xc] sm:$0xf] %v328
                  %v330 = vld [vmem:[%s320 + $0x20] sm:$0xf]
                  %331 = vst [vmem:[%s321 + $0x10] sm:$0xf] %v330
                  %v332 = vld [vmem:[%s320 + $0x24] sm:$0xf]
                  %333 = vst [vmem:[%s321 + $0x14] sm:$0xf] %v332
                  %v334 = vld [vmem:[%s320 + $0x30] sm:$0xf]
                  %335 = vst [vmem:[%s321 + $0x18] sm:$0xf] %v334
                  %v336 = vld [vmem:[%s320 + $0x34] sm:$0xf]
                  %337 = vst [vmem:[%s321 + $0x1c] sm:$0xf] %v336
                  %v338 = vld [vmem:[%s320 + $0x40] sm:$0xf]
                  %339 = vst [vmem:[%s321 + $0x20] sm:$0xf] %v338
                  %v340 = vld [vmem:[%s320 + $0x44] sm:$0xf]
                  %341 = vst [vmem:[%s321 + $0x24] sm:$0xf] %v340
                  %v342 = vld [vmem:[%s320 + $0x50] sm:$0xf]
                  %343 = vst [vmem:[%s321 + $0x28] sm:$0xf] %v342
                  %v344 = vld [vmem:[%s320 + $0x54] sm:$0xf]
                  %345 = vst [vmem:[%s321 + $0x2c] sm:$0xf] %v344
                  %v346 = vld [vmem:[%s320 + $0x60] sm:$0xf]
                  %347 = vst [vmem:[%s321 + $0x30] sm:$0xf] %v346
                  %v348 = vld [vmem:[%s320 + $0x64] sm:$0xf]
                  %349 = vst [vmem:[%s321 + $0x34] sm:$0xf] %v348
                  %v350 = vld [vmem:[%s320 + $0x70] sm:$0xf]
                  %351 = vst [vmem:[%s321 + $0x38] sm:$0xf] %v350
                  %v352 = vld [vmem:[%s320 + $0x74] sm:$0xf]
                  %353 = vst [vmem:[%s321 + $0x3c] sm:$0xf] %v352
                $region79: #{lstm_model_forward.2} parent=66 // loop_footer
                  %s319 = sadd.s32 1, %s315
                $region80: #{lstm_model_forward.2} parent=66 // loop_footer_branch
                  %314 = sbr.rel target = $region76
                $region81: #{lstm_model_forward.2} parent=66 // loop_exit
                  _
              $region67: #{lstm_model_forward.2} parent=51 // pred_fallthru
                _
            $region52: #{lstm_model_forward.2} parent=47 // pred_fallthru
              _
            // Predicated region
            $region53: #{lstm_model_forward.2} parent=47 // pred_check
              _
            $region54: #{lstm_model_forward.2} parent=47 // pred_check_branch
              %261 = sbr.rel (0) target = $region56
            $region55: #{lstm_model_forward.2} parent=47 // pred_region
              loop: start=0, step=1, limit=1
              $region57: #{lstm_model_forward.2} parent=55 // loop_pre_header
                _
              $region58: #{lstm_model_forward.2} parent=55 // loop_header
                %s264 = sphi 0, %s268
                %p265 = scmp.ge.s32.totalorder %s264, 1
                %s269 = sphi %s255, %s255
                %s270 = sphi %s252, %s252
              $region59: #{lstm_model_forward.2} parent=55 // loop_header_branch
                %267 = sbr.rel (%p265) target = $region63
              $region60: #{lstm_model_forward.2} parent=55 // loop_body
                %v271 = vld [vmem:[%s269] sm:$0xf]
                %272 = vst [vmem:[%s270] sm:$0xf] %v271
                %v273 = vld [vmem:[%s269 + $0x4] sm:$0xf]
                %274 = vst [vmem:[%s270 + $0x4] sm:$0xf] %v273
                %v275 = vld [vmem:[%s269 + $0x10] sm:$0xf]
                %276 = vst [vmem:[%s270 + $0x8] sm:$0xf] %v275
                %v277 = vld [vmem:[%s269 + $0x14] sm:$0xf]
                %278 = vst [vmem:[%s270 + $0xc] sm:$0xf] %v277
                %v279 = vld [vmem:[%s269 + $0x20] sm:$0xf]
                %280 = vst [vmem:[%s270 + $0x10] sm:$0xf] %v279
                %v281 = vld [vmem:[%s269 + $0x24] sm:$0xf]
                %282 = vst [vmem:[%s270 + $0x14] sm:$0xf] %v281
                %v283 = vld [vmem:[%s269 + $0x30] sm:$0xf]
                %284 = vst [vmem:[%s270 + $0x18] sm:$0xf] %v283
                %v285 = vld [vmem:[%s269 + $0x34] sm:$0xf]
                %286 = vst [vmem:[%s270 + $0x1c] sm:$0xf] %v285
                %v287 = vld [vmem:[%s269 + $0x40] sm:$0xf]
                %288 = vst [vmem:[%s270 + $0x20] sm:$0xf] %v287
                %v289 = vld [vmem:[%s269 + $0x44] sm:$0xf]
                %290 = vst [vmem:[%s270 + $0x24] sm:$0xf] %v289
                %v291 = vld [vmem:[%s269 + $0x50] sm:$0xf]
                %292 = vst [vmem:[%s270 + $0x28] sm:$0xf] %v291
                %v293 = vld [vmem:[%s269 + $0x54] sm:$0xf]
                %294 = vst [vmem:[%s270 + $0x2c] sm:$0xf] %v293
                %v295 = vld [vmem:[%s269 + $0x60] sm:$0xf]
                %296 = vst [vmem:[%s270 + $0x30] sm:$0xf] %v295
                %v297 = vld [vmem:[%s269 + $0x64] sm:$0xf]
                %298 = vst [vmem:[%s270 + $0x34] sm:$0xf] %v297
                %v299 = vld [vmem:[%s269 + $0x70] sm:$0xf]
                %300 = vst [vmem:[%s270 + $0x38] sm:$0xf] %v299
                %v301 = vld [vmem:[%s269 + $0x74] sm:$0xf]
                %302 = vst [vmem:[%s270 + $0x3c] sm:$0xf] %v301
              $region61: #{lstm_model_forward.2} parent=55 // loop_footer
                %s268 = sadd.s32 1, %s264
              $region62: #{lstm_model_forward.2} parent=55 // loop_footer_branch
                %263 = sbr.rel target = $region58
              $region63: #{lstm_model_forward.2} parent=55 // loop_exit
                _
            $region56: #{lstm_model_forward.2} parent=47 // pred_fallthru
              _
          $region48: #{lstm_model_forward.2} parent=43 // pred_fallthru
            _
          %354 = vnop
        $region44: #{lstm_model_forward.2} parent=35 // pred_fallthru
          _
      $region36: #{lstm_model_forward.2} parent=5 // pred_fallthru
        _
      %p355 = scmp.le.s32.totalorder 1, %s20
      %p356 = scmp.lt.s32.totalorder %s20, 3
      %p357 = pnand %p355, %p356
      %p358 = pneg %p357
      // Predicated region
      $region82: #{lstm_model_forward.2} parent=5 // pred_check
        _
      $region83: #{lstm_model_forward.2} parent=5 // pred_check_branch
        %360 = sbr.rel (%p357) target = $region85
      $region84: #{lstm_model_forward.2} parent=5 // pred_region
        %s361 = ssub.s32 %s20, 1
        %s362 = sand.u32 %s59, 1
        %s363 = sand.u32 %s59, 1
        %s364 = smul.addr %s363, 64
        %s365 = scalar_lea.vmem [#allocation10], %s364
        // Predicated region
        $region86: #{lstm_model_forward.2} parent=84 // pred_check
          %p366 = pneg %p72
        $region87: #{lstm_model_forward.2} parent=84 // pred_check_branch
          %368 = sbr.rel (%p366) target = $region89
        $region88: #{lstm_model_forward.2} parent=84 // pred_region
          _
        $region89: #{lstm_model_forward.2} parent=84 // pred_fallthru
          _
        %s369 = smul.u32 2, %s25
        %p370 = scmp.lt.s32.totalorder %s369, 3
        %s371 = scalar_select %p370, %s369, 3
        %s372 = smul.addr %s371, 8
        %s373 = scalar_lea.vmem %s1, %s372
        %p374 = pneg %p46
        %p375 = pneg %p43
        %s376 = sand.u32 %s59, 1
        %s377 = sand.u32 %s59, 1
        %s378 = smul.addr %s377, 64
        %s379 = scalar_lea.vmem [#allocation10], %s378
        %p380 = pneg %p72
        %p381 = pneg %p69
        %p382 = pneg %p93
        %p383 = pneg %p90
        %p384 = pneg %p114
        %p385 = pneg %p111
        %p386 = pneg %p135
        %p387 = pneg %p132
        %p388 = pneg %p156
        %p389 = pneg %p153
        %p390 = pneg %p177
        %p391 = pneg %p174
        %p392 = pneg %p203
        %p393 = pneg %p200
        %s394 = sand.u32 %s190, 1
        %s395 = sand.u32 %s190, 1
        %s396 = smul.addr %s395, 64
        %s397 = scalar_lea.vmem [#allocation11], %s396
        %s398 = smul.u32 2, %s25
        %p399 = scmp.lt.s32.totalorder %s398, 3
        %s400 = scalar_select %p399, %s398, 3
        %s401 = smul.addr %s400, 8
        %s402 = scalar_lea.vmem %s1, %s401
        %s403 = smul.u32 2, %s25
        %s404 = smul.u32 2, %s25
        %s405 = smul.u32 2, %s25
        %vm407 = vcmask 261120
        %408 = vst.msk [vmem:[#allocation4] sm:$0xff] %vm407, 0.0
        %409 = vst.msk [vmem:[#allocation4 + $0x8] sm:$0xff] %vm407, 0.0
        %410 = vst.msk [vmem:[#allocation5] sm:$0xff] %vm407, 0.0
        %411 = vst.msk [vmem:[#allocation5 + $0x8] sm:$0xff] %vm407, 0.0
        %412 = vst.msk [vmem:[#allocation6] sm:$0xff] %vm407, 0.0
        %413 = vst.msk [vmem:[#allocation6 + $0x8] sm:$0xff] %vm407, 0.0
        %414 = vst.msk [vmem:[#allocation7] sm:$0xff] %vm407, 0.0
        %415 = vst.msk [vmem:[#allocation7 + $0x8] sm:$0xff] %vm407, 0.0
        %vm416 = vcmask 519168
        %417 = vst.msk [vmem:[%s397] sm:$0xf] %vm416, 0
        %418 = vst.msk [vmem:[%s397 + $0x4] sm:$0xf] %vm416, 0
        %419 = vst.msk [vmem:[%s397 + $0x8] sm:$0xf] %vm416, 0
        %420 = vst.msk [vmem:[%s397 + $0xc] sm:$0xf] %vm416, 0
        %421 = vst.msk [vmem:[%s397 + $0x10] sm:$0xf] %vm416, 0
        %422 = vst.msk [vmem:[%s397 + $0x14] sm:$0xf] %vm416, 0
        %423 = vst.msk [vmem:[%s397 + $0x18] sm:$0xf] %vm416, 0
        %424 = vst.msk [vmem:[%s397 + $0x1c] sm:$0xf] %vm416, 0
        %425 = vst.msk [vmem:[%s397 + $0x20] sm:$0xf] %vm416, 0
        %426 = vst.msk [vmem:[%s397 + $0x24] sm:$0xf] %vm416, 0
        %427 = vst.msk [vmem:[%s397 + $0x28] sm:$0xf] %vm416, 0
        %428 = vst.msk [vmem:[%s397 + $0x2c] sm:$0xf] %vm416, 0
        %429 = vst.msk [vmem:[%s397 + $0x30] sm:$0xf] %vm416, 0
        %430 = vst.msk [vmem:[%s397 + $0x34] sm:$0xf] %vm416, 0
        %431 = vst.msk [vmem:[%s397 + $0x38] sm:$0xf] %vm416, 0
        %432 = vst.msk [vmem:[%s397 + $0x3c] sm:$0xf] %vm416, 0
        %v433 = vld [vmem:[%s365] sm:$0xf]
        %v434 = vld [vmem:[%s365 + $0x4] sm:$0xf]
        %v435 = vld [vmem:[%s365 + $0x8] sm:$0xf]
        %v436 = vld [vmem:[%s365 + $0xc] sm:$0xf]
        %v437 = vld [vmem:[%s365 + $0x10] sm:$0xf]
        %v438 = vld [vmem:[%s365 + $0x14] sm:$0xf]
        %v439 = vld [vmem:[%s365 + $0x18] sm:$0xf]
        %v440 = vld [vmem:[%s365 + $0x1c] sm:$0xf]
        %v441 = vld [vmem:[%s365 + $0x20] sm:$0xf]
        %v442 = vld [vmem:[%s365 + $0x24] sm:$0xf]
        %v443 = vld [vmem:[%s365 + $0x28] sm:$0xf]
        %v444 = vld [vmem:[%s365 + $0x2c] sm:$0xf]
        %v445 = vld [vmem:[%s365 + $0x30] sm:$0xf]
        %v446 = vld [vmem:[%s365 + $0x34] sm:$0xf]
        %v447 = vld [vmem:[%s365 + $0x38] sm:$0xf]
        %v448 = vld [vmem:[%s365 + $0x3c] sm:$0xf]
        %v449 = vld [vmem:[%s3] sm:$0xf]
        %v450 = vld [vmem:[%s3 + $0x4] sm:$0xf]
        %v451 = vld [vmem:[%s3 + $0x8] sm:$0xf]
        %v452 = vld [vmem:[%s3 + $0xc] sm:$0xf]
        %v453 = vld [vmem:[%s6] sm:$0x1]
        %v455 = vlaneseq
        %v456 = vshrl.u32 %v455, 7
        %v457 = vsub.s32 0, %v456
        %v458 = vrot.slane %v453, %v457
        %v476 = vunpack.c.l.b16 %v433
        %v477 = vunpack.c.l.b16 %v434
        %v478 = vunpack.c.l.b16 %v435
        %v479 = vunpack.c.l.b16 %v436
        %v480 = vunpack.c.l.b16 %v437
        %v481 = vunpack.c.l.b16 %v438
        %v482 = vunpack.c.l.b16 %v439
        %v483 = vunpack.c.l.b16 %v440
        %v484 = vunpack.c.l.b16 %v441
        %v485 = vunpack.c.l.b16 %v442
        %v486 = vunpack.c.l.b16 %v443
        %v487 = vunpack.c.l.b16 %v444
        %v488 = vunpack.c.l.b16 %v445
        %v489 = vunpack.c.l.b16 %v446
        %v490 = vunpack.c.l.b16 %v447
        %v491 = vunpack.c.l.b16 %v448
        %v492 = vpack.c.b16 %v477, %v476
        %v493 = vpack.c.b16 %v479, %v478
        %v494 = vpack.c.b16 %v481, %v480
        %v495 = vpack.c.b16 %v483, %v482
        %v496 = vpack.c.b16 %v485, %v484
        %v497 = vpack.c.b16 %v487, %v486
        %v498 = vpack.c.b16 %v489, %v488
        %v499 = vpack.c.b16 %v491, %v490
        %v504 = vunpack.c.l.b16 %v449
        %v505 = vunpack.c.l.b16 %v450
        %v506 = vunpack.c.l.b16 %v451
        %v507 = vunpack.c.l.b16 %v452
        %v508 = vpack.c.b16 %v505, %v504
        %v509 = vpack.c.b16 %v507, %v506
        %v513 = vsel %vm407, %v492, 0
        %v516 = vsel %vm407, %v493, 0
        %v519 = vsel %vm407, %v494, 0
        %v522 = vsel %vm407, %v495, 0
        %v525 = vsel %vm407, %v496, 0
        %v528 = vsel %vm407, %v497, 0
        %v531 = vsel %vm407, %v498, 0
        %v534 = vsel %vm407, %v499, 0
        %536 = vmatprep.subr.bf16.mxu0 0
        %537 = vmatpush1.bf16.msra.mxu0 %v508
        %538 = vmatprep.subr.bf16.mxu0 0
        %539 = vmatpush1.bf16.msra.mxu0 %v509
        %540 = vmatprep.subr.bf16.mxu0 0
        %541 = vmatpush1.bf16.msra.mxu0 0
        %542 = vmatprep.subr.bf16.mxu0 0
        %543 = vmatpush1.bf16.msra.mxu0 0
        %544 = vmatprep.subr.bf16.mxu0 0
        %545 = vmatpush1.bf16.msra.mxu0 0
        %546 = vmatprep.subr.bf16.mxu0 0
        %547 = vmatpush1.bf16.msra.mxu0 0
        %548 = vmatprep.subr.bf16.mxu0 0
        %549 = vmatpush1.bf16.msra.mxu0 0
        %550 = vmatprep.subr.bf16.mxu0 0
        %551 = vmatpush1.bf16.msra.mxu0 0
        %552 = vmatprep.subr.bf16.mxu0 0
        %553 = vmatpush1.bf16.msra.mxu0 0
        %554 = vmatprep.subr.bf16.mxu0 0
        %555 = vmatpush1.bf16.msra.mxu0 0
        %556 = vmatprep.subr.bf16.mxu0 0
        %557 = vmatpush1.bf16.msra.mxu0 0
        %558 = vmatprep.subr.bf16.mxu0 0
        %559 = vmatpush1.bf16.msra.mxu0 0
        %560 = vmatprep.subr.bf16.mxu0 0
        %561 = vmatpush1.bf16.msra.mxu0 0
        %562 = vmatprep.subr.bf16.mxu0 0
        %563 = vmatpush1.bf16.msra.mxu0 0
        %564 = vmatprep.subr.bf16.mxu0 0
        %565 = vmatpush1.bf16.msra.mxu0 0
        %566 = vmatprep.subr.bf16.mxu0 0
        %567 = vmatpush1.bf16.msra.mxu0 0
        %568 = vmatprep.mubr.bf16.mxu0 0
        %569 = vmatmul.mubr.bf16.gmra.mrb[0].mxu0 %v513
        %v570 = vpop.f32.mrb[0].mxu0
        %v571 = vadd.f32 %v458, %v570
        %v572 = vpop.f32.mrb[0].mxu0
        %v573 = vpop.f32.mrb[0].mxu0
        %v574 = vadd.f32 %v458, %v573
        %v575 = vpop.f32.mrb[0].mxu0
        %576 = vmatprep.mubr.bf16.mxu0 0
        %577 = vmatmul.mubr.bf16.gmra.mrb[0].mxu0 %v516
        %v578 = vpop.f32.mrb[0].mxu0
        %v579 = vadd.f32 %v458, %v578
        %v580 = vpop.f32.mrb[0].mxu0
        %v581 = vpop.f32.mrb[0].mxu0
        %v582 = vadd.f32 %v458, %v581
        %v583 = vpop.f32.mrb[0].mxu0
        %584 = vmatprep.mubr.bf16.mxu0 0
        %585 = vmatmul.mubr.bf16.gmra.mrb[0].mxu0 %v519
        %v586 = vpop.f32.mrb[0].mxu0
        %v587 = vadd.f32 %v458, %v586
        %v588 = vpop.f32.mrb[0].mxu0
        %v589 = vpop.f32.mrb[0].mxu0
        %v590 = vadd.f32 %v458, %v589
        %v591 = vpop.f32.mrb[0].mxu0
        %592 = vmatprep.mubr.bf16.mxu0 0
        %593 = vmatmul.mubr.bf16.gmra.mrb[0].mxu0 %v522
        %v594 = vpop.f32.mrb[0].mxu0
        %v595 = vadd.f32 %v458, %v594
        %v596 = vpop.f32.mrb[0].mxu0
        %v597 = vpop.f32.mrb[0].mxu0
        %v598 = vadd.f32 %v458, %v597
        %v599 = vpop.f32.mrb[0].mxu0
        %600 = vmatprep.mubr.bf16.mxu0 0
        %601 = vmatmul.mubr.bf16.gmra.mrb[0].mxu0 %v525
        %v602 = vpop.f32.mrb[0].mxu0
        %v603 = vadd.f32 %v458, %v602
        %v604 = vpop.f32.mrb[0].mxu0
        %v605 = vpop.f32.mrb[0].mxu0
        %v606 = vadd.f32 %v458, %v605
        %v607 = vpop.f32.mrb[0].mxu0
        %608 = vmatprep.mubr.bf16.mxu0 0
        %609 = vmatmul.mubr.bf16.gmra.mrb[0].mxu0 %v528
        %v610 = vpop.f32.mrb[0].mxu0
        %v611 = vadd.f32 %v458, %v610
        %v612 = vpop.f32.mrb[0].mxu0
        %v613 = vpop.f32.mrb[0].mxu0
        %v614 = vadd.f32 %v458, %v613
        %v615 = vpop.f32.mrb[0].mxu0
        %616 = vmatprep.mubr.bf16.mxu0 0
        %617 = vmatmul.mubr.bf16.gmra.mrb[0].mxu0 %v531
        %v618 = vpop.f32.mrb[0].mxu0
        %v619 = vadd.f32 %v458, %v618
        %v620 = vpop.f32.mrb[0].mxu0
        %v621 = vpop.f32.mrb[0].mxu0
        %v622 = vadd.f32 %v458, %v621
        %v623 = vpop.f32.mrb[0].mxu0
        %624 = vmatprep.mubr.bf16.mxu0 0
        %625 = vmatmul.mubr.bf16.gmra.mrb[0].mxu0 %v534
        %v626 = vpop.f32.mrb[0].mxu0
        %v627 = vadd.f32 %v458, %v626
        %v628 = vpop.f32.mrb[0].mxu0
        %v629 = vpop.f32.mrb[0].mxu0
        %v630 = vadd.f32 %v458, %v629
        %v631 = vpop.f32.mrb[0].mxu0
        %632 = vdwg.mxu0
        %633 = vst [vmem:[#allocation2] sm:$0xff] %v571
        %634 = vst [vmem:[#allocation2 + $0x8] sm:$0xff] %v574
        %635 = vst [vmem:[#allocation2 + $0x10] sm:$0xff] %v579
        %636 = vst [vmem:[#allocation2 + $0x18] sm:$0xff] %v582
        %637 = vst [vmem:[#allocation2 + $0x20] sm:$0xff] %v587
        %638 = vst [vmem:[#allocation2 + $0x28] sm:$0xff] %v590
        %639 = vst [vmem:[#allocation2 + $0x30] sm:$0xff] %v595
        %640 = vst [vmem:[#allocation2 + $0x38] sm:$0xff] %v598
        %641 = vst [vmem:[#allocation2 + $0x40] sm:$0xff] %v603
        %642 = vst [vmem:[#allocation2 + $0x48] sm:$0xff] %v606
        %643 = vst [vmem:[#allocation2 + $0x50] sm:$0xff] %v611
        %644 = vst [vmem:[#allocation2 + $0x58] sm:$0xff] %v614
        %645 = vst [vmem:[#allocation2 + $0x60] sm:$0xff] %v619
        %646 = vst [vmem:[#allocation2 + $0x68] sm:$0xff] %v622
        %647 = vst [vmem:[#allocation2 + $0x70] sm:$0xff] %v627
        %648 = vst [vmem:[#allocation2 + $0x78] sm:$0xff] %v630
        %v649 = vld [vmem:[%s4] sm:$0xf]
        %v650 = vld [vmem:[%s4 + $0x4] sm:$0xf]
        %v651 = vld [vmem:[%s4 + $0x8] sm:$0xf]
        %v652 = vld [vmem:[%s4 + $0xc] sm:$0xf]
        %v653 = vld [vmem:[%s7] sm:$0x1]
        %v655 = vlaneseq
        %v656 = vshrl.u32 %v655, 7
        %v657 = vsub.s32 0, %v656
        %v658 = vrot.slane %v653, %v657
        %v664 = vunpack.c.l.b16 %v649
        %v665 = vunpack.c.l.b16 %v650
        %v666 = vunpack.c.l.b16 %v651
        %v667 = vunpack.c.l.b16 %v652
        %v668 = vpack.c.b16 %v665, %v664
        %v669 = vpack.c.b16 %v667, %v666
        %672 = vmatprep.subr.bf16.mxu0 0
        %673 = vmatpush1.bf16.msra.mxu0 %v668
        %674 = vmatprep.subr.bf16.mxu0 0
        %675 = vmatpush1.bf16.msra.mxu0 %v669
        %676 = vmatprep.subr.bf16.mxu0 0
        %677 = vmatpush1.bf16.msra.mxu0 0
        %678 = vmatprep.subr.bf16.mxu0 0
        %679 = vmatpush1.bf16.msra.mxu0 0
        %680 = vmatprep.subr.bf16.mxu0 0
        %681 = vmatpush1.bf16.msra.mxu0 0
        %682 = vmatprep.subr.bf16.mxu0 0
        %683 = vmatpush1.bf16.msra.mxu0 0
        %684 = vmatprep.subr.bf16.mxu0 0
        %685 = vmatpush1.bf16.msra.mxu0 0
        %686 = vmatprep.subr.bf16.mxu0 0
        %687 = vmatpush1.bf16.msra.mxu0 0
        %688 = vmatprep.subr.bf16.mxu0 0
        %689 = vmatpush1.bf16.msra.mxu0 0
        %690 = vmatprep.subr.bf16.mxu0 0
        %691 = vmatpush1.bf16.msra.mxu0 0
        %692 = vmatprep.subr.bf16.mxu0 0
        %693 = vmatpush1.bf16.msra.mxu0 0
        %694 = vmatprep.subr.bf16.mxu0 0
        %695 = vmatpush1.bf16.msra.mxu0 0
        %696 = vmatprep.subr.bf16.mxu0 0
        %697 = vmatpush1.bf16.msra.mxu0 0
        %698 = vmatprep.subr.bf16.mxu0 0
        %699 = vmatpush1.bf16.msra.mxu0 0
        %700 = vmatprep.subr.bf16.mxu0 0
        %701 = vmatpush1.bf16.msra.mxu0 0
        %702 = vmatprep.subr.bf16.mxu0 0
        %703 = vmatpush1.bf16.msra.mxu0 0
        %704 = vmatprep.mubr.bf16.mxu0 0
        %705 = vmatmul.mubr.bf16.gmra.mrb[0].mxu0 %v513
        %v706 = vpop.f32.mrb[0].mxu0
        %v707 = vadd.f32 %v658, %v706
        %v708 = vpop.f32.mrb[0].mxu0
        %v709 = vpop.f32.mrb[0].mxu0
        %v710 = vadd.f32 %v658, %v709
        %v711 = vpop.f32.mrb[0].mxu0
        %712 = vmatprep.mubr.bf16.mxu0 0
        %713 = vmatmul.mubr.bf16.gmra.mrb[0].mxu0 %v516
        %v714 = vpop.f32.mrb[0].mxu0
        %v715 = vadd.f32 %v658, %v714
        %v716 = vpop.f32.mrb[0].mxu0
        %v717 = vpop.f32.mrb[0].mxu0
        %v718 = vadd.f32 %v658, %v717
        %v719 = vpop.f32.mrb[0].mxu0
        %720 = vmatprep.mubr.bf16.mxu0 0
        %721 = vmatmul.mubr.bf16.gmra.mrb[0].mxu0 %v519
        %v722 = vpop.f32.mrb[0].mxu0
        %v723 = vadd.f32 %v658, %v722
        %v724 = vpop.f32.mrb[0].mxu0
        %v725 = vpop.f32.mrb[0].mxu0
        %v726 = vadd.f32 %v658, %v725
        %v727 = vpop.f32.mrb[0].mxu0
        %728 = vmatprep.mubr.bf16.mxu0 0
        %729 = vmatmul.mubr.bf16.gmra.mrb[0].mxu0 %v522
        %v730 = vpop.f32.mrb[0].mxu0
        %v731 = vadd.f32 %v658, %v730
        %v732 = vpop.f32.mrb[0].mxu0
        %v733 = vpop.f32.mrb[0].mxu0
        %v734 = vadd.f32 %v658, %v733
        %v735 = vpop.f32.mrb[0].mxu0
        %736 = vmatprep.mubr.bf16.mxu0 0
        %737 = vmatmul.mubr.bf16.gmra.mrb[0].mxu0 %v525
        %v738 = vpop.f32.mrb[0].mxu0
        %v739 = vadd.f32 %v658, %v738
        %v740 = vpop.f32.mrb[0].mxu0
        %v741 = vpop.f32.mrb[0].mxu0
        %v742 = vadd.f32 %v658, %v741
        %v743 = vpop.f32.mrb[0].mxu0
        %744 = vmatprep.mubr.bf16.mxu0 0
        %745 = vmatmul.mubr.bf16.gmra.mrb[0].mxu0 %v528
        %v746 = vpop.f32.mrb[0].mxu0
        %v747 = vadd.f32 %v658, %v746
        %v748 = vpop.f32.mrb[0].mxu0
        %v749 = vpop.f32.mrb[0].mxu0
        %v750 = vadd.f32 %v658, %v749
        %v751 = vpop.f32.mrb[0].mxu0
        %752 = vmatprep.mubr.bf16.mxu0 0
        %753 = vmatmul.mubr.bf16.gmra.mrb[0].mxu0 %v531
        %v754 = vpop.f32.mrb[0].mxu0
        %v755 = vadd.f32 %v658, %v754
        %v756 = vpop.f32.mrb[0].mxu0
        %v757 = vpop.f32.mrb[0].mxu0
        %v758 = vadd.f32 %v658, %v757
        %v759 = vpop.f32.mrb[0].mxu0
        %760 = vmatprep.mubr.bf16.mxu0 0
        %761 = vmatmul.mubr.bf16.gmra.mrb[0].mxu0 %v534
        %v762 = vpop.f32.mrb[0].mxu0
        %v763 = vadd.f32 %v658, %v762
        %v764 = vpop.f32.mrb[0].mxu0
        %v765 = vpop.f32.mrb[0].mxu0
        %v766 = vadd.f32 %v658, %v765
        %v767 = vpop.f32.mrb[0].mxu0
        %768 = vdwg.mxu0
        %769 = vst [vmem:[#allocation3] sm:$0xff] %v707
        %770 = vst [vmem:[#allocation3 + $0x8] sm:$0xff] %v710
        %771 = vst [vmem:[#allocation3 + $0x10] sm:$0xff] %v715
        %772 = vst [vmem:[#allocation3 + $0x18] sm:$0xff] %v718
        %773 = vst [vmem:[#allocation3 + $0x20] sm:$0xff] %v723
        %774 = vst [vmem:[#allocation3 + $0x28] sm:$0xff] %v726
        %775 = vst [vmem:[#allocation3 + $0x30] sm:$0xff] %v731
        %776 = vst [vmem:[#allocation3 + $0x38] sm:$0xff] %v734
        %777 = vst [vmem:[#allocation3 + $0x40] sm:$0xff] %v739
        %778 = vst [vmem:[#allocation3 + $0x48] sm:$0xff] %v742
        %779 = vst [vmem:[#allocation3 + $0x50] sm:$0xff] %v747
        %780 = vst [vmem:[#allocation3 + $0x58] sm:$0xff] %v750
        %781 = vst [vmem:[#allocation3 + $0x60] sm:$0xff] %v755
        %782 = vst [vmem:[#allocation3 + $0x68] sm:$0xff] %v758
        %783 = vst [vmem:[#allocation3 + $0x70] sm:$0xff] %v763
        %784 = vst [vmem:[#allocation3 + $0x78] sm:$0xff] %v766
        %v785 = vld [vmem:[%s402] sm:$0xff]
        %v786 = vld [vmem:[%s402 + $0x8] sm:$0xff]
        %v787 = vld [vmem:[%s5] sm:$0xff]
        %v788 = vld [vmem:[%s5 + $0x8] sm:$0xff]
        %v789 = vld [vmem:[%s5 + $0x10] sm:$0xff]
        %v790 = vld [vmem:[%s5 + $0x18] sm:$0xff]
        %s791 = sld [smem:[#allocation9 + %s25]]
        // While loop
        $region90: #{lstm_model_forward.2} parent=84 // loop_pre_header
          _
        $region91: #{lstm_model_forward.2} parent=84 // loop_header
          %s793 = sphi 0, %s795
          %p794 = scmp.ge.s32.totalorder %s793, %s791
        $region92: #{lstm_model_forward.2} parent=84 // loop_header_branch
          %797 = sbr.rel (%p794) target = $region96
        $region93: #{lstm_model_forward.2} parent=84 // loop_body
          %s798 = ssub.s32 %s791, 1
          %s799 = ssub.s32 %s798, %s793
          %v800 = vld [vmem:[#allocation4] sm:$0xff]
          %v801 = vld [vmem:[#allocation4 + $0x8] sm:$0xff]
          %v802 = vld [vmem:[#allocation6] sm:$0xff]
          %v803 = vld [vmem:[#allocation6 + $0x8] sm:$0xff]
          %v804 = vpack.c.bf16 %v801, %v800
          %v805 = vpack.c.bf16 %v803, %v802
          %v810 = vunpack.c.l.b16 %v787
          %v811 = vunpack.c.h.b16 %v787
          %v812 = vunpack.c.l.b16 %v788
          %v813 = vunpack.c.h.b16 %v788
          %v814 = vunpack.c.l.b16 %v789
          %v815 = vunpack.c.h.b16 %v789
          %v816 = vunpack.c.l.b16 %v790
          %v817 = vunpack.c.h.b16 %v790
          %v818 = vpack.c.b16 %v812, %v810
          %v819 = vpack.c.b16 %v813, %v811
          %v820 = vpack.c.b16 %v816, %v814
          %v821 = vpack.c.b16 %v817, %v815
          %v827 = vsel %vm407, %v804, 0
          %v830 = vsel %vm407, %v805, 0
          %832 = vmatprep.subr.bf16.mxu0 %v819
          %833 = vmatpush1.bf16.msra.mxu0 %v818
          %834 = vmatprep.subr.bf16.mxu0 %v821
          %835 = vmatpush1.bf16.msra.mxu0 %v820
          %836 = vmatprep.subr.bf16.mxu0 0
          %837 = vmatpush1.bf16.msra.mxu0 0
          %838 = vmatprep.subr.bf16.mxu0 0
          %839 = vmatpush1.bf16.msra.mxu0 0
          %840 = vmatprep.subr.bf16.mxu0 0
          %841 = vmatpush1.bf16.msra.mxu0 0
          %842 = vmatprep.subr.bf16.mxu0 0
          %843 = vmatpush1.bf16.msra.mxu0 0
          %844 = vmatprep.subr.bf16.mxu0 0
          %845 = vmatpush1.bf16.msra.mxu0 0
          %846 = vmatprep.subr.bf16.mxu0 0
          %847 = vmatpush1.bf16.msra.mxu0 0
          %848 = vmatprep.subr.bf16.mxu0 0
          %849 = vmatpush1.bf16.msra.mxu0 0
          %850 = vmatprep.subr.bf16.mxu0 0
          %851 = vmatpush1.bf16.msra.mxu0 0
          %852 = vmatprep.subr.bf16.mxu0 0
          %853 = vmatpush1.bf16.msra.mxu0 0
          %854 = vmatprep.subr.bf16.mxu0 0
          %855 = vmatpush1.bf16.msra.mxu0 0
          %856 = vmatprep.subr.bf16.mxu0 0
          %857 = vmatpush1.bf16.msra.mxu0 0
          %858 = vmatprep.subr.bf16.mxu0 0
          %859 = vmatpush1.bf16.msra.mxu0 0
          %860 = vmatprep.subr.bf16.mxu0 0
          %861 = vmatpush1.bf16.msra.mxu0 0
          %862 = vmatprep.subr.bf16.mxu0 0
          %863 = vmatpush1.bf16.msra.mxu0 0
          %864 = vmatprep.mubr.bf16.mxu0 0
          %865 = vmatmul.mubr.bf16.gmra.mrb[0].mxu0 %v827
          %v866 = vpop.f32.mrb[0].mxu0
          %v867 = vadd.f32 0.0, %v866
          %v868 = vpop.f32.mrb[0].mxu0
          %v869 = vpop.f32.mrb[0].mxu0
          %v870 = vadd.f32 0.0, %v869
          %v871 = vpop.f32.mrb[0].mxu0
          %872 = vmatprep.mubr.bf16.mxu0 0
          %873 = vmatmul.mubr.bf16.gmra.mrb[0].mxu0 %v830
          %v874 = vpop.f32.mrb[0].mxu0
          %v875 = vpop.f32.mrb[0].mxu0
          %v876 = vadd.f32 0.0, %v875
          %v877 = vpop.f32.mrb[0].mxu0
          %v878 = vpop.f32.mrb[0].mxu0
          %v879 = vadd.f32 0.0, %v878
          %880 = vdwg.mxu0
          %v881 = vld [vmem:[#allocation5] sm:$0xff]
          %v882 = vld [vmem:[#allocation5 + $0x8] sm:$0xff]
          %s883 = smul.u32 %s793, 16
          %s884 = scalar_lea.vmem [#allocation2], %s883
          %v885 = vld [vmem:[%s884] sm:$0xff]
          %v886 = vld [vmem:[%s884 + $0x8] sm:$0xff]
          %v887 = vadd.f32 %v885, %v867
          %v888 = vadd.f32 %v886, %v870
          %v889 = vxor.u32 %v887, 2147483648
          %v890 = vxor.u32 %v888, 2147483648
          %v891 = vmul.f32 %v889, 1.442695
          %v892 = vpow.pop %v891
          %v893 = vmul.f32 %v890, 1.442695
          %v894 = vpow.pop %v893
          %v895 = vadd.f32 %v892, 1.0
          %v896 = vadd.f32 %v894, 1.0
          %v897 = vrcp.pop %v895
          %v898 = vmul.f32 1.0, %v897
          %v899 = vrcp.pop %v896
          %v900 = vmul.f32 1.0, %v899
          %v901 = vtanh.pop %v887
          %v902 = vtanh.pop %v888
          %905 = vrot.lane.b32.xlu0 %v881, 32
          %v906 = vpop.permute.xlu0 %905
          %907 = vrot.lane.b32.xlu0 %v882, 32
          %v908 = vpop.permute.xlu0 %907
          %v911 = vmul.f32 %v898, %v906
          %v912 = vmul.f32 %v900, %v908
          %915 = vrot.lane.b32.xlu0 %v901, 64
          %v916 = vpop.permute.xlu0 %915
          %917 = vrot.lane.b32.xlu0 %v902, 64
          %v918 = vpop.permute.xlu0 %917
          %v921 = vmul.f32 %v898, %v916
          %v922 = vmul.f32 %v900, %v918
          %925 = vrot.lane.b32.xlu0 %v921, 32
          %v926 = vpop.permute.xlu0 %925
          %927 = vrot.lane.b32.xlu0 %v922, 32
          %v928 = vpop.permute.xlu0 %927
          %v931 = vadd.f32 %v911, %v926
          %v932 = vadd.f32 %v912, %v928
          %v933 = vtanh.pop %v931
          %v934 = vtanh.pop %v932
          %937 = vrot.lane.b32.xlu0 %v933, 64
          %v938 = vpop.permute.xlu0 %937
          %939 = vrot.lane.b32.xlu0 %v934, 64
          %v940 = vpop.permute.xlu0 %939
          %v943 = vmul.f32 %v898, %v938
          %v944 = vmul.f32 %v900, %v940
          %v945 = vstv %s793
          %vm946 = vcmp.gt.s32.totalorder %v785, %v945
          %vm947 = vcmp.gt.s32.totalorder %v786, %v945
          %v948 = vsel %vm946, 1, 0
          %v949 = vsel %vm947, 1, 0
          %950 = vset.pattern.permute.xlu0 0
          %951 = vperm.xlu0 %950, %v948
          %v952 = vpop.permute.xlu0 %951
          %953 = vset.pattern.permute.xlu0 0
          %954 = vperm.xlu0 %953, %v949
          %v955 = vpop.permute.xlu0 %954
          %vm956 = vcmp.eq.s32.totalorder %v952, 1
          %vm957 = vcmp.eq.s32.totalorder %v955, 1
          %960 = vrot.lane.b32.xlu0 %v800, 96
          %v961 = vpop.permute.xlu0 %960
          %962 = vrot.lane.b32.xlu0 %v801, 96
          %v963 = vpop.permute.xlu0 %962
          %v966 = vsel %vm956, %v943, %v961
          %v967 = vsel %vm957, %v944, %v963
          %970 = vrot.lane.b32.xlu0 %v966, 32
          %v971 = vpop.permute.xlu0 %970
          %972 = vrot.lane.b32.xlu0 %v967, 32
          %v973 = vpop.permute.xlu0 %972
          %976 = vst.msk [vmem:[#allocation4] sm:$0xff] %vm407, %v971
          %977 = vst.msk [vmem:[#allocation4 + $0x8] sm:$0xff] %vm407, %v973
          %v978 = vsel %vm956, %v931, %v906
          %v979 = vsel %vm957, %v932, %v908
          %982 = vrot.lane.b32.xlu0 %v978, 96
          %v983 = vpop.permute.xlu0 %982
          %984 = vrot.lane.b32.xlu0 %v979, 96
          %v985 = vpop.permute.xlu0 %984
          %988 = vst.msk [vmem:[#allocation5] sm:$0xff] %vm407, %v983
          %989 = vst.msk [vmem:[#allocation5 + $0x8] sm:$0xff] %vm407, %v985
          %v990 = vsel %vm956, %v943, 0.0
          %v991 = vsel %vm957, %v944, 0.0
          %v992 = vpack.c.bf16 %v991, %v990
          %v994 = vunpack.c.l.b16 %v992
          %v995 = vunpack.c.h.b16 %v992
          %v996 = vpack.c.b16 %v994, %v994
          %v997 = vpack.c.b16 %v995, %v995
          %998 = vrot.lane.b32.xlu0 %v996, 32
          %v999 = vpop.permute.xlu0 %998
          %1000 = vrot.lane.b32.xlu0 %v997, 32
          %v1001 = vpop.permute.xlu0 %1000
          %s1004 = smul.u32 %s793, 2
          %s1005 = smul.addr %s1004, 4
          %s1006 = scalar_lea.vmem %s397, %s1005 [#allocation11]
          %vm1007 = vcmask 257024
          %1008 = vst.msk [vmem:[%s1006] sm:$0xf] %vm1007, %v999
          %1009 = vst.msk [vmem:[%s1006 + $0x4] sm:$0xf] %vm1007, %v1001
          %v1010 = vld [vmem:[#allocation6] sm:$0xff]
          %v1011 = vld [vmem:[#allocation6 + $0x8] sm:$0xff]
          %v1012 = vld [vmem:[#allocation7] sm:$0xff]
          %v1013 = vld [vmem:[#allocation7 + $0x8] sm:$0xff]
          %s1014 = smul.u32 %s799, 16
          %s1015 = scalar_lea.vmem [#allocation3], %s1014
          %v1016 = vld [vmem:[%s1015] sm:$0xff]
          %v1017 = vld [vmem:[%s1015 + $0x8] sm:$0xff]
          %v1018 = vadd.f32 %v1016, %v876
          %v1019 = vadd.f32 %v1017, %v879
          %v1020 = vxor.u32 %v1018, 2147483648
          %v1021 = vxor.u32 %v1019, 2147483648
          %v1022 = vmul.f32 %v1020, 1.442695
          %v1023 = vpow.pop %v1022
          %v1024 = vmul.f32 %v1021, 1.442695
          %v1025 = vpow.pop %v1024
          %v1026 = vadd.f32 %v1023, 1.0
          %v1027 = vadd.f32 %v1025, 1.0
          %v1028 = vrcp.pop %v1026
          %v1029 = vmul.f32 1.0, %v1028
          %v1030 = vrcp.pop %v1027
          %v1031 = vmul.f32 1.0, %v1030
          %v1032 = vtanh.pop %v1018
          %v1033 = vtanh.pop %v1019
          %1036 = vrot.lane.b32.xlu0 %v1012, 32
          %v1037 = vpop.permute.xlu0 %1036
          %1038 = vrot.lane.b32.xlu0 %v1013, 32
          %v1039 = vpop.permute.xlu0 %1038
          %v1042 = vmul.f32 %v1029, %v1037
          %v1043 = vmul.f32 %v1031, %v1039
          %1046 = vrot.lane.b32.xlu0 %v1032, 64
          %v1047 = vpop.permute.xlu0 %1046
          %1048 = vrot.lane.b32.xlu0 %v1033, 64
          %v1049 = vpop.permute.xlu0 %1048
          %v1052 = vmul.f32 %v1029, %v1047
          %v1053 = vmul.f32 %v1031, %v1049
          %1056 = vrot.lane.b32.xlu0 %v1052, 32
          %v1057 = vpop.permute.xlu0 %1056
          %1058 = vrot.lane.b32.xlu0 %v1053, 32
          %v1059 = vpop.permute.xlu0 %1058
          %v1062 = vadd.f32 %v1042, %v1057
          %v1063 = vadd.f32 %v1043, %v1059
          %v1064 = vtanh.pop %v1062
          %v1065 = vtanh.pop %v1063
          %1068 = vrot.lane.b32.xlu0 %v1064, 64
          %v1069 = vpop.permute.xlu0 %1068
          %1070 = vrot.lane.b32.xlu0 %v1065, 64
          %v1071 = vpop.permute.xlu0 %1070
          %v1074 = vmul.f32 %v1029, %v1069
          %v1075 = vmul.f32 %v1031, %v1071
          %v1076 = vstv %s799
          %vm1077 = vcmp.gt.s32.totalorder %v785, %v1076
          %vm1078 = vcmp.gt.s32.totalorder %v786, %v1076
          %v1079 = vsel %vm1077, 1, 0
          %v1080 = vsel %vm1078, 1, 0
          %1081 = vset.pattern.permute.xlu0 0
          %1082 = vperm.xlu0 %1081, %v1079
          %v1083 = vpop.permute.xlu0 %1082
          %1084 = vset.pattern.permute.xlu0 0
          %1085 = vperm.xlu0 %1084, %v1080
          %v1086 = vpop.permute.xlu0 %1085
          %vm1087 = vcmp.eq.s32.totalorder %v1083, 1
          %vm1088 = vcmp.eq.s32.totalorder %v1086, 1
          %1091 = vrot.lane.b32.xlu0 %v1010, 96
          %v1092 = vpop.permute.xlu0 %1091
          %1093 = vrot.lane.b32.xlu0 %v1011, 96
          %v1094 = vpop.permute.xlu0 %1093
          %v1097 = vsel %vm1087, %v1074, %v1092
          %v1098 = vsel %vm1088, %v1075, %v1094
          %1101 = vrot.lane.b32.xlu0 %v1097, 32
          %v1102 = vpop.permute.xlu0 %1101
          %1103 = vrot.lane.b32.xlu0 %v1098, 32
          %v1104 = vpop.permute.xlu0 %1103
          %1107 = vst.msk [vmem:[#allocation6] sm:$0xff] %vm407, %v1102
          %1108 = vst.msk [vmem:[#allocation6 + $0x8] sm:$0xff] %vm407, %v1104
          %v1109 = vsel %vm1087, %v1062, %v1037
          %v1110 = vsel %vm1088, %v1063, %v1039
          %1113 = vrot.lane.b32.xlu0 %v1109, 96
          %v1114 = vpop.permute.xlu0 %1113
          %1115 = vrot.lane.b32.xlu0 %v1110, 96
          %v1116 = vpop.permute.xlu0 %1115
          %1119 = vst.msk [vmem:[#allocation7] sm:$0xff] %vm407, %v1114
          %1120 = vst.msk [vmem:[#allocation7 + $0x8] sm:$0xff] %vm407, %v1116
          %v1121 = vsel %vm1087, %v1074, 0.0
          %v1122 = vsel %vm1088, %v1075, 0.0
          %v1123 = vpack.c.bf16 %v1122, %v1121
          %v1125 = vunpack.c.l.b16 %v1123
          %v1126 = vunpack.c.h.b16 %v1123
          %v1127 = vpack.c.b16 %v1125, %v1125
          %v1128 = vpack.c.b16 %v1126, %v1126
          %1129 = vrot.lane.b32.xlu0 %v1127, 64
          %v1130 = vpop.permute.xlu0 %1129
          %1131 = vrot.lane.b32.xlu0 %v1128, 64
          %v1132 = vpop.permute.xlu0 %1131
          %s1135 = smul.u32 %s799, 2
          %s1136 = smul.addr %s1135, 4
          %s1137 = scalar_lea.vmem %s397, %s1136 [#allocation11]
          %vm1138 = vcmask 519424
          %1139 = vst.msk [vmem:[%s1137] sm:$0xf] %vm1138, %v1130
          %1140 = vst.msk [vmem:[%s1137 + $0x4] sm:$0xf] %vm1138, %v1132
        $region94: #{lstm_model_forward.2} parent=84 // loop_footer
          %s795 = sadd.s32 %s793, 1
        $region95: #{lstm_model_forward.2} parent=84 // loop_footer_branch
          %792 = sbr.rel target = $region91
        $region96: #{lstm_model_forward.2} parent=84 // loop_exit
          _
        %s1141 = sand.u32 %s190, 1
        %s1142 = sand.u32 %s190, 1
        %s1143 = smul.addr %s1142, 64
        %s1144 = scalar_lea.vmem [#allocation11], %s1143
        // Predicated region
        $region97: #{lstm_model_forward.2} parent=84 // pred_check
          %p1145 = pneg %p200
        $region98: #{lstm_model_forward.2} parent=84 // pred_check_branch
          %1147 = sbr.rel (%p1145) target = $region100
        $region99: #{lstm_model_forward.2} parent=84 // pred_region
          %s1148 = smul.u32 2, %s25
          %s1149 = smul.addr %s1148, 4
          %s1150 = scalar_lea.vmem %s8, %s1149
          // Predicated region
          $region101: #{lstm_model_forward.2} parent=99 // pred_check
            _
          $region102: #{lstm_model_forward.2} parent=99 // pred_check_branch
            %1152 = sbr.rel (0) target = $region104
          $region103: #{lstm_model_forward.2} parent=99 // pred_region
            // Predicated region
            $region105: #{lstm_model_forward.2} parent=103 // pred_check
              _
            $region106: #{lstm_model_forward.2} parent=103 // pred_check_branch
              %1154 = sbr.rel target = $region108
            $region107: #{lstm_model_forward.2} parent=103 // pred_region
              // Predicated region
              $region120: #{lstm_model_forward.2} parent=107 // pred_check
                _
              $region121: #{lstm_model_forward.2} parent=107 // pred_check_branch
                %1199 = sbr.rel (0) target = $region123
              $region122: #{lstm_model_forward.2} parent=107 // pred_region
                loop: start=0, step=1, limit=1
                $region124: #{lstm_model_forward.2} parent=122 // loop_pre_header
                  _
                $region125: #{lstm_model_forward.2} parent=122 // loop_header
                  %s1201 = sphi 0, %s1205
                  %p1202 = scmp.ge.s32.totalorder %s1201, 1
                  %s1206 = sphi %s1144, %s1144
                  %s1207 = sphi %s1150, %s1150
                $region126: #{lstm_model_forward.2} parent=122 // loop_header_branch
                  %1204 = sbr.rel (%p1202) target = $region130
                $region127: #{lstm_model_forward.2} parent=122 // loop_body
                  _
                $region128: #{lstm_model_forward.2} parent=122 // loop_footer
                  %s1205 = sadd.s32 1, %s1201
                $region129: #{lstm_model_forward.2} parent=122 // loop_footer_branch
                  %1200 = sbr.rel target = $region125
                $region130: #{lstm_model_forward.2} parent=122 // loop_exit
                  _
                loop: start=0, step=1, limit=1
                $region131: #{lstm_model_forward.2} parent=122 // loop_pre_header
                  _
                $region132: #{lstm_model_forward.2} parent=122 // loop_header
                  %s1210 = sphi 0, %s1214
                  %p1211 = scmp.ge.s32.totalorder %s1210, 1
                  %s1215 = sphi %s1144, %s1144
                  %s1216 = sphi %s1150, %s1150
                $region133: #{lstm_model_forward.2} parent=122 // loop_header_branch
                  %1213 = sbr.rel (%p1211) target = $region137
                $region134: #{lstm_model_forward.2} parent=122 // loop_body
                  %v1217 = vld [vmem:[%s1215] sm:$0xf]
                  %1218 = vst [vmem:[%s1216] sm:$0xf] %v1217
                  %v1219 = vld [vmem:[%s1215 + $0x4] sm:$0xf]
                  %1220 = vst [vmem:[%s1216 + $0x4] sm:$0xf] %v1219
                  %v1221 = vld [vmem:[%s1215 + $0x8] sm:$0xf]
                  %1222 = vst [vmem:[%s1216 + $0x10] sm:$0xf] %v1221
                  %v1223 = vld [vmem:[%s1215 + $0xc] sm:$0xf]
                  %1224 = vst [vmem:[%s1216 + $0x14] sm:$0xf] %v1223
                  %v1225 = vld [vmem:[%s1215 + $0x10] sm:$0xf]
                  %1226 = vst [vmem:[%s1216 + $0x20] sm:$0xf] %v1225
                  %v1227 = vld [vmem:[%s1215 + $0x14] sm:$0xf]
                  %1228 = vst [vmem:[%s1216 + $0x24] sm:$0xf] %v1227
                  %v1229 = vld [vmem:[%s1215 + $0x18] sm:$0xf]
                  %1230 = vst [vmem:[%s1216 + $0x30] sm:$0xf] %v1229
                  %v1231 = vld [vmem:[%s1215 + $0x1c] sm:$0xf]
                  %1232 = vst [vmem:[%s1216 + $0x34] sm:$0xf] %v1231
                  %v1233 = vld [vmem:[%s1215 + $0x20] sm:$0xf]
                  %1234 = vst [vmem:[%s1216 + $0x40] sm:$0xf] %v1233
                  %v1235 = vld [vmem:[%s1215 + $0x24] sm:$0xf]
                  %1236 = vst [vmem:[%s1216 + $0x44] sm:$0xf] %v1235
                  %v1237 = vld [vmem:[%s1215 + $0x28] sm:$0xf]
                  %1238 = vst [vmem:[%s1216 + $0x50] sm:$0xf] %v1237
                  %v1239 = vld [vmem:[%s1215 + $0x2c] sm:$0xf]
                  %1240 = vst [vmem:[%s1216 + $0x54] sm:$0xf] %v1239
                  %v1241 = vld [vmem:[%s1215 + $0x30] sm:$0xf]
                  %1242 = vst [vmem:[%s1216 + $0x60] sm:$0xf] %v1241
                  %v1243 = vld [vmem:[%s1215 + $0x34] sm:$0xf]
                  %1244 = vst [vmem:[%s1216 + $0x64] sm:$0xf] %v1243
                  %v1245 = vld [vmem:[%s1215 + $0x38] sm:$0xf]
                  %1246 = vst [vmem:[%s1216 + $0x70] sm:$0xf] %v1245
                  %v1247 = vld [vmem:[%s1215 + $0x3c] sm:$0xf]
                  %1248 = vst [vmem:[%s1216 + $0x74] sm:$0xf] %v1247
                $region135: #{lstm_model_forward.2} parent=122 // loop_footer
                  %s1214 = sadd.s32 1, %s1210
                $region136: #{lstm_model_forward.2} parent=122 // loop_footer_branch
                  %1209 = sbr.rel target = $region132
                $region137: #{lstm_model_forward.2} parent=122 // loop_exit
                  _
              $region123: #{lstm_model_forward.2} parent=107 // pred_fallthru
                _
            $region108: #{lstm_model_forward.2} parent=103 // pred_fallthru
              _
            // Predicated region
            $region109: #{lstm_model_forward.2} parent=103 // pred_check
              _
            $region110: #{lstm_model_forward.2} parent=103 // pred_check_branch
              %1156 = sbr.rel (0) target = $region112
            $region111: #{lstm_model_forward.2} parent=103 // pred_region
              loop: start=0, step=1, limit=1
              $region113: #{lstm_model_forward.2} parent=111 // loop_pre_header
                _
              $region114: #{lstm_model_forward.2} parent=111 // loop_header
                %s1159 = sphi 0, %s1163
                %p1160 = scmp.ge.s32.totalorder %s1159, 1
                %s1164 = sphi %s1144, %s1144
                %s1165 = sphi %s1150, %s1150
              $region115: #{lstm_model_forward.2} parent=111 // loop_header_branch
                %1162 = sbr.rel (%p1160) target = $region119
              $region116: #{lstm_model_forward.2} parent=111 // loop_body
                %v1166 = vld [vmem:[%s1164] sm:$0xf]
                %1167 = vst [vmem:[%s1165] sm:$0xf] %v1166
                %v1168 = vld [vmem:[%s1164 + $0x4] sm:$0xf]
                %1169 = vst [vmem:[%s1165 + $0x4] sm:$0xf] %v1168
                %v1170 = vld [vmem:[%s1164 + $0x8] sm:$0xf]
                %1171 = vst [vmem:[%s1165 + $0x10] sm:$0xf] %v1170
                %v1172 = vld [vmem:[%s1164 + $0xc] sm:$0xf]
                %1173 = vst [vmem:[%s1165 + $0x14] sm:$0xf] %v1172
                %v1174 = vld [vmem:[%s1164 + $0x10] sm:$0xf]
                %1175 = vst [vmem:[%s1165 + $0x20] sm:$0xf] %v1174
                %v1176 = vld [vmem:[%s1164 + $0x14] sm:$0xf]
                %1177 = vst [vmem:[%s1165 + $0x24] sm:$0xf] %v1176
                %v1178 = vld [vmem:[%s1164 + $0x18] sm:$0xf]
                %1179 = vst [vmem:[%s1165 + $0x30] sm:$0xf] %v1178
                %v1180 = vld [vmem:[%s1164 + $0x1c] sm:$0xf]
                %1181 = vst [vmem:[%s1165 + $0x34] sm:$0xf] %v1180
                %v1182 = vld [vmem:[%s1164 + $0x20] sm:$0xf]
                %1183 = vst [vmem:[%s1165 + $0x40] sm:$0xf] %v1182
                %v1184 = vld [vmem:[%s1164 + $0x24] sm:$0xf]
                %1185 = vst [vmem:[%s1165 + $0x44] sm:$0xf] %v1184
                %v1186 = vld [vmem:[%s1164 + $0x28] sm:$0xf]
                %1187 = vst [vmem:[%s1165 + $0x50] sm:$0xf] %v1186
                %v1188 = vld [vmem:[%s1164 + $0x2c] sm:$0xf]
                %1189 = vst [vmem:[%s1165 + $0x54] sm:$0xf] %v1188
                %v1190 = vld [vmem:[%s1164 + $0x30] sm:$0xf]
                %1191 = vst [vmem:[%s1165 + $0x60] sm:$0xf] %v1190
                %v1192 = vld [vmem:[%s1164 + $0x34] sm:$0xf]
                %1193 = vst [vmem:[%s1165 + $0x64] sm:$0xf] %v1192
                %v1194 = vld [vmem:[%s1164 + $0x38] sm:$0xf]
                %1195 = vst [vmem:[%s1165 + $0x70] sm:$0xf] %v1194
                %v1196 = vld [vmem:[%s1164 + $0x3c] sm:$0xf]
                %1197 = vst [vmem:[%s1165 + $0x74] sm:$0xf] %v1196
              $region117: #{lstm_model_forward.2} parent=111 // loop_footer
                %s1163 = sadd.s32 1, %s1159
              $region118: #{lstm_model_forward.2} parent=111 // loop_footer_branch
                %1158 = sbr.rel target = $region114
              $region119: #{lstm_model_forward.2} parent=111 // loop_exit
                _
            $region112: #{lstm_model_forward.2} parent=103 // pred_fallthru
              _
          $region104: #{lstm_model_forward.2} parent=99 // pred_fallthru
            _
          %1249 = vnop
        $region100: #{lstm_model_forward.2} parent=84 // pred_fallthru
          _
      $region85: #{lstm_model_forward.2} parent=5 // pred_fallthru
        _
      %p1250 = scmp.le.s32.totalorder 2, %s20
      // Predicated region
      $region138: #{lstm_model_forward.2} parent=5 // pred_check
        %p1251 = pneg %p1250
      $region139: #{lstm_model_forward.2} parent=5 // pred_check_branch
        %1253 = sbr.rel (%p1251) target = $region141
      $region140: #{lstm_model_forward.2} parent=5 // pred_region
        %s1254 = ssub.s32 %s20, 2
        // Predicated region
        $region142: #{lstm_model_forward.2} parent=140 // pred_check
          %p1255 = pneg %p206
        $region143: #{lstm_model_forward.2} parent=140 // pred_check_branch
          %1257 = sbr.rel (%p1255) target = $region145
        $region144: #{lstm_model_forward.2} parent=140 // pred_region
          %s1258 = sand.u32 %s191, 1
          %s1259 = sand.u32 %s191, 1
          %s1260 = smul.addr %s1259, 64
          %s1261 = scalar_lea.vmem [#allocation11], %s1260
        $region145: #{lstm_model_forward.2} parent=140 // pred_fallthru
          _
      $region141: #{lstm_model_forward.2} parent=5 // pred_fallthru
        _
    $region6: #{lstm_model_forward.2} parent=1 // loop_footer
      %s24 = sadd.s32 1, %s20
    $region7: #{lstm_model_forward.2} parent=1 // loop_footer_branch
      %19 = sbr.rel target = $region3
    $region8: #{lstm_model_forward.2} parent=1 // loop_exit
      _

// kernel: lstm_model_forward.3
$region0: #{lstm_model_forward.3}
  #allocation0 [shape = 'u32[]', space=smem, size = 0x4, offset = 0x4, fixed_abs, tag = 'smem constant byte address 0x4 - core index']
  #allocation1 [shape = 'u32[144,128]{1,0:T(1,128)}', space=vmem, size = 0x12000, scoped, tag = 'internal scratch']
  #allocation2 [shape = 'f32[8,16,128]{2,1,0:T(8,128)}', space=vmem, size = 0x10000, scoped, tag = 'scratch operand']
  #allocation3 [shape = 'f32[8,16,128]{2,1,0:T(8,128)}', space=vmem, size = 0x10000, scoped, tag = 'scratch operand']
  #allocation4 [shape = 'f32[16,32]{1,0:T(8,128)}', space=vmem, size = 0x2000, scoped, tag = 'scratch operand']
  #allocation5 [shape = 'f32[16,32]{1,0:T(8,128)}', space=vmem, size = 0x2000, scoped, tag = 'scratch operand']
  #allocation6 [shape = 'f32[16,32]{1,0:T(8,128)}', space=vmem, size = 0x2000, scoped, tag = 'scratch operand']
  #allocation7 [shape = 'f32[16,32]{1,0:T(8,128)}', space=vmem, size = 0x2000, scoped, tag = 'scratch operand']
  #allocation8 [shape = 's32[1]{0}', space=sflag, size = 0x4, scoped, tag = 'scoped memory for lstm_model_forward.3']
  #allocation9 [shape = 'u8[512]{0}', space=smem, size = 0x200, scoped, tag = 'prefetched SMEM operand 0']
  %s0 = inlined_call_operand.vmem [shape: s32[2], index: 0, kind: input, shape index: {}]
  %s1 = inlined_call_operand.vmem [shape: s32[32,1], index: 1, kind: input, shape index: {}]
  %s2 = inlined_call_operand.vmem [shape: bf16[8,32,64], index: 2, kind: input, shape index: {}]
  %s3 = inlined_call_operand.vmem [shape: bf16[64,128], index: 3, kind: input, shape index: {}]
  %s4 = inlined_call_operand.vmem [shape: bf16[64,128], index: 4, kind: input, shape index: {}]
  %s5 = inlined_call_operand.vmem [shape: bf16[32,256], index: 5, kind: input, shape index: {}]
  %s6 = inlined_call_operand.vmem [shape: f32[1,128], index: 6, kind: input, shape index: {}]
  %s7 = inlined_call_operand.vmem [shape: f32[1,128], index: 7, kind: input, shape index: {}]
  %s8 = inlined_call_operand.vmem [shape: f32[64,3], index: 8, kind: input, shape index: {}]
  %s9 = inlined_call_operand.vmem [shape: f32[1,3], index: 9, kind: input, shape index: {}]
  %s10 = inlined_call_operand.vmem [shape: f32[32,3], index: 10, kind: output, shape index: {}]
  %s11 = sld [smem:[#allocation0]]
  $region117: #{lstm_model_forward.3} parent=0
    _
  %s13 = ssub.s32 1, %s11
  %s14 = scalar_select 0, %s13, %s11
  %s15 = sshll.u32 %s0, 4
  %s16 = int_to_ptr.vmem [resolvable:$true] %s15
  %18 = dma.vmem_to_smem %s16, 16, [#allocation9], [#allocation8]
  %19 = dma.done [#allocation8], 16
  %20 = sfence
  $region1: #{lstm_model_forward.3} parent=0
    #allocation10 [shape = 'u8[65536]{0}', space=vmem, size = 0x10000, scoped, tag = 'input window, operand 2']
    loop: start=0, step=1, limit=4
    $region2: #{lstm_model_forward.3} parent=1 // loop_pre_header
      _
    $region3: #{lstm_model_forward.3} parent=1 // loop_header
      %s22 = sphi 0, %s26
      %p23 = scmp.ge.s32.totalorder %s22, 4
      %s32 = sphi 0, %s34
      %s35 = sphi 0, %s32
      %s36 = sphi 0, %s35
      %s52 = sphi 0, %s36
      %s58 = sphi 0, %s60
      %s61 = sphi 0, %s58
      %s62 = sphi 0, %s61
      %s78 = sphi 0, %s62
      %s82 = sphi 0, %s82
      %s84 = sphi 0, %s82
      %s85 = sphi 0, %s84
      %s99 = sphi 0, %s85
      %s103 = sphi 0, %s103
      %s105 = sphi 0, %s103
      %s106 = sphi 0, %s105
      %s120 = sphi 0, %s106
      %s124 = sphi 0, %s124
      %s126 = sphi 0, %s124
      %s127 = sphi 0, %s126
      %s141 = sphi 0, %s127
      %s145 = sphi 0, %s145
      %s147 = sphi 0, %s145
      %s148 = sphi 0, %s147
      %s162 = sphi 0, %s148
      %s166 = sphi 0, %s166
      %s168 = sphi 0, %s166
      %s169 = sphi 0, %s168
      %s183 = sphi 0, %s169
      %s187 = sphi 0, %s187
      %s189 = sphi 0, %s187
      %s190 = sphi 0, %s189
      %s204 = sphi 0, %s190
      %s208 = sphi 0, %s208
      %s210 = sphi 0, %s208
      %s211 = sphi 0, %s210
      %s225 = sphi 0, %s211
      %s231 = sphi 0, %s233
      %s234 = sphi 0, %s231
      %s235 = sphi 0, %s234
      %s251 = sphi 0, %s235
    $region4: #{lstm_model_forward.3} parent=1 // loop_header_branch
      %25 = sbr.rel (%p23) target = $region8
    $region5: #{lstm_model_forward.3} parent=1 // loop_body
      %s27 = ssub.s32 %s22, 1
      %s28 = ssub.s32 %s22, 2
      %s29 = sadd.s32 %s22, 1
      %s30 = ssub.s32 %s22, %s29
      %p31 = scmp.eq.s32.totalorder %s30, 0
      %s33 = sadd.s32 %s32, 1
      %s34 = scalar_select %p31, %s32, %s33
      %p37 = pneg %p31
      %p38 = scmp.eq.s32.totalorder %s22, 1
      %p39 = por %p37, %p38
      %p40 = scmp.ne.s32.totalorder %s32, %s35
      %p41 = scmp.eq.s32.totalorder %s22, 0
      %p42 = por %p40, %p41
      %p43 = scmp.ne.s32.totalorder %s32, %s35
      %p44 = scmp.eq.s32.totalorder %s27, 1
      %p45 = por %p43, %p44
      %p46 = scmp.ne.s32.totalorder %s35, %s36
      %p47 = scmp.eq.s32.totalorder %s27, 0
      %p48 = por %p46, %p47
      %p49 = scmp.ne.s32.totalorder %s35, %s36
      %p50 = scmp.eq.s32.totalorder %s28, 1
      %p51 = por %p49, %p50
      %p53 = scmp.ne.s32.totalorder %s36, %s52
      %p54 = scmp.eq.s32.totalorder %s28, 0
      %p55 = por %p53, %p54
      %s56 = ssub.s32 %s22, %s29
      %p57 = scmp.eq.s32.totalorder %s56, 0
      %s59 = sadd.s32 %s58, 1
      %s60 = scalar_select %p57, %s58, %s59
      %p63 = pneg %p57
      %p64 = scmp.eq.s32.totalorder %s22, 1
      %p65 = por %p63, %p64
      %p66 = scmp.ne.s32.totalorder %s58, %s61
      %p67 = scmp.eq.s32.totalorder %s22, 0
      %p68 = por %p66, %p67
      %p69 = scmp.ne.s32.totalorder %s58, %s61
      %p70 = scmp.eq.s32.totalorder %s27, 1
      %p71 = por %p69, %p70
      %p72 = scmp.ne.s32.totalorder %s61, %s62
      %p73 = scmp.eq.s32.totalorder %s27, 0
      %p74 = por %p72, %p73
      %p75 = scmp.ne.s32.totalorder %s61, %s62
      %p76 = scmp.eq.s32.totalorder %s28, 1
      %p77 = por %p75, %p76
      %p79 = scmp.ne.s32.totalorder %s62, %s78
      %p80 = scmp.eq.s32.totalorder %s28, 0
      %p81 = por %p79, %p80
      %s83 = sadd.s32 %s82, 1
      %p86 = scmp.eq.s32.totalorder %s22, 1
      %p87 = scmp.ne.s32.totalorder %s82, %s84
      %p88 = scmp.eq.s32.totalorder %s22, 0
      %p89 = por %p87, %p88
      %p90 = scmp.ne.s32.totalorder %s82, %s84
      %p91 = scmp.eq.s32.totalorder %s27, 1
      %p92 = por %p90, %p91
      %p93 = scmp.ne.s32.totalorder %s84, %s85
      %p94 = scmp.eq.s32.totalorder %s27, 0
      %p95 = por %p93, %p94
      %p96 = scmp.ne.s32.totalorder %s84, %s85
      %p97 = scmp.eq.s32.totalorder %s28, 1
      %p98 = por %p96, %p97
      %p100 = scmp.ne.s32.totalorder %s85, %s99
      %p101 = scmp.eq.s32.totalorder %s28, 0
      %p102 = por %p100, %p101
      %s104 = sadd.s32 %s103, 1
      %p107 = scmp.eq.s32.totalorder %s22, 1
      %p108 = scmp.ne.s32.totalorder %s103, %s105
      %p109 = scmp.eq.s32.totalorder %s22, 0
      %p110 = por %p108, %p109
      %p111 = scmp.ne.s32.totalorder %s103, %s105
      %p112 = scmp.eq.s32.totalorder %s27, 1
      %p113 = por %p111, %p112
      %p114 = scmp.ne.s32.totalorder %s105, %s106
      %p115 = scmp.eq.s32.totalorder %s27, 0
      %p116 = por %p114, %p115
      %p117 = scmp.ne.s32.totalorder %s105, %s106
      %p118 = scmp.eq.s32.totalorder %s28, 1
      %p119 = por %p117, %p118
      %p121 = scmp.ne.s32.totalorder %s106, %s120
      %p122 = scmp.eq.s32.totalorder %s28, 0
      %p123 = por %p121, %p122
      %s125 = sadd.s32 %s124, 1
      %p128 = scmp.eq.s32.totalorder %s22, 1
      %p129 = scmp.ne.s32.totalorder %s124, %s126
      %p130 = scmp.eq.s32.totalorder %s22, 0
      %p131 = por %p129, %p130
      %p132 = scmp.ne.s32.totalorder %s124, %s126
      %p133 = scmp.eq.s32.totalorder %s27, 1
      %p134 = por %p132, %p133
      %p135 = scmp.ne.s32.totalorder %s126, %s127
      %p136 = scmp.eq.s32.totalorder %s27, 0
      %p137 = por %p135, %p136
      %p138 = scmp.ne.s32.totalorder %s126, %s127
      %p139 = scmp.eq.s32.totalorder %s28, 1
      %p140 = por %p138, %p139
      %p142 = scmp.ne.s32.totalorder %s127, %s141
      %p143 = scmp.eq.s32.totalorder %s28, 0
      %p144 = por %p142, %p143
      %s146 = sadd.s32 %s145, 1
      %p149 = scmp.eq.s32.totalorder %s22, 1
      %p150 = scmp.ne.s32.totalorder %s145, %s147
      %p151 = scmp.eq.s32.totalorder %s22, 0
      %p152 = por %p150, %p151
      %p153 = scmp.ne.s32.totalorder %s145, %s147
      %p154 = scmp.eq.s32.totalorder %s27, 1
      %p155 = por %p153, %p154
      %p156 = scmp.ne.s32.totalorder %s147, %s148
      %p157 = scmp.eq.s32.totalorder %s27, 0
      %p158 = por %p156, %p157
      %p159 = scmp.ne.s32.totalorder %s147, %s148
      %p160 = scmp.eq.s32.totalorder %s28, 1
      %p161 = por %p159, %p160
      %p163 = scmp.ne.s32.totalorder %s148, %s162
      %p164 = scmp.eq.s32.totalorder %s28, 0
      %p165 = por %p163, %p164
      %s167 = sadd.s32 %s166, 1
      %p170 = scmp.eq.s32.totalorder %s22, 1
      %p171 = scmp.ne.s32.totalorder %s166, %s168
      %p172 = scmp.eq.s32.totalorder %s22, 0
      %p173 = por %p171, %p172
      %p174 = scmp.ne.s32.totalorder %s166, %s168
      %p175 = scmp.eq.s32.totalorder %s27, 1
      %p176 = por %p174, %p175
      %p177 = scmp.ne.s32.totalorder %s168, %s169
      %p178 = scmp.eq.s32.totalorder %s27, 0
      %p179 = por %p177, %p178
      %p180 = scmp.ne.s32.totalorder %s168, %s169
      %p181 = scmp.eq.s32.totalorder %s28, 1
      %p182 = por %p180, %p181
      %p184 = scmp.ne.s32.totalorder %s169, %s183
      %p185 = scmp.eq.s32.totalorder %s28, 0
      %p186 = por %p184, %p185
      %s188 = sadd.s32 %s187, 1
      %p191 = scmp.eq.s32.totalorder %s22, 1
      %p192 = scmp.ne.s32.totalorder %s187, %s189
      %p193 = scmp.eq.s32.totalorder %s22, 0
      %p194 = por %p192, %p193
      %p195 = scmp.ne.s32.totalorder %s187, %s189
      %p196 = scmp.eq.s32.totalorder %s27, 1
      %p197 = por %p195, %p196
      %p198 = scmp.ne.s32.totalorder %s189, %s190
      %p199 = scmp.eq.s32.totalorder %s27, 0
      %p200 = por %p198, %p199
      %p201 = scmp.ne.s32.totalorder %s189, %s190
      %p202 = scmp.eq.s32.totalorder %s28, 1
      %p203 = por %p201, %p202
      %p205 = scmp.ne.s32.totalorder %s190, %s204
      %p206 = scmp.eq.s32.totalorder %s28, 0
      %p207 = por %p205, %p206
      %s209 = sadd.s32 %s208, 1
      %p212 = scmp.eq.s32.totalorder %s22, 1
      %p213 = scmp.ne.s32.totalorder %s208, %s210
      %p214 = scmp.eq.s32.totalorder %s22, 0
      %p215 = por %p213, %p214
      %p216 = scmp.ne.s32.totalorder %s208, %s210
      %p217 = scmp.eq.s32.totalorder %s27, 1
      %p218 = por %p216, %p217
      %p219 = scmp.ne.s32.totalorder %s210, %s211
      %p220 = scmp.eq.s32.totalorder %s27, 0
      %p221 = por %p219, %p220
      %p222 = scmp.ne.s32.totalorder %s210, %s211
      %p223 = scmp.eq.s32.totalorder %s28, 1
      %p224 = por %p222, %p223
      %p226 = scmp.ne.s32.totalorder %s211, %s225
      %p227 = scmp.eq.s32.totalorder %s28, 0
      %p228 = por %p226, %p227
      %s229 = ssub.s32 %s22, %s29
      %p230 = scmp.eq.s32.totalorder %s229, 0
      %s232 = sadd.s32 %s231, 1
      %s233 = scalar_select %p230, %s231, %s232
      %p236 = pneg %p230
      %p237 = scmp.eq.s32.totalorder %s22, 1
      %p238 = por %p236, %p237
      %p239 = scmp.ne.s32.totalorder %s231, %s234
      %p240 = scmp.eq.s32.totalorder %s22, 0
      %p241 = por %p239, %p240
      %p242 = scmp.ne.s32.totalorder %s231, %s234
      %p243 = scmp.eq.s32.totalorder %s27, 1
      %p244 = por %p242, %p243
      %p245 = scmp.ne.s32.totalorder %s234, %s235
      %p246 = scmp.eq.s32.totalorder %s27, 0
      %p247 = por %p245, %p246
      %p248 = scmp.ne.s32.totalorder %s234, %s235
      %p249 = scmp.eq.s32.totalorder %s28, 1
      %p250 = por %p248, %p249
      %p252 = scmp.ne.s32.totalorder %s235, %s251
      %p253 = scmp.eq.s32.totalorder %s28, 0
      %p254 = por %p252, %p253
      %p255 = scmp.le.s32.totalorder 1, %s22
      %p256 = scmp.lt.s32.totalorder %s22, 3
      %p257 = pnand %p255, %p256
      %p258 = pneg %p257
      // Predicated region
      $region9: #{lstm_model_forward.3} parent=5 // pred_check
        _
      $region10: #{lstm_model_forward.3} parent=5 // pred_check_branch
        %260 = sbr.rel (%p257) target = $region12
      $region11: #{lstm_model_forward.3} parent=5 // pred_region
        %s261 = ssub.s32 %s22, 1
        // Predicated region
        $region13: #{lstm_model_forward.3} parent=11 // pred_check
          %p262 = pneg %p95
        $region14: #{lstm_model_forward.3} parent=11 // pred_check_branch
          %264 = sbr.rel (%p262) target = $region16
        $region15: #{lstm_model_forward.3} parent=11 // pred_region
          _
        $region16: #{lstm_model_forward.3} parent=11 // pred_fallthru
          _
        // Predicated region
        $region17: #{lstm_model_forward.3} parent=11 // pred_check
          %p265 = pneg %p116
        $region18: #{lstm_model_forward.3} parent=11 // pred_check_branch
          %267 = sbr.rel (%p265) target = $region20
        $region19: #{lstm_model_forward.3} parent=11 // pred_region
          _
        $region20: #{lstm_model_forward.3} parent=11 // pred_fallthru
          _
        // Predicated region
        $region21: #{lstm_model_forward.3} parent=11 // pred_check
          %p268 = pneg %p137
        $region22: #{lstm_model_forward.3} parent=11 // pred_check_branch
          %270 = sbr.rel (%p268) target = $region24
        $region23: #{lstm_model_forward.3} parent=11 // pred_region
          _
        $region24: #{lstm_model_forward.3} parent=11 // pred_fallthru
          _
        // Predicated region
        $region25: #{lstm_model_forward.3} parent=11 // pred_check
          %p271 = pneg %p158
        $region26: #{lstm_model_forward.3} parent=11 // pred_check_branch
          %273 = sbr.rel (%p271) target = $region28
        $region27: #{lstm_model_forward.3} parent=11 // pred_region
          _
        $region28: #{lstm_model_forward.3} parent=11 // pred_fallthru
          _
        // Predicated region
        $region29: #{lstm_model_forward.3} parent=11 // pred_check
          %p274 = pneg %p179
        $region30: #{lstm_model_forward.3} parent=11 // pred_check_branch
          %276 = sbr.rel (%p274) target = $region32
        $region31: #{lstm_model_forward.3} parent=11 // pred_region
          _
        $region32: #{lstm_model_forward.3} parent=11 // pred_fallthru
          _
        // Predicated region
        $region33: #{lstm_model_forward.3} parent=11 // pred_check
          %p277 = pneg %p200
        $region34: #{lstm_model_forward.3} parent=11 // pred_check_branch
          %279 = sbr.rel (%p277) target = $region36
        $region35: #{lstm_model_forward.3} parent=11 // pred_region
          _
        $region36: #{lstm_model_forward.3} parent=11 // pred_fallthru
          _
        // Predicated region
        $region37: #{lstm_model_forward.3} parent=11 // pred_check
          %p280 = pneg %p221
        $region38: #{lstm_model_forward.3} parent=11 // pred_check_branch
          %282 = sbr.rel (%p280) target = $region40
        $region39: #{lstm_model_forward.3} parent=11 // pred_region
          _
        $region40: #{lstm_model_forward.3} parent=11 // pred_fallthru
          _
      $region12: #{lstm_model_forward.3} parent=5 // pred_fallthru
        _
      %p283 = scmp.lt.s32.totalorder %s22, 2
      // Predicated region
      $region41: #{lstm_model_forward.3} parent=5 // pred_check
        %p284 = pneg %p283
      $region42: #{lstm_model_forward.3} parent=5 // pred_check_branch
        %286 = sbr.rel (%p284) target = $region44
      $region43: #{lstm_model_forward.3} parent=5 // pred_region
        // Predicated region
        $region45: #{lstm_model_forward.3} parent=43 // pred_check
          %p287 = pneg %p42
        $region46: #{lstm_model_forward.3} parent=43 // pred_check_branch
          %289 = sbr.rel (%p287) target = $region48
        $region47: #{lstm_model_forward.3} parent=43 // pred_region
          %s290 = smul.u32 2, %s22
          %p291 = scmp.lt.s32.totalorder %s290, 3
          %s292 = scalar_select %p291, %s290, 3
          %s293 = smul.addr %s292, 8
          %s294 = scalar_lea.vmem %s1, %s293
          %s295 = smul.u32 2, %s22
        $region48: #{lstm_model_forward.3} parent=43 // pred_fallthru
          _
        // Predicated region
        $region49: #{lstm_model_forward.3} parent=43 // pred_check
          %p296 = pneg %p68
        $region50: #{lstm_model_forward.3} parent=43 // pred_check_branch
          %298 = sbr.rel (%p296) target = $region52
        $region51: #{lstm_model_forward.3} parent=43 // pred_region
          %s299 = sand.u32 %s58, 1
          %s300 = sand.u32 %s58, 1
          %s301 = smul.addr %s300, 64
          %s302 = scalar_lea.vmem [#allocation10], %s301
          %s303 = smul.u32 2, %s22
          %s304 = smul.addr %s303, 4
          %s305 = scalar_lea.vmem %s2, %s304
          // Predicated region
          $region53: #{lstm_model_forward.3} parent=51 // pred_check
            _
          $region54: #{lstm_model_forward.3} parent=51 // pred_check_branch
            %307 = sbr.rel (0) target = $region56
          $region55: #{lstm_model_forward.3} parent=51 // pred_region
            // Predicated region
            $region57: #{lstm_model_forward.3} parent=55 // pred_check
              _
            $region58: #{lstm_model_forward.3} parent=55 // pred_check_branch
              %309 = sbr.rel target = $region60
            $region59: #{lstm_model_forward.3} parent=55 // pred_region
              // Predicated region
              $region72: #{lstm_model_forward.3} parent=59 // pred_check
                _
              $region73: #{lstm_model_forward.3} parent=59 // pred_check_branch
                %354 = sbr.rel (0) target = $region75
              $region74: #{lstm_model_forward.3} parent=59 // pred_region
                loop: start=0, step=1, limit=1
                $region76: #{lstm_model_forward.3} parent=74 // loop_pre_header
                  _
                $region77: #{lstm_model_forward.3} parent=74 // loop_header
                  %s356 = sphi 0, %s360
                  %p357 = scmp.ge.s32.totalorder %s356, 1
                  %s361 = sphi %s305, %s305
                  %s362 = sphi %s302, %s302
                $region78: #{lstm_model_forward.3} parent=74 // loop_header_branch
                  %359 = sbr.rel (%p357) target = $region82
                $region79: #{lstm_model_forward.3} parent=74 // loop_body
                  _
                $region80: #{lstm_model_forward.3} parent=74 // loop_footer
                  %s360 = sadd.s32 1, %s356
                $region81: #{lstm_model_forward.3} parent=74 // loop_footer_branch
                  %355 = sbr.rel target = $region77
                $region82: #{lstm_model_forward.3} parent=74 // loop_exit
                  _
                loop: start=0, step=1, limit=1
                $region83: #{lstm_model_forward.3} parent=74 // loop_pre_header
                  _
                $region84: #{lstm_model_forward.3} parent=74 // loop_header
                  %s365 = sphi 0, %s369
                  %p366 = scmp.ge.s32.totalorder %s365, 1
                  %s370 = sphi %s305, %s305
                  %s371 = sphi %s302, %s302
                $region85: #{lstm_model_forward.3} parent=74 // loop_header_branch
                  %368 = sbr.rel (%p366) target = $region89
                $region86: #{lstm_model_forward.3} parent=74 // loop_body
                  %v372 = vld [vmem:[%s370] sm:$0xf]
                  %373 = vst [vmem:[%s371] sm:$0xf] %v372
                  %v374 = vld [vmem:[%s370 + $0x4] sm:$0xf]
                  %375 = vst [vmem:[%s371 + $0x4] sm:$0xf] %v374
                  %v376 = vld [vmem:[%s370 + $0x10] sm:$0xf]
                  %377 = vst [vmem:[%s371 + $0x8] sm:$0xf] %v376
                  %v378 = vld [vmem:[%s370 + $0x14] sm:$0xf]
                  %379 = vst [vmem:[%s371 + $0xc] sm:$0xf] %v378
                  %v380 = vld [vmem:[%s370 + $0x20] sm:$0xf]
                  %381 = vst [vmem:[%s371 + $0x10] sm:$0xf] %v380
                  %v382 = vld [vmem:[%s370 + $0x24] sm:$0xf]
                  %383 = vst [vmem:[%s371 + $0x14] sm:$0xf] %v382
                  %v384 = vld [vmem:[%s370 + $0x30] sm:$0xf]
                  %385 = vst [vmem:[%s371 + $0x18] sm:$0xf] %v384
                  %v386 = vld [vmem:[%s370 + $0x34] sm:$0xf]
                  %387 = vst [vmem:[%s371 + $0x1c] sm:$0xf] %v386
                  %v388 = vld [vmem:[%s370 + $0x40] sm:$0xf]
                  %389 = vst [vmem:[%s371 + $0x20] sm:$0xf] %v388
                  %v390 = vld [vmem:[%s370 + $0x44] sm:$0xf]
                  %391 = vst [vmem:[%s371 + $0x24] sm:$0xf] %v390
                  %v392 = vld [vmem:[%s370 + $0x50] sm:$0xf]
                  %393 = vst [vmem:[%s371 + $0x28] sm:$0xf] %v392
                  %v394 = vld [vmem:[%s370 + $0x54] sm:$0xf]
                  %395 = vst [vmem:[%s371 + $0x2c] sm:$0xf] %v394
                  %v396 = vld [vmem:[%s370 + $0x60] sm:$0xf]
                  %397 = vst [vmem:[%s371 + $0x30] sm:$0xf] %v396
                  %v398 = vld [vmem:[%s370 + $0x64] sm:$0xf]
                  %399 = vst [vmem:[%s371 + $0x34] sm:$0xf] %v398
                  %v400 = vld [vmem:[%s370 + $0x70] sm:$0xf]
                  %401 = vst [vmem:[%s371 + $0x38] sm:$0xf] %v400
                  %v402 = vld [vmem:[%s370 + $0x74] sm:$0xf]
                  %403 = vst [vmem:[%s371 + $0x3c] sm:$0xf] %v402
                $region87: #{lstm_model_forward.3} parent=74 // loop_footer
                  %s369 = sadd.s32 1, %s365
                $region88: #{lstm_model_forward.3} parent=74 // loop_footer_branch
                  %364 = sbr.rel target = $region84
                $region89: #{lstm_model_forward.3} parent=74 // loop_exit
                  _
              $region75: #{lstm_model_forward.3} parent=59 // pred_fallthru
                _
            $region60: #{lstm_model_forward.3} parent=55 // pred_fallthru
              _
            // Predicated region
            $region61: #{lstm_model_forward.3} parent=55 // pred_check
              _
            $region62: #{lstm_model_forward.3} parent=55 // pred_check_branch
              %311 = sbr.rel (0) target = $region64
            $region63: #{lstm_model_forward.3} parent=55 // pred_region
              loop: start=0, step=1, limit=1
              $region65: #{lstm_model_forward.3} parent=63 // loop_pre_header
                _
              $region66: #{lstm_model_forward.3} parent=63 // loop_header
                %s314 = sphi 0, %s318
                %p315 = scmp.ge.s32.totalorder %s314, 1
                %s319 = sphi %s305, %s305
                %s320 = sphi %s302, %s302
              $region67: #{lstm_model_forward.3} parent=63 // loop_header_branch
                %317 = sbr.rel (%p315) target = $region71
              $region68: #{lstm_model_forward.3} parent=63 // loop_body
                %v321 = vld [vmem:[%s319] sm:$0xf]
                %322 = vst [vmem:[%s320] sm:$0xf] %v321
                %v323 = vld [vmem:[%s319 + $0x4] sm:$0xf]
                %324 = vst [vmem:[%s320 + $0x4] sm:$0xf] %v323
                %v325 = vld [vmem:[%s319 + $0x10] sm:$0xf]
                %326 = vst [vmem:[%s320 + $0x8] sm:$0xf] %v325
                %v327 = vld [vmem:[%s319 + $0x14] sm:$0xf]
                %328 = vst [vmem:[%s320 + $0xc] sm:$0xf] %v327
                %v329 = vld [vmem:[%s319 + $0x20] sm:$0xf]
                %330 = vst [vmem:[%s320 + $0x10] sm:$0xf] %v329
                %v331 = vld [vmem:[%s319 + $0x24] sm:$0xf]
                %332 = vst [vmem:[%s320 + $0x14] sm:$0xf] %v331
                %v333 = vld [vmem:[%s319 + $0x30] sm:$0xf]
                %334 = vst [vmem:[%s320 + $0x18] sm:$0xf] %v333
                %v335 = vld [vmem:[%s319 + $0x34] sm:$0xf]
                %336 = vst [vmem:[%s320 + $0x1c] sm:$0xf] %v335
                %v337 = vld [vmem:[%s319 + $0x40] sm:$0xf]
                %338 = vst [vmem:[%s320 + $0x20] sm:$0xf] %v337
                %v339 = vld [vmem:[%s319 + $0x44] sm:$0xf]
                %340 = vst [vmem:[%s320 + $0x24] sm:$0xf] %v339
                %v341 = vld [vmem:[%s319 + $0x50] sm:$0xf]
                %342 = vst [vmem:[%s320 + $0x28] sm:$0xf] %v341
                %v343 = vld [vmem:[%s319 + $0x54] sm:$0xf]
                %344 = vst [vmem:[%s320 + $0x2c] sm:$0xf] %v343
                %v345 = vld [vmem:[%s319 + $0x60] sm:$0xf]
                %346 = vst [vmem:[%s320 + $0x30] sm:$0xf] %v345
                %v347 = vld [vmem:[%s319 + $0x64] sm:$0xf]
                %348 = vst [vmem:[%s320 + $0x34] sm:$0xf] %v347
                %v349 = vld [vmem:[%s319 + $0x70] sm:$0xf]
                %350 = vst [vmem:[%s320 + $0x38] sm:$0xf] %v349
                %v351 = vld [vmem:[%s319 + $0x74] sm:$0xf]
                %352 = vst [vmem:[%s320 + $0x3c] sm:$0xf] %v351
              $region69: #{lstm_model_forward.3} parent=63 // loop_footer
                %s318 = sadd.s32 1, %s314
              $region70: #{lstm_model_forward.3} parent=63 // loop_footer_branch
                %313 = sbr.rel target = $region66
              $region71: #{lstm_model_forward.3} parent=63 // loop_exit
                _
            $region64: #{lstm_model_forward.3} parent=55 // pred_fallthru
              _
          $region56: #{lstm_model_forward.3} parent=51 // pred_fallthru
            _
          %404 = vnop
        $region52: #{lstm_model_forward.3} parent=43 // pred_fallthru
          _
      $region44: #{lstm_model_forward.3} parent=5 // pred_fallthru
        _
      %p405 = scmp.le.s32.totalorder 1, %s22
      %p406 = scmp.lt.s32.totalorder %s22, 3
      %p407 = pnand %p405, %p406
      %p408 = pneg %p407
      // Predicated region
      $region90: #{lstm_model_forward.3} parent=5 // pred_check
        _
      $region91: #{lstm_model_forward.3} parent=5 // pred_check_branch
        %410 = sbr.rel (%p407) target = $region93
      $region92: #{lstm_model_forward.3} parent=5 // pred_region
        %s411 = ssub.s32 %s22, 1
        %s412 = sand.u32 %s61, 1
        %s413 = sand.u32 %s61, 1
        %s414 = smul.addr %s413, 64
        %s415 = scalar_lea.vmem [#allocation10], %s414
        // Predicated region
        $region94: #{lstm_model_forward.3} parent=92 // pred_check
          %p416 = pneg %p74
        $region95: #{lstm_model_forward.3} parent=92 // pred_check_branch
          %418 = sbr.rel (%p416) target = $region97
        $region96: #{lstm_model_forward.3} parent=92 // pred_region
          _
        $region97: #{lstm_model_forward.3} parent=92 // pred_fallthru
          _
        %s419 = smul.u32 2, %s27
        %p420 = scmp.lt.s32.totalorder %s419, 3
        %s421 = scalar_select %p420, %s419, 3
        %s422 = smul.addr %s421, 8
        %s423 = scalar_lea.vmem %s1, %s422
        %p424 = pneg %p48
        %p425 = pneg %p45
        %s426 = sand.u32 %s61, 1
        %s427 = sand.u32 %s61, 1
        %s428 = smul.addr %s427, 64
        %s429 = scalar_lea.vmem [#allocation10], %s428
        %p430 = pneg %p74
        %p431 = pneg %p71
        %p432 = pneg %p95
        %p433 = pneg %p92
        %p434 = pneg %p116
        %p435 = pneg %p113
        %p436 = pneg %p137
        %p437 = pneg %p134
        %p438 = pneg %p158
        %p439 = pneg %p155
        %p440 = pneg %p179
        %p441 = pneg %p176
        %p442 = pneg %p200
        %p443 = pneg %p197
        %p444 = pneg %p221
        %p445 = pneg %p218
        %p446 = pneg %p247
        %p447 = pneg %p244
        %s448 = smul.u32 2, %s27
        %p449 = scmp.lt.s32.totalorder %s448, 3
        %s450 = scalar_select %p449, %s448, 3
        %s451 = smul.addr %s450, 8
        %s452 = scalar_lea.vmem %s10, %s451
        %s453 = smul.u32 2, %s27
        %p454 = scmp.lt.s32.totalorder %s453, 3
        %s455 = scalar_select %p454, %s453, 3
        %s456 = smul.addr %s455, 8
        %s457 = scalar_lea.vmem %s1, %s456
        %s458 = smul.u32 2, %s27
        %s459 = smul.u32 2, %s27
        %s460 = smul.u32 2, %s27
        %p461 = scmp.lt.s32.totalorder %s460, 3
        %s462 = scalar_select %p461, %s460, 3
        %s463 = smul.addr %s462, 8
        %s464 = scalar_lea.vmem %s10, %s463
        %s465 = smul.u32 2, %s27
        %vm467 = vcmask 261120
        %468 = vst.msk [vmem:[#allocation4] sm:$0xff] %vm467, 0.0
        %469 = vst.msk [vmem:[#allocation4 + $0x8] sm:$0xff] %vm467, 0.0
        %470 = vst.msk [vmem:[#allocation5] sm:$0xff] %vm467, 0.0
        %471 = vst.msk [vmem:[#allocation5 + $0x8] sm:$0xff] %vm467, 0.0
        %472 = vst.msk [vmem:[#allocation6] sm:$0xff] %vm467, 0.0
        %473 = vst.msk [vmem:[#allocation6 + $0x8] sm:$0xff] %vm467, 0.0
        %474 = vst.msk [vmem:[#allocation7] sm:$0xff] %vm467, 0.0
        %475 = vst.msk [vmem:[#allocation7 + $0x8] sm:$0xff] %vm467, 0.0
        %v476 = vld [vmem:[%s415] sm:$0xf]
        %v477 = vld [vmem:[%s415 + $0x4] sm:$0xf]
        %v478 = vld [vmem:[%s415 + $0x8] sm:$0xf]
        %v479 = vld [vmem:[%s415 + $0xc] sm:$0xf]
        %v480 = vld [vmem:[%s415 + $0x10] sm:$0xf]
        %v481 = vld [vmem:[%s415 + $0x14] sm:$0xf]
        %v482 = vld [vmem:[%s415 + $0x18] sm:$0xf]
        %v483 = vld [vmem:[%s415 + $0x1c] sm:$0xf]
        %v484 = vld [vmem:[%s415 + $0x20] sm:$0xf]
        %v485 = vld [vmem:[%s415 + $0x24] sm:$0xf]
        %v486 = vld [vmem:[%s415 + $0x28] sm:$0xf]
        %v487 = vld [vmem:[%s415 + $0x2c] sm:$0xf]
        %v488 = vld [vmem:[%s415 + $0x30] sm:$0xf]
        %v489 = vld [vmem:[%s415 + $0x34] sm:$0xf]
        %v490 = vld [vmem:[%s415 + $0x38] sm:$0xf]
        %v491 = vld [vmem:[%s415 + $0x3c] sm:$0xf]
        %v492 = vld [vmem:[%s3] sm:$0xf]
        %v493 = vld [vmem:[%s3 + $0x4] sm:$0xf]
        %v494 = vld [vmem:[%s3 + $0x8] sm:$0xf]
        %v495 = vld [vmem:[%s3 + $0xc] sm:$0xf]
        %v496 = vld [vmem:[%s3 + $0x10] sm:$0xf]
        %v497 = vld [vmem:[%s3 + $0x14] sm:$0xf]
        %v498 = vld [vmem:[%s3 + $0x18] sm:$0xf]
        %v499 = vld [vmem:[%s3 + $0x1c] sm:$0xf]
        %v500 = vld [vmem:[%s6] sm:$0x1]
        %v502 = vlaneseq
        %v503 = vshrl.u32 %v502, 7
        %v504 = vsub.s32 0, %v503
        %v505 = vrot.slane %v500, %v504
        %v523 = vunpack.c.l.b16 %v476
        %v524 = vunpack.c.l.b16 %v477
        %v525 = vunpack.c.l.b16 %v478
        %v526 = vunpack.c.l.b16 %v479
        %v527 = vunpack.c.l.b16 %v480
        %v528 = vunpack.c.l.b16 %v481
        %v529 = vunpack.c.l.b16 %v482
        %v530 = vunpack.c.l.b16 %v483
        %v531 = vunpack.c.l.b16 %v484
        %v532 = vunpack.c.l.b16 %v485
        %v533 = vunpack.c.l.b16 %v486
        %v534 = vunpack.c.l.b16 %v487
        %v535 = vunpack.c.l.b16 %v488
        %v536 = vunpack.c.l.b16 %v489
        %v537 = vunpack.c.l.b16 %v490
        %v538 = vunpack.c.l.b16 %v491
        %v539 = vpack.c.b16 %v524, %v523
        %v540 = vpack.c.b16 %v526, %v525
        %v541 = vpack.c.b16 %v528, %v527
        %v542 = vpack.c.b16 %v530, %v529
        %v543 = vpack.c.b16 %v532, %v531
        %v544 = vpack.c.b16 %v534, %v533
        %v545 = vpack.c.b16 %v536, %v535
        %v546 = vpack.c.b16 %v538, %v537
        %v555 = vunpack.c.l.b16 %v492
        %v556 = vunpack.c.l.b16 %v493
        %v557 = vunpack.c.l.b16 %v494
        %v558 = vunpack.c.l.b16 %v495
        %v559 = vunpack.c.l.b16 %v496
        %v560 = vunpack.c.l.b16 %v497
        %v561 = vunpack.c.l.b16 %v498
        %v562 = vunpack.c.l.b16 %v499
        %v563 = vpack.c.b16 %v556, %v555
        %v564 = vpack.c.b16 %v558, %v557
        %v565 = vpack.c.b16 %v560, %v559
        %v566 = vpack.c.b16 %v562, %v561
        %vm571 = vcmask 523264
        %v573 = vsel %vm571, %v539, 0
        %v576 = vsel %vm571, %v540, 0
        %v579 = vsel %vm571, %v541, 0
        %v582 = vsel %vm571, %v542, 0
        %v585 = vsel %vm571, %v543, 0
        %v588 = vsel %vm571, %v544, 0
        %v591 = vsel %vm571, %v545, 0
        %v594 = vsel %vm571, %v546, 0
        %596 = vmatprep.subr.bf16.mxu0 0
        %597 = vmatpush1.bf16.msra.mxu0 %v563
        %598 = vmatprep.subr.bf16.mxu0 0
        %599 = vmatpush1.bf16.msra.mxu0 %v564
        %600 = vmatprep.subr.bf16.mxu0 0
        %601 = vmatpush1.bf16.msra.mxu0 %v565
        %602 = vmatprep.subr.bf16.mxu0 0
        %603 = vmatpush1.bf16.msra.mxu0 %v566
        %604 = vmatprep.subr.bf16.mxu0 0
        %605 = vmatpush1.bf16.msra.mxu0 0
        %606 = vmatprep.subr.bf16.mxu0 0
        %607 = vmatpush1.bf16.msra.mxu0 0
        %608 = vmatprep.subr.bf16.mxu0 0
        %609 = vmatpush1.bf16.msra.mxu0 0
        %610 = vmatprep.subr.bf16.mxu0 0
        %611 = vmatpush1.bf16.msra.mxu0 0
        %612 = vmatprep.subr.bf16.mxu0 0
        %613 = vmatpush1.bf16.msra.mxu0 0
        %614 = vmatprep.subr.bf16.mxu0 0
        %615 = vmatpush1.bf16.msra.mxu0 0
        %616 = vmatprep.subr.bf16.mxu0 0
        %617 = vmatpush1.bf16.msra.mxu0 0
        %618 = vmatprep.subr.bf16.mxu0 0
        %619 = vmatpush1.bf16.msra.mxu0 0
        %620 = vmatprep.subr.bf16.mxu0 0
        %621 = vmatpush1.bf16.msra.mxu0 0
        %622 = vmatprep.subr.bf16.mxu0 0
        %623 = vmatpush1.bf16.msra.mxu0 0
        %624 = vmatprep.subr.bf16.mxu0 0
        %625 = vmatpush1.bf16.msra.mxu0 0
        %626 = vmatprep.subr.bf16.mxu0 0
        %627 = vmatpush1.bf16.msra.mxu0 0
        %628 = vmatprep.mubr.bf16.mxu0 0
        %629 = vmatmul.mubr.bf16.gmra.mrb[0].mxu0 %v573
        %v630 = vpop.f32.mrb[0].mxu0
        %v631 = vadd.f32 %v505, %v630
        %v632 = vpop.f32.mrb[0].mxu0
        %v633 = vpop.f32.mrb[0].mxu0
        %v634 = vadd.f32 %v505, %v633
        %v635 = vpop.f32.mrb[0].mxu0
        %636 = vmatprep.mubr.bf16.mxu0 0
        %637 = vmatmul.mubr.bf16.gmra.mrb[0].mxu0 %v576
        %v638 = vpop.f32.mrb[0].mxu0
        %v639 = vadd.f32 %v505, %v638
        %v640 = vpop.f32.mrb[0].mxu0
        %v641 = vpop.f32.mrb[0].mxu0
        %v642 = vadd.f32 %v505, %v641
        %v643 = vpop.f32.mrb[0].mxu0
        %644 = vmatprep.mubr.bf16.mxu0 0
        %645 = vmatmul.mubr.bf16.gmra.mrb[0].mxu0 %v579
        %v646 = vpop.f32.mrb[0].mxu0
        %v647 = vadd.f32 %v505, %v646
        %v648 = vpop.f32.mrb[0].mxu0
        %v649 = vpop.f32.mrb[0].mxu0
        %v650 = vadd.f32 %v505, %v649
        %v651 = vpop.f32.mrb[0].mxu0
        %652 = vmatprep.mubr.bf16.mxu0 0
        %653 = vmatmul.mubr.bf16.gmra.mrb[0].mxu0 %v582
        %v654 = vpop.f32.mrb[0].mxu0
        %v655 = vadd.f32 %v505, %v654
        %v656 = vpop.f32.mrb[0].mxu0
        %v657 = vpop.f32.mrb[0].mxu0
        %v658 = vadd.f32 %v505, %v657
        %v659 = vpop.f32.mrb[0].mxu0
        %660 = vmatprep.mubr.bf16.mxu0 0
        %661 = vmatmul.mubr.bf16.gmra.mrb[0].mxu0 %v585
        %v662 = vpop.f32.mrb[0].mxu0
        %v663 = vadd.f32 %v505, %v662
        %v664 = vpop.f32.mrb[0].mxu0
        %v665 = vpop.f32.mrb[0].mxu0
        %v666 = vadd.f32 %v505, %v665
        %v667 = vpop.f32.mrb[0].mxu0
        %668 = vmatprep.mubr.bf16.mxu0 0
        %669 = vmatmul.mubr.bf16.gmra.mrb[0].mxu0 %v588
        %v670 = vpop.f32.mrb[0].mxu0
        %v671 = vadd.f32 %v505, %v670
        %v672 = vpop.f32.mrb[0].mxu0
        %v673 = vpop.f32.mrb[0].mxu0
        %v674 = vadd.f32 %v505, %v673
        %v675 = vpop.f32.mrb[0].mxu0
        %676 = vmatprep.mubr.bf16.mxu0 0
        %677 = vmatmul.mubr.bf16.gmra.mrb[0].mxu0 %v591
        %v678 = vpop.f32.mrb[0].mxu0
        %v679 = vadd.f32 %v505, %v678
        %v680 = vpop.f32.mrb[0].mxu0
        %v681 = vpop.f32.mrb[0].mxu0
        %v682 = vadd.f32 %v505, %v681
        %v683 = vpop.f32.mrb[0].mxu0
        %684 = vmatprep.mubr.bf16.mxu0 0
        %685 = vmatmul.mubr.bf16.gmra.mrb[0].mxu0 %v594
        %v686 = vpop.f32.mrb[0].mxu0
        %v687 = vadd.f32 %v505, %v686
        %v688 = vpop.f32.mrb[0].mxu0
        %v689 = vpop.f32.mrb[0].mxu0
        %v690 = vadd.f32 %v505, %v689
        %v691 = vpop.f32.mrb[0].mxu0
        %692 = vdwg.mxu0
        %693 = vst [vmem:[#allocation2] sm:$0xff] %v631
        %694 = vst [vmem:[#allocation2 + $0x8] sm:$0xff] %v634
        %695 = vst [vmem:[#allocation2 + $0x10] sm:$0xff] %v639
        %696 = vst [vmem:[#allocation2 + $0x18] sm:$0xff] %v642
        %697 = vst [vmem:[#allocation2 + $0x20] sm:$0xff] %v647
        %698 = vst [vmem:[#allocation2 + $0x28] sm:$0xff] %v650
        %699 = vst [vmem:[#allocation2 + $0x30] sm:$0xff] %v655
        %700 = vst [vmem:[#allocation2 + $0x38] sm:$0xff] %v658
        %701 = vst [vmem:[#allocation2 + $0x40] sm:$0xff] %v663
        %702 = vst [vmem:[#allocation2 + $0x48] sm:$0xff] %v666
        %703 = vst [vmem:[#allocation2 + $0x50] sm:$0xff] %v671
        %704 = vst [vmem:[#allocation2 + $0x58] sm:$0xff] %v674
        %705 = vst [vmem:[#allocation2 + $0x60] sm:$0xff] %v679
        %706 = vst [vmem:[#allocation2 + $0x68] sm:$0xff] %v682
        %707 = vst [vmem:[#allocation2 + $0x70] sm:$0xff] %v687
        %708 = vst [vmem:[#allocation2 + $0x78] sm:$0xff] %v690
        %v709 = vld [vmem:[%s4] sm:$0xf]
        %v710 = vld [vmem:[%s4 + $0x4] sm:$0xf]
        %v711 = vld [vmem:[%s4 + $0x8] sm:$0xf]
        %v712 = vld [vmem:[%s4 + $0xc] sm:$0xf]
        %v713 = vld [vmem:[%s4 + $0x10] sm:$0xf]
        %v714 = vld [vmem:[%s4 + $0x14] sm:$0xf]
        %v715 = vld [vmem:[%s4 + $0x18] sm:$0xf]
        %v716 = vld [vmem:[%s4 + $0x1c] sm:$0xf]
        %v717 = vld [vmem:[%s7] sm:$0x1]
        %v719 = vlaneseq
        %v720 = vshrl.u32 %v719, 7
        %v721 = vsub.s32 0, %v720
        %v722 = vrot.slane %v717, %v721
        %v732 = vunpack.c.l.b16 %v709
        %v733 = vunpack.c.l.b16 %v710
        %v734 = vunpack.c.l.b16 %v711
        %v735 = vunpack.c.l.b16 %v712
        %v736 = vunpack.c.l.b16 %v713
        %v737 = vunpack.c.l.b16 %v714
        %v738 = vunpack.c.l.b16 %v715
        %v739 = vunpack.c.l.b16 %v716
        %v740 = vpack.c.b16 %v733, %v732
        %v741 = vpack.c.b16 %v735, %v734
        %v742 = vpack.c.b16 %v737, %v736
        %v743 = vpack.c.b16 %v739, %v738
        %748 = vmatprep.subr.bf16.mxu0 0
        %749 = vmatpush1.bf16.msra.mxu0 %v740
        %750 = vmatprep.subr.bf16.mxu0 0
        %751 = vmatpush1.bf16.msra.mxu0 %v741
        %752 = vmatprep.subr.bf16.mxu0 0
        %753 = vmatpush1.bf16.msra.mxu0 %v742
        %754 = vmatprep.subr.bf16.mxu0 0
        %755 = vmatpush1.bf16.msra.mxu0 %v743
        %756 = vmatprep.subr.bf16.mxu0 0
        %757 = vmatpush1.bf16.msra.mxu0 0
        %758 = vmatprep.subr.bf16.mxu0 0
        %759 = vmatpush1.bf16.msra.mxu0 0
        %760 = vmatprep.subr.bf16.mxu0 0
        %761 = vmatpush1.bf16.msra.mxu0 0
        %762 = vmatprep.subr.bf16.mxu0 0
        %763 = vmatpush1.bf16.msra.mxu0 0
        %764 = vmatprep.subr.bf16.mxu0 0
        %765 = vmatpush1.bf16.msra.mxu0 0
        %766 = vmatprep.subr.bf16.mxu0 0
        %767 = vmatpush1.bf16.msra.mxu0 0
        %768 = vmatprep.subr.bf16.mxu0 0
        %769 = vmatpush1.bf16.msra.mxu0 0
        %770 = vmatprep.subr.bf16.mxu0 0
        %771 = vmatpush1.bf16.msra.mxu0 0
        %772 = vmatprep.subr.bf16.mxu0 0
        %773 = vmatpush1.bf16.msra.mxu0 0
        %774 = vmatprep.subr.bf16.mxu0 0
        %775 = vmatpush1.bf16.msra.mxu0 0
        %776 = vmatprep.subr.bf16.mxu0 0
        %777 = vmatpush1.bf16.msra.mxu0 0
        %778 = vmatprep.subr.bf16.mxu0 0
        %779 = vmatpush1.bf16.msra.mxu0 0
        %780 = vmatprep.mubr.bf16.mxu0 0
        %781 = vmatmul.mubr.bf16.gmra.mrb[0].mxu0 %v573
        %v782 = vpop.f32.mrb[0].mxu0
        %v783 = vadd.f32 %v722, %v782
        %v784 = vpop.f32.mrb[0].mxu0
        %v785 = vpop.f32.mrb[0].mxu0
        %v786 = vadd.f32 %v722, %v785
        %v787 = vpop.f32.mrb[0].mxu0
        %788 = vmatprep.mubr.bf16.mxu0 0
        %789 = vmatmul.mubr.bf16.gmra.mrb[0].mxu0 %v576
        %v790 = vpop.f32.mrb[0].mxu0
        %v791 = vadd.f32 %v722, %v790
        %v792 = vpop.f32.mrb[0].mxu0
        %v793 = vpop.f32.mrb[0].mxu0
        %v794 = vadd.f32 %v722, %v793
        %v795 = vpop.f32.mrb[0].mxu0
        %796 = vmatprep.mubr.bf16.mxu0 0
        %797 = vmatmul.mubr.bf16.gmra.mrb[0].mxu0 %v579
        %v798 = vpop.f32.mrb[0].mxu0
        %v799 = vadd.f32 %v722, %v798
        %v800 = vpop.f32.mrb[0].mxu0
        %v801 = vpop.f32.mrb[0].mxu0
        %v802 = vadd.f32 %v722, %v801
        %v803 = vpop.f32.mrb[0].mxu0
        %804 = vmatprep.mubr.bf16.mxu0 0
        %805 = vmatmul.mubr.bf16.gmra.mrb[0].mxu0 %v582
        %v806 = vpop.f32.mrb[0].mxu0
        %v807 = vadd.f32 %v722, %v806
        %v808 = vpop.f32.mrb[0].mxu0
        %v809 = vpop.f32.mrb[0].mxu0
        %v810 = vadd.f32 %v722, %v809
        %v811 = vpop.f32.mrb[0].mxu0
        %812 = vmatprep.mubr.bf16.mxu0 0
        %813 = vmatmul.mubr.bf16.gmra.mrb[0].mxu0 %v585
        %v814 = vpop.f32.mrb[0].mxu0
        %v815 = vadd.f32 %v722, %v814
        %v816 = vpop.f32.mrb[0].mxu0
        %v817 = vpop.f32.mrb[0].mxu0
        %v818 = vadd.f32 %v722, %v817
        %v819 = vpop.f32.mrb[0].mxu0
        %820 = vmatprep.mubr.bf16.mxu0 0
        %821 = vmatmul.mubr.bf16.gmra.mrb[0].mxu0 %v588
        %v822 = vpop.f32.mrb[0].mxu0
        %v823 = vadd.f32 %v722, %v822
        %v824 = vpop.f32.mrb[0].mxu0
        %v825 = vpop.f32.mrb[0].mxu0
        %v826 = vadd.f32 %v722, %v825
        %v827 = vpop.f32.mrb[0].mxu0
        %828 = vmatprep.mubr.bf16.mxu0 0
        %829 = vmatmul.mubr.bf16.gmra.mrb[0].mxu0 %v591
        %v830 = vpop.f32.mrb[0].mxu0
        %v831 = vadd.f32 %v722, %v830
        %v832 = vpop.f32.mrb[0].mxu0
        %v833 = vpop.f32.mrb[0].mxu0
        %v834 = vadd.f32 %v722, %v833
        %v835 = vpop.f32.mrb[0].mxu0
        %836 = vmatprep.mubr.bf16.mxu0 0
        %837 = vmatmul.mubr.bf16.gmra.mrb[0].mxu0 %v594
        %v838 = vpop.f32.mrb[0].mxu0
        %v839 = vadd.f32 %v722, %v838
        %v840 = vpop.f32.mrb[0].mxu0
        %v841 = vpop.f32.mrb[0].mxu0
        %v842 = vadd.f32 %v722, %v841
        %v843 = vpop.f32.mrb[0].mxu0
        %844 = vdwg.mxu0
        %845 = vst [vmem:[#allocation3] sm:$0xff] %v783
        %846 = vst [vmem:[#allocation3 + $0x8] sm:$0xff] %v786
        %847 = vst [vmem:[#allocation3 + $0x10] sm:$0xff] %v791
        %848 = vst [vmem:[#allocation3 + $0x18] sm:$0xff] %v794
        %849 = vst [vmem:[#allocation3 + $0x20] sm:$0xff] %v799
        %850 = vst [vmem:[#allocation3 + $0x28] sm:$0xff] %v802
        %851 = vst [vmem:[#allocation3 + $0x30] sm:$0xff] %v807
        %852 = vst [vmem:[#allocation3 + $0x38] sm:$0xff] %v810
        %853 = vst [vmem:[#allocation3 + $0x40] sm:$0xff] %v815
        %854 = vst [vmem:[#allocation3 + $0x48] sm:$0xff] %v818
        %855 = vst [vmem:[#allocation3 + $0x50] sm:$0xff] %v823
        %856 = vst [vmem:[#allocation3 + $0x58] sm:$0xff] %v826
        %857 = vst [vmem:[#allocation3 + $0x60] sm:$0xff] %v831
        %858 = vst [vmem:[#allocation3 + $0x68] sm:$0xff] %v834
        %859 = vst [vmem:[#allocation3 + $0x70] sm:$0xff] %v839
        %860 = vst [vmem:[#allocation3 + $0x78] sm:$0xff] %v842
        %v861 = vld [vmem:[%s457] sm:$0xff]
        %v862 = vld [vmem:[%s457 + $0x8] sm:$0xff]
        %v863 = vld [vmem:[%s5] sm:$0xff]
        %v864 = vld [vmem:[%s5 + $0x8] sm:$0xff]
        %v865 = vld [vmem:[%s5 + $0x10] sm:$0xff]
        %v866 = vld [vmem:[%s5 + $0x18] sm:$0xff]
        %s867 = sld [smem:[#allocation9 + %s27]]
        // While loop
        $region98: #{lstm_model_forward.3} parent=92 // loop_pre_header
          _
        $region99: #{lstm_model_forward.3} parent=92 // loop_header
          %s869 = sphi 0, %s871
          %p870 = scmp.ge.s32.totalorder %s869, %s867
        $region100: #{lstm_model_forward.3} parent=92 // loop_header_branch
          %873 = sbr.rel (%p870) target = $region104
        $region101: #{lstm_model_forward.3} parent=92 // loop_body
          %s874 = ssub.s32 %s867, 1
          %s875 = ssub.s32 %s874, %s869
          %v876 = vld [vmem:[#allocation4] sm:$0xff]
          %v877 = vld [vmem:[#allocation4 + $0x8] sm:$0xff]
          %v878 = vld [vmem:[#allocation6] sm:$0xff]
          %v879 = vld [vmem:[#allocation6 + $0x8] sm:$0xff]
          %v880 = vpack.c.bf16 %v877, %v876
          %v881 = vpack.c.bf16 %v879, %v878
          %v886 = vunpack.c.l.b16 %v863
          %v887 = vunpack.c.h.b16 %v863
          %v888 = vunpack.c.l.b16 %v864
          %v889 = vunpack.c.h.b16 %v864
          %v890 = vunpack.c.l.b16 %v865
          %v891 = vunpack.c.h.b16 %v865
          %v892 = vunpack.c.l.b16 %v866
          %v893 = vunpack.c.h.b16 %v866
          %v894 = vpack.c.b16 %v888, %v886
          %v895 = vpack.c.b16 %v889, %v887
          %v896 = vpack.c.b16 %v892, %v890
          %v897 = vpack.c.b16 %v893, %v891
          %v903 = vsel %vm467, %v880, 0
          %v906 = vsel %vm467, %v881, 0
          %908 = vmatprep.subr.bf16.mxu0 %v895
          %909 = vmatpush1.bf16.msra.mxu0 %v894
          %910 = vmatprep.subr.bf16.mxu0 %v897
          %911 = vmatpush1.bf16.msra.mxu0 %v896
          %912 = vmatprep.subr.bf16.mxu0 0
          %913 = vmatpush1.bf16.msra.mxu0 0
          %914 = vmatprep.subr.bf16.mxu0 0
          %915 = vmatpush1.bf16.msra.mxu0 0
          %916 = vmatprep.subr.bf16.mxu0 0
          %917 = vmatpush1.bf16.msra.mxu0 0
          %918 = vmatprep.subr.bf16.mxu0 0
          %919 = vmatpush1.bf16.msra.mxu0 0
          %920 = vmatprep.subr.bf16.mxu0 0
          %921 = vmatpush1.bf16.msra.mxu0 0
          %922 = vmatprep.subr.bf16.mxu0 0
          %923 = vmatpush1.bf16.msra.mxu0 0
          %924 = vmatprep.subr.bf16.mxu0 0
          %925 = vmatpush1.bf16.msra.mxu0 0
          %926 = vmatprep.subr.bf16.mxu0 0
          %927 = vmatpush1.bf16.msra.mxu0 0
          %928 = vmatprep.subr.bf16.mxu0 0
          %929 = vmatpush1.bf16.msra.mxu0 0
          %930 = vmatprep.subr.bf16.mxu0 0
          %931 = vmatpush1.bf16.msra.mxu0 0
          %932 = vmatprep.subr.bf16.mxu0 0
          %933 = vmatpush1.bf16.msra.mxu0 0
          %934 = vmatprep.subr.bf16.mxu0 0
          %935 = vmatpush1.bf16.msra.mxu0 0
          %936 = vmatprep.subr.bf16.mxu0 0
          %937 = vmatpush1.bf16.msra.mxu0 0
          %938 = vmatprep.subr.bf16.mxu0 0
          %939 = vmatpush1.bf16.msra.mxu0 0
          %940 = vmatprep.mubr.bf16.mxu0 0
          %941 = vmatmul.mubr.bf16.gmra.mrb[0].mxu0 %v903
          %v942 = vpop.f32.mrb[0].mxu0
          %v943 = vadd.f32 0.0, %v942
          %v944 = vpop.f32.mrb[0].mxu0
          %v945 = vpop.f32.mrb[0].mxu0
          %v946 = vadd.f32 0.0, %v945
          %v947 = vpop.f32.mrb[0].mxu0
          %948 = vmatprep.mubr.bf16.mxu0 0
          %949 = vmatmul.mubr.bf16.gmra.mrb[0].mxu0 %v906
          %v950 = vpop.f32.mrb[0].mxu0
          %v951 = vpop.f32.mrb[0].mxu0
          %v952 = vadd.f32 0.0, %v951
          %v953 = vpop.f32.mrb[0].mxu0
          %v954 = vpop.f32.mrb[0].mxu0
          %v955 = vadd.f32 0.0, %v954
          %956 = vdwg.mxu0
          %v957 = vld [vmem:[#allocation5] sm:$0xff]
          %v958 = vld [vmem:[#allocation5 + $0x8] sm:$0xff]
          %s959 = smul.u32 %s869, 16
          %s960 = scalar_lea.vmem [#allocation2], %s959
          %v961 = vld [vmem:[%s960] sm:$0xff]
          %v962 = vld [vmem:[%s960 + $0x8] sm:$0xff]
          %v963 = vadd.f32 %v961, %v943
          %v964 = vadd.f32 %v962, %v946
          %v965 = vxor.u32 %v963, 2147483648
          %v966 = vxor.u32 %v964, 2147483648
          %v967 = vmul.f32 %v965, 1.442695
          %v968 = vpow.pop %v967
          %v969 = vmul.f32 %v966, 1.442695
          %v970 = vpow.pop %v969
          %v971 = vadd.f32 %v968, 1.0
          %v972 = vadd.f32 %v970, 1.0
          %v973 = vrcp.pop %v971
          %v974 = vmul.f32 1.0, %v973
          %v975 = vrcp.pop %v972
          %v976 = vmul.f32 1.0, %v975
          %v977 = vtanh.pop %v963
          %v978 = vtanh.pop %v964
          %981 = vrot.lane.b32.xlu0 %v957, 32
          %v982 = vpop.permute.xlu0 %981
          %983 = vrot.lane.b32.xlu0 %v958, 32
          %v984 = vpop.permute.xlu0 %983
          %v987 = vmul.f32 %v974, %v982
          %v988 = vmul.f32 %v976, %v984
          %991 = vrot.lane.b32.xlu0 %v977, 64
          %v992 = vpop.permute.xlu0 %991
          %993 = vrot.lane.b32.xlu0 %v978, 64
          %v994 = vpop.permute.xlu0 %993
          %v997 = vmul.f32 %v974, %v992
          %v998 = vmul.f32 %v976, %v994
          %1001 = vrot.lane.b32.xlu0 %v997, 32
          %v1002 = vpop.permute.xlu0 %1001
          %1003 = vrot.lane.b32.xlu0 %v998, 32
          %v1004 = vpop.permute.xlu0 %1003
          %v1007 = vadd.f32 %v987, %v1002
          %v1008 = vadd.f32 %v988, %v1004
          %v1009 = vtanh.pop %v1007
          %v1010 = vtanh.pop %v1008
          %1013 = vrot.lane.b32.xlu0 %v1009, 64
          %v1014 = vpop.permute.xlu0 %1013
          %1015 = vrot.lane.b32.xlu0 %v1010, 64
          %v1016 = vpop.permute.xlu0 %1015
          %v1019 = vmul.f32 %v974, %v1014
          %v1020 = vmul.f32 %v976, %v1016
          %v1021 = vstv %s869
          %vm1022 = vcmp.gt.s32.totalorder %v861, %v1021
          %vm1023 = vcmp.gt.s32.totalorder %v862, %v1021
          %v1024 = vsel %vm1022, 1, 0
          %v1025 = vsel %vm1023, 1, 0
          %1026 = vset.pattern.permute.xlu0 0
          %1027 = vperm.xlu0 %1026, %v1024
          %v1028 = vpop.permute.xlu0 %1027
          %1029 = vset.pattern.permute.xlu0 0
          %1030 = vperm.xlu0 %1029, %v1025
          %v1031 = vpop.permute.xlu0 %1030
          %vm1032 = vcmp.eq.s32.totalorder %v1028, 1
          %vm1033 = vcmp.eq.s32.totalorder %v1031, 1
          %1036 = vrot.lane.b32.xlu0 %v876, 96
          %v1037 = vpop.permute.xlu0 %1036
          %1038 = vrot.lane.b32.xlu0 %v877, 96
          %v1039 = vpop.permute.xlu0 %1038
          %v1042 = vsel %vm1032, %v1019, %v1037
          %v1043 = vsel %vm1033, %v1020, %v1039
          %1046 = vrot.lane.b32.xlu0 %v1042, 32
          %v1047 = vpop.permute.xlu0 %1046
          %1048 = vrot.lane.b32.xlu0 %v1043, 32
          %v1049 = vpop.permute.xlu0 %1048
          %1052 = vst.msk [vmem:[#allocation4] sm:$0xff] %vm467, %v1047
          %1053 = vst.msk [vmem:[#allocation4 + $0x8] sm:$0xff] %vm467, %v1049
          %v1054 = vsel %vm1032, %v1007, %v982
          %v1055 = vsel %vm1033, %v1008, %v984
          %1058 = vrot.lane.b32.xlu0 %v1054, 96
          %v1059 = vpop.permute.xlu0 %1058
          %1060 = vrot.lane.b32.xlu0 %v1055, 96
          %v1061 = vpop.permute.xlu0 %1060
          %1064 = vst.msk [vmem:[#allocation5] sm:$0xff] %vm467, %v1059
          %1065 = vst.msk [vmem:[#allocation5 + $0x8] sm:$0xff] %vm467, %v1061
          %v1066 = vld [vmem:[#allocation6] sm:$0xff]
          %v1067 = vld [vmem:[#allocation6 + $0x8] sm:$0xff]
          %v1068 = vld [vmem:[#allocation7] sm:$0xff]
          %v1069 = vld [vmem:[#allocation7 + $0x8] sm:$0xff]
          %s1070 = smul.u32 %s875, 16
          %s1071 = scalar_lea.vmem [#allocation3], %s1070
          %v1072 = vld [vmem:[%s1071] sm:$0xff]
          %v1073 = vld [vmem:[%s1071 + $0x8] sm:$0xff]
          %v1074 = vadd.f32 %v1072, %v952
          %v1075 = vadd.f32 %v1073, %v955
          %v1076 = vxor.u32 %v1074, 2147483648
          %v1077 = vxor.u32 %v1075, 2147483648
          %v1078 = vmul.f32 %v1076, 1.442695
          %v1079 = vpow.pop %v1078
          %v1080 = vmul.f32 %v1077, 1.442695
          %v1081 = vpow.pop %v1080
          %v1082 = vadd.f32 %v1079, 1.0
          %v1083 = vadd.f32 %v1081, 1.0
          %v1084 = vrcp.pop %v1082
          %v1085 = vmul.f32 1.0, %v1084
          %v1086 = vrcp.pop %v1083
          %v1087 = vmul.f32 1.0, %v1086
          %v1088 = vtanh.pop %v1074
          %v1089 = vtanh.pop %v1075
          %1092 = vrot.lane.b32.xlu0 %v1068, 32
          %v1093 = vpop.permute.xlu0 %1092
          %1094 = vrot.lane.b32.xlu0 %v1069, 32
          %v1095 = vpop.permute.xlu0 %1094
          %v1098 = vmul.f32 %v1085, %v1093
          %v1099 = vmul.f32 %v1087, %v1095
          %1102 = vrot.lane.b32.xlu0 %v1088, 64
          %v1103 = vpop.permute.xlu0 %1102
          %1104 = vrot.lane.b32.xlu0 %v1089, 64
          %v1105 = vpop.permute.xlu0 %1104
          %v1108 = vmul.f32 %v1085, %v1103
          %v1109 = vmul.f32 %v1087, %v1105
          %1112 = vrot.lane.b32.xlu0 %v1108, 32
          %v1113 = vpop.permute.xlu0 %1112
          %1114 = vrot.lane.b32.xlu0 %v1109, 32
          %v1115 = vpop.permute.xlu0 %1114
          %v1118 = vadd.f32 %v1098, %v1113
          %v1119 = vadd.f32 %v1099, %v1115
          %v1120 = vtanh.pop %v1118
          %v1121 = vtanh.pop %v1119
          %1124 = vrot.lane.b32.xlu0 %v1120, 64
          %v1125 = vpop.permute.xlu0 %1124
          %1126 = vrot.lane.b32.xlu0 %v1121, 64
          %v1127 = vpop.permute.xlu0 %1126
          %v1130 = vmul.f32 %v1085, %v1125
          %v1131 = vmul.f32 %v1087, %v1127
          %v1132 = vstv %s875
          %vm1133 = vcmp.gt.s32.totalorder %v861, %v1132
          %vm1134 = vcmp.gt.s32.totalorder %v862, %v1132
          %v1135 = vsel %vm1133, 1, 0
          %v1136 = vsel %vm1134, 1, 0
          %1137 = vset.pattern.permute.xlu0 0
          %1138 = vperm.xlu0 %1137, %v1135
          %v1139 = vpop.permute.xlu0 %1138
          %1140 = vset.pattern.permute.xlu0 0
          %1141 = vperm.xlu0 %1140, %v1136
          %v1142 = vpop.permute.xlu0 %1141
          %vm1143 = vcmp.eq.s32.totalorder %v1139, 1
          %vm1144 = vcmp.eq.s32.totalorder %v1142, 1
          %1147 = vrot.lane.b32.xlu0 %v1066, 96
          %v1148 = vpop.permute.xlu0 %1147
          %1149 = vrot.lane.b32.xlu0 %v1067, 96
          %v1150 = vpop.permute.xlu0 %1149
          %v1153 = vsel %vm1143, %v1130, %v1148
          %v1154 = vsel %vm1144, %v1131, %v1150
          %1157 = vrot.lane.b32.xlu0 %v1153, 32
          %v1158 = vpop.permute.xlu0 %1157
          %1159 = vrot.lane.b32.xlu0 %v1154, 32
          %v1160 = vpop.permute.xlu0 %1159
          %1163 = vst.msk [vmem:[#allocation6] sm:$0xff] %vm467, %v1158
          %1164 = vst.msk [vmem:[#allocation6 + $0x8] sm:$0xff] %vm467, %v1160
          %v1165 = vsel %vm1143, %v1118, %v1093
          %v1166 = vsel %vm1144, %v1119, %v1095
          %1169 = vrot.lane.b32.xlu0 %v1165, 96
          %v1170 = vpop.permute.xlu0 %1169
          %1171 = vrot.lane.b32.xlu0 %v1166, 96
          %v1172 = vpop.permute.xlu0 %1171
          %1175 = vst.msk [vmem:[#allocation7] sm:$0xff] %vm467, %v1170
          %1176 = vst.msk [vmem:[#allocation7 + $0x8] sm:$0xff] %vm467, %v1172
        $region102: #{lstm_model_forward.3} parent=92 // loop_footer
          %s871 = sadd.s32 %s869, 1
        $region103: #{lstm_model_forward.3} parent=92 // loop_footer_branch
          %868 = sbr.rel target = $region99
        $region104: #{lstm_model_forward.3} parent=92 // loop_exit
          _
        %v1177 = vld [vmem:[#allocation4] sm:$0xff]
        %v1178 = vld [vmem:[#allocation4 + $0x8] sm:$0xff]
        %v1179 = vld [vmem:[#allocation6] sm:$0xff]
        %v1180 = vld [vmem:[#allocation6 + $0x8] sm:$0xff]
        %1183 = vrot.lane.b32.xlu0 %v1179, 32
        %v1184 = vpop.permute.xlu0 %1183
        %1185 = vrot.lane.b32.xlu0 %v1180, 32
        %v1186 = vpop.permute.xlu0 %1185
        %v1189 = vsel %vm467, %v1177, %v1184
        %v1190 = vsel %vm467, %v1178, %v1186
        %v1191 = vld [vmem:[%s8] sm:$0xff]
        %v1192 = vld [vmem:[%s8 + $0x8] sm:$0xff]
        %v1193 = vld [vmem:[%s8 + $0x10] sm:$0xff]
        %v1194 = vld [vmem:[%s8 + $0x18] sm:$0xff]
        %v1195 = vld [vmem:[%s8 + $0x20] sm:$0xff]
        %v1196 = vld [vmem:[%s8 + $0x28] sm:$0xff]
        %v1197 = vld [vmem:[%s8 + $0x30] sm:$0xff]
        %v1198 = vld [vmem:[%s8 + $0x38] sm:$0xff]
        %v1199 = vld [vmem:[%s9] sm:$0x1]
        %v1201 = vlaneseq
        %v1202 = vshrl.u32 %v1201, 7
        %v1203 = vsub.s32 0, %v1202
        %v1204 = vrot.slane %v1199, %v1203
        %v1207 = vsel %vm571, %v1189, 0
        %v1210 = vsel %vm571, %v1190, 0
        %1212 = vmatprep.subr.mxu0 0.0
        %1213 = vmatpush1.msra.mxu0 %v1191
        %1214 = vmatprep.subr.mxu0 0.0
        %1215 = vmatpush1.msra.mxu0 %v1192
        %1216 = vmatprep.subr.mxu0 0.0
        %1217 = vmatpush1.msra.mxu0 %v1193
        %1218 = vmatprep.subr.mxu0 0.0
        %1219 = vmatpush1.msra.mxu0 %v1194
        %1220 = vmatprep.subr.mxu0 0.0
        %1221 = vmatpush1.msra.mxu0 %v1195
        %1222 = vmatprep.subr.mxu0 0.0
        %1223 = vmatpush1.msra.mxu0 %v1196
        %1224 = vmatprep.subr.mxu0 0.0
        %1225 = vmatpush1.msra.mxu0 %v1197
        %1226 = vmatprep.subr.mxu0 0.0
        %1227 = vmatpush1.msra.mxu0 %v1198
        %1228 = vmatprep.subr.mxu0 0.0
        %1229 = vmatpush1.msra.mxu0 0.0
        %1230 = vmatprep.subr.mxu0 0.0
        %1231 = vmatpush1.msra.mxu0 0.0
        %1232 = vmatprep.subr.mxu0 0.0
        %1233 = vmatpush1.msra.mxu0 0.0
        %1234 = vmatprep.subr.mxu0 0.0
        %1235 = vmatpush1.msra.mxu0 0.0
        %1236 = vmatprep.subr.mxu0 0.0
        %1237 = vmatpush1.msra.mxu0 0.0
        %1238 = vmatprep.subr.mxu0 0.0
        %1239 = vmatpush1.msra.mxu0 0.0
        %1240 = vmatprep.subr.mxu0 0.0
        %1241 = vmatpush1.msra.mxu0 0.0
        %1242 = vmatprep.subr.mxu0 0.0
        %1243 = vmatpush1.msra.mxu0 0.0
        %1244 = vmatprep.subr.mxu0 0.0
        %1245 = vmatpush1.msra.mxu0 0.0
        %1246 = vmatprep.subr.mxu0 0.0
        %1247 = vmatpush1.msra.mxu0 0.0
        %1248 = vmatprep.subr.mxu0 0.0
        %1249 = vmatpush1.msra.mxu0 0.0
        %1250 = vmatprep.subr.mxu0 0.0
        %1251 = vmatpush1.msra.mxu0 0.0
        %1252 = vmatprep.subr.mxu0 0.0
        %1253 = vmatpush1.msra.mxu0 0.0
        %1254 = vmatprep.subr.mxu0 0.0
        %1255 = vmatpush1.msra.mxu0 0.0
        %1256 = vmatprep.subr.mxu0 0.0
        %1257 = vmatpush1.msra.mxu0 0.0
        %1258 = vmatprep.subr.mxu0 0.0
        %1259 = vmatpush1.msra.mxu0 0.0
        %1260 = vmatprep.subr.mxu0 0.0
        %1261 = vmatpush1.msra.mxu0 0.0
        %1262 = vmatprep.subr.mxu0 0.0
        %1263 = vmatpush1.msra.mxu0 0.0
        %1264 = vmatprep.subr.mxu0 0.0
        %1265 = vmatpush1.msra.mxu0 0.0
        %1266 = vmatprep.subr.mxu0 0.0
        %1267 = vmatpush1.msra.mxu0 0.0
        %1268 = vmatprep.subr.mxu0 0.0
        %1269 = vmatpush1.msra.mxu0 0.0
        %1270 = vmatprep.subr.mxu0 0.0
        %1271 = vmatpush1.msra.mxu0 0.0
        %1272 = vmatprep.subr.mxu0 0.0
        %1273 = vmatpush1.msra.mxu0 0.0
        %1274 = vmatprep.subr.mxu0 0.0
        %1275 = vmatpush1.msra.mxu0 0.0
        %1276 = vmatprep.mubr.f32.mxu0 0.0
        %1277 = vmatmul.mubr.f32.gmra.mrb[0].mxu0 %v1207
        %v1278 = vpop.f32.mrb[0].mxu0
        %v1279 = vadd.f32 %v1204, %v1278
        %v1280 = vpop.f32.mrb[0].mxu0
        %1281 = vmatprep.mubr.f32.mxu0 0.0
        %1282 = vmatmul.mubr.f32.gmra.mrb[0].mxu0 %v1210
        %v1283 = vpop.f32.mrb[0].mxu0
        %v1284 = vadd.f32 %v1204, %v1283
        %v1285 = vpop.f32.mrb[0].mxu0
        %1286 = vdwg.mxu0
        %vm1287 = vcmask 23552
        %1288 = vst.msk [vmem:[%s464] sm:$0xff] %vm1287, %v1279
        %1289 = vst.msk [vmem:[%s464 + $0x8] sm:$0xff] %vm1287, %v1284
        %s1290 = smul.u32 2, %s27
        %p1291 = scmp.lt.s32.totalorder %s1290, 3
        %s1292 = scalar_select %p1291, %s1290, 3
        %s1293 = smul.addr %s1292, 8
        %s1294 = scalar_lea.vmem %s10, %s1293
        // Predicated region
        $region105: #{lstm_model_forward.3} parent=92 // pred_check
          %p1295 = pneg %p244
        $region106: #{lstm_model_forward.3} parent=92 // pred_check_branch
          %1297 = sbr.rel (%p1295) target = $region108
        $region107: #{lstm_model_forward.3} parent=92 // pred_region
          %s1298 = smul.u32 2, %s27
        $region108: #{lstm_model_forward.3} parent=92 // pred_fallthru
          _
      $region93: #{lstm_model_forward.3} parent=5 // pred_fallthru
        _
      %p1299 = scmp.le.s32.totalorder 2, %s22
      // Predicated region
      $region109: #{lstm_model_forward.3} parent=5 // pred_check
        %p1300 = pneg %p1299
      $region110: #{lstm_model_forward.3} parent=5 // pred_check_branch
        %1302 = sbr.rel (%p1300) target = $region112
      $region111: #{lstm_model_forward.3} parent=5 // pred_region
        %s1303 = ssub.s32 %s22, 2
        // Predicated region
        $region113: #{lstm_model_forward.3} parent=111 // pred_check
          %p1304 = pneg %p250
        $region114: #{lstm_model_forward.3} parent=111 // pred_check_branch
          %1306 = sbr.rel (%p1304) target = $region116
        $region115: #{lstm_model_forward.3} parent=111 // pred_region
          %s1307 = smul.u32 2, %s28
          %p1308 = scmp.lt.s32.totalorder %s1307, 3
          %s1309 = scalar_select %p1308, %s1307, 3
          %s1310 = smul.addr %s1309, 8
          %s1311 = scalar_lea.vmem %s10, %s1310
        $region116: #{lstm_model_forward.3} parent=111 // pred_fallthru
          _
      $region112: #{lstm_model_forward.3} parent=5 // pred_fallthru
        _
    $region6: #{lstm_model_forward.3} parent=1 // loop_footer
      %s26 = sadd.s32 1, %s22
    $region7: #{lstm_model_forward.3} parent=1 // loop_footer_branch
      %21 = sbr.rel target = $region3
    $region8: #{lstm_model_forward.3} parent=1 // loop_exit
      _

</llo_original>
